<compile_context>
chip_gen: v5e
topology: v5e:2x2
jax: 0.10.0
libtpu: 0.0.40
codegen_flags: <defaults>
</compile_context>

<pallas_src>
import jax
import jax.numpy as jnp
from jax.experimental import pallas as pl
from jax.experimental.pallas import tpu as pltpu  # noqa: F401


# ---------------------------------------------------------------------------
# Fused Pallas kernel: all LSTM layers + time recurrence + final Linear.
# ---------------------------------------------------------------------------
def fused_lstm_kernel(gx0_ref, wih_ref, whh_ref, b_ref, fcw_ref, fcb_ref, out_ref):
    """Everything stays resident in VMEM/vregs; only (B, O) is stored to HBM.

    gx0_ref : (T*4, B, H)     precomputed layer-0 input projection (+ combined
                              bias); one gate-aligned (B, H) tile per (t, gate).
    wih_ref : ((L-1)*4, H, H) per-gate input weights (transposed), layers >= 1.
    whh_ref : (L*4, H, H)     per-gate recurrent weights (transposed), all layers.
    b_ref   : ((L-1)*4, 1, H) per-gate combined biases (b_ih + b_hh), layers >= 1.
    fcw_ref : (H, O)          fc weight transposed.
    fcb_ref : (1, O)          fc bias.
    out_ref : (B, O)
    """
    TG, B, H = gx0_ref.shape
    T = TG // 4
    L = whh_ref.shape[0] // 4
    f32 = jnp.float32

    def cell(pre, c):
        # PyTorch gate order: i, f, g, o (each already a gate-aligned (B, H) tile).
        i = jax.nn.sigmoid(pre[0])
        f = jax.nn.sigmoid(pre[1])
        g = jnp.tanh(pre[2])
        o = jax.nn.sigmoid(pre[3])
        c_new = f * c + i * g
        h_new = o * jnp.tanh(c_new)
        return h_new, c_new

    def step(t, carry):
        hs, cs = carry                      # per-layer (B, H) h and c, in vregs
        new_hs, new_cs = [], []
        for l in range(L):                  # static unrolled layer loop
            pre = []
            for k in range(4):              # static unrolled gate loop
                rec = jnp.dot(hs[l], whh_ref[l * 4 + k],
                              preferred_element_type=f32)
                if l == 0:
                    # Layer-0 input projection was hoisted out of the recurrence.
                    pre.append(gx0_ref[t * 4 + k] + rec)
                else:
                    idx = (l - 1) * 4 + k
                    pre.append(
                        b_ref[idx] + rec
                        + jnp.dot(new_hs[l - 1], wih_ref[idx],
                                  preferred_element_type=f32))
            h_new, c_new = cell(pre, cs[l])
            new_hs.append(h_new)
            new_cs.append(c_new)
        return tuple(new_hs), tuple(new_cs)

    # h0 = c0 = zeros, as in the PyTorch module.
    z = jnp.zeros((B, H), f32)
    init = (tuple(z for _ in range(L)), tuple(z for _ in range(L)))
    hs, _ = jax.lax.fori_loop(0, T, step, init, unroll=True)

    # Final Linear on the last hidden state of the top layer (== out[:, -1, :]).
    out_ref[...] = (jnp.dot(hs[-1], fcw_ref[...], preferred_element_type=f32)
                    + fcb_ref[...])


# ---------------------------------------------------------------------------
# Forward wrapper (single pallas_call, no grid: whole problem fits in VMEM)
# ---------------------------------------------------------------------------
@jax.jit
def lstm_model_forward(x, params):
    """x: (B, T, input_dim), batch_first like the PyTorch module."""
    B, T, _ = x.shape
    H, O = params["fc_wT"].shape

    # Hoisted layer-0 input projection: one (T*B, D) x (D, 4H) matmul in XLA,
    # then laid out gate-major so the kernel never lane-slices the 4H axis.
    gx0 = jnp.einsum("btd,dg->tbg", x.astype(jnp.float32), params["wih0T"],
                     precision=jax.lax.Precision.HIGHEST) + params["b0"]   # (T, B, 4H)
    gx0 = gx0.reshape(T, B, 4, H).transpose(0, 2, 1, 3).reshape(T * 4, B, H)

    return pl.pallas_call(
        fused_lstm_kernel,
        out_shape=jax.ShapeDtypeStruct((B, O), jnp.float32),
        in_specs=[
            pl.BlockSpec((T * 4, B, H), lambda: (0, 0, 0)),
            pl.BlockSpec(params["wih_split"].shape, lambda: (0, 0, 0)),
            pl.BlockSpec(params["whh_split"].shape, lambda: (0, 0, 0)),
            pl.BlockSpec(params["b_split"].shape, lambda: (0, 0, 0)),
            pl.BlockSpec((H, O), lambda: (0, 0)),
            pl.BlockSpec((1, O), lambda: (0, 0)),
        ],
        out_specs=pl.BlockSpec((B, O), lambda: (0, 0)),
    )(gx0, params["wih_split"], params["whh_split"], params["b_split"],
      params["fc_wT"], params["fc_b"])


# ---------------------------------------------------------------------------
# Parameters: PyTorch-style init, then pack into the kernel's gate-split layout.
# ---------------------------------------------------------------------------
def init_raw_params(key, input_dim, hidden, num_layers, output_dim):
    """PyTorch-layout weights, U(-1/sqrt(H), 1/sqrt(H)) like nn.LSTM/nn.Linear."""
    bound = 1.0 / (hidden ** 0.5)
    layers = []
    for l in range(num_layers):
        d_in = input_dim if l == 0 else hidden
        key, k1, k2, k3, k4 = jax.random.split(key, 5)
        layers.append(dict(
            w_ih=jax.random.uniform(k1, (4 * hidden, d_in), jnp.float32, -bound, bound),
            w_hh=jax.random.uniform(k2, (4 * hidden, hidden), jnp.float32, -bound, bound),
            b_ih=jax.random.uniform(k3, (4 * hidden,), jnp.float32, -bound, bound),
            b_hh=jax.random.uniform(k4, (4 * hidden,), jnp.float32, -bound, bound),
        ))
    key, k5, k6 = jax.random.split(key, 3)
    fc_w = jax.random.uniform(k5, (output_dim, hidden), jnp.float32, -bound, bound)
    fc_b = jax.random.uniform(k6, (output_dim,), jnp.float32, -bound, bound)
    return dict(layers=layers, fc_w=fc_w, fc_b=fc_b)


def pack_params(raw):
    """Split every projection per gate (i,f,g,o) so in-kernel dots are gate-aligned."""
    layers = raw["layers"]
    H = layers[0]["w_hh"].shape[1]
    packed = {
        "wih0T": layers[0]["w_ih"].T,                         # (D, 4H)
        "b0": layers[0]["b_ih"] + layers[0]["b_hh"],          # (4H,)
    }
    whh_split, wih_split, b_split = [], [], []
    for l, lp in enumerate(layers):
        whhT = lp["w_hh"].T                                   # (H, 4H)
        for k in range(4):
            whh_split.append(whhT[:, k * H:(k + 1) * H])      # (H, H)
        if l > 0:
            wihT = lp["w_ih"].T                               # (H, 4H)
            b = lp["b_ih"] + lp["b_hh"]                       # (4H,)
            for k in range(4):
                wih_split.append(wihT[:, k * H:(k + 1) * H])  # (H, H)
                b_split.append(b[k * H:(k + 1) * H].reshape(1, H))
    if not wih_split:  # num_layers == 1: dummy (never read by the kernel)
        wih_split = [jnp.zeros((H, H), jnp.float32)] * 4
        b_split = [jnp.zeros((1, H), jnp.float32)] * 4
    packed["whh_split"] = jnp.stack(whh_split)                # (L*4, H, H)
    packed["wih_split"] = jnp.stack(wih_split)                # ((L-1)*4, H, H)
    packed["b_split"] = jnp.stack(b_split)                    # ((L-1)*4, 1, H)
    packed["fc_wT"] = raw["fc_w"].T                           # (H, O)
    packed["fc_b"] = raw["fc_b"].reshape(1, -1)               # (1, O)
    return packed


# ---------------------------------------------------------------------------
# Pure-JAX reference (mirrors torch.nn.LSTM eval forward + Linear)
# ---------------------------------------------------------------------------
def lstm_reference(x, raw):
    hi = jax.lax.Precision.HIGHEST
    B, T, _ = x.shape
    H = raw["layers"][0]["w_hh"].shape[1]
    seq = x.astype(jnp.float32)
    for lp in raw["layers"]:
        h = jnp.zeros((B, H), jnp.float32)
        c = jnp.zeros((B, H), jnp.float32)
        outs = []
        for t in range(T):
            gates = (jnp.dot(seq[:, t, :], lp["w_ih"].T, precision=hi) + lp["b_ih"]
                     + jnp.dot(h, lp["w_hh"].T, precision=hi) + lp["b_hh"])
            i = jax.nn.sigmoid(gates[:, 0 * H:1 * H])
            f = jax.nn.sigmoid(gates[:, 1 * H:2 * H])
            g = jnp.tanh(gates[:, 2 * H:3 * H])
            o = jax.nn.sigmoid(gates[:, 3 * H:4 * H])
            c = f * c + i * g
            h = o * jnp.tanh(c)
            outs.append(h)
        seq = jnp.stack(outs, axis=1)
    return jnp.dot(seq[:, -1, :], raw["fc_w"].T, precision=hi) + raw["fc_b"]


# ---------------------------------------------------------------------------
# Main
# ---------------------------------------------------------------------------
if __name__ == "__main__":
    # LSTMModel(input_dim=4, hidden_layers=32, layer_dim=2, output_dim=4, dropout_prob=0.1)
    B, T = 2, 8
    input_dim, hidden, num_layers, output_dim = 4, 32, 2, 4
    # TODO(synk): nn.LSTM inter-layer dropout (p=0.1) is training-only; this
    #             reproduces eval/inference semantics (no dropout).

    key = jax.random.PRNGKey(0)
    key, xkey = jax.random.split(key)
    x = jax.random.normal(xkey, (B, T, input_dim), dtype=jnp.float32)

    raw = init_raw_params(key, input_dim, hidden, num_layers, output_dim)
    params = pack_params(raw)

    out = lstm_model_forward(x, params)
    jax.block_until_ready(out)
    assert out.shape == (B, output_dim)

    ref = lstm_reference(x, raw)
    err = float(jnp.max(jnp.abs(out - ref)))
    assert err < 1e-3, f"mismatch vs pure-JAX reference: max abs err = {err}"

    print("KERNEL_OK")
</pallas_src>

<mosaic_0001>
module attributes {stable_mosaic.version = 11 : i64} {
  func.func @fused_lstm_kernel(%arg0: memref<32x2x32xf32, #tpu.memory_space<vmem>>, %arg1: memref<4x32x32xf32, #tpu.memory_space<vmem>>, %arg2: memref<8x32x32xf32, #tpu.memory_space<vmem>>, %arg3: memref<4x1x32xf32, #tpu.memory_space<vmem>>, %arg4: memref<32x4xf32, #tpu.memory_space<vmem>>, %arg5: memref<1x4xf32, #tpu.memory_space<vmem>>, %arg6: memref<2x4xf32, #tpu.memory_space<vmem>>) attributes {dimension_semantics = [], scalar_prefetch = 0 : i64, scratch_operands = 0 : i64, tpu.core_type = #tpu.core_type<tc>} {
    %cst = arith.constant 0.000000e+00 : f32
    %0 = vector.broadcast %cst : f32 to vector<2x32xf32>
    %c0_i32 = arith.constant 0 : i32
    %c0 = arith.constant 0 : index
    %c0_0 = arith.constant 0 : index
    %c0_1 = arith.constant 0 : index
    %1 = vector.load %arg2[%c0, %c0_0, %c0_1] : memref<8x32x32xf32, #tpu.memory_space<vmem>>, vector<1x32x32xf32>
    %2 = vector.shape_cast %1 : vector<1x32x32xf32> to vector<32x32xf32>
    %cst_2 = arith.constant dense<0.000000e+00> : vector<2x32xf32>
    %3 = tpu.matmul %0, %2, %cst_2 {dimension_numbers = #tpu.dot_dimension_numbers<[1], [0], [0], [1], [0, 0, 1, 1], [], []>} : vector<2x32xf32>, vector<32x32xf32>, vector<2x32xf32> -> vector<2x32xf32>
    %c4_i32 = arith.constant 4 : i32
    %4 = arith.muli %c0_i32, %c4_i32 : i32
    %c0_i32_3 = arith.constant 0 : i32
    %5 = arith.addi %4, %c0_i32_3 : i32
    %6 = arith.index_cast %5 : i32 to index
    %c0_4 = arith.constant 0 : index
    %c0_5 = arith.constant 0 : index
    %7 = vector.load %arg0[%6, %c0_4, %c0_5] : memref<32x2x32xf32, #tpu.memory_space<vmem>>, vector<1x2x32xf32>
    %8 = vector.shape_cast %7 : vector<1x2x32xf32> to vector<2x32xf32>
    %9 = arith.addf %8, %3 : vector<2x32xf32>
    %c1 = arith.constant 1 : index
    %c0_6 = arith.constant 0 : index
    %c0_7 = arith.constant 0 : index
    %10 = vector.load %arg2[%c1, %c0_6, %c0_7] : memref<8x32x32xf32, #tpu.memory_space<vmem>>, vector<1x32x32xf32>
    %11 = vector.shape_cast %10 : vector<1x32x32xf32> to vector<32x32xf32>
    %cst_8 = arith.constant dense<0.000000e+00> : vector<2x32xf32>
    %12 = tpu.matmul %0, %11, %cst_8 {dimension_numbers = #tpu.dot_dimension_numbers<[1], [0], [0], [1], [0, 0, 1, 1], [], []>} : vector<2x32xf32>, vector<32x32xf32>, vector<2x32xf32> -> vector<2x32xf32>
    %c4_i32_9 = arith.constant 4 : i32
    %13 = arith.muli %c0_i32, %c4_i32_9 : i32
    %c1_i32 = arith.constant 1 : i32
    %14 = arith.addi %13, %c1_i32 : i32
    %15 = arith.index_cast %14 : i32 to index
    %c0_10 = arith.constant 0 : index
    %c0_11 = arith.constant 0 : index
    %16 = vector.load %arg0[%15, %c0_10, %c0_11] : memref<32x2x32xf32, #tpu.memory_space<vmem>>, vector<1x2x32xf32>
    %17 = vector.shape_cast %16 : vector<1x2x32xf32> to vector<2x32xf32>
    %18 = arith.addf %17, %12 : vector<2x32xf32>
    %c2 = arith.constant 2 : index
    %c0_12 = arith.constant 0 : index
    %c0_13 = arith.constant 0 : index
    %19 = vector.load %arg2[%c2, %c0_12, %c0_13] : memref<8x32x32xf32, #tpu.memory_space<vmem>>, vector<1x32x32xf32>
    %20 = vector.shape_cast %19 : vector<1x32x32xf32> to vector<32x32xf32>
    %cst_14 = arith.constant dense<0.000000e+00> : vector<2x32xf32>
    %21 = tpu.matmul %0, %20, %cst_14 {dimension_numbers = #tpu.dot_dimension_numbers<[1], [0], [0], [1], [0, 0, 1, 1], [], []>} : vector<2x32xf32>, vector<32x32xf32>, vector<2x32xf32> -> vector<2x32xf32>
    %c4_i32_15 = arith.constant 4 : i32
    %22 = arith.muli %c0_i32, %c4_i32_15 : i32
    %c2_i32 = arith.constant 2 : i32
    %23 = arith.addi %22, %c2_i32 : i32
    %24 = arith.index_cast %23 : i32 to index
    %c0_16 = arith.constant 0 : index
    %c0_17 = arith.constant 0 : index
    %25 = vector.load %arg0[%24, %c0_16, %c0_17] : memref<32x2x32xf32, #tpu.memory_space<vmem>>, vector<1x2x32xf32>
    %26 = vector.shape_cast %25 : vector<1x2x32xf32> to vector<2x32xf32>
    %27 = arith.addf %26, %21 : vector<2x32xf32>
    %c3 = arith.constant 3 : index
    %c0_18 = arith.constant 0 : index
    %c0_19 = arith.constant 0 : index
    %28 = vector.load %arg2[%c3, %c0_18, %c0_19] : memref<8x32x32xf32, #tpu.memory_space<vmem>>, vector<1x32x32xf32>
    %29 = vector.shape_cast %28 : vector<1x32x32xf32> to vector<32x32xf32>
    %cst_20 = arith.constant dense<0.000000e+00> : vector<2x32xf32>
    %30 = tpu.matmul %0, %29, %cst_20 {dimension_numbers = #tpu.dot_dimension_numbers<[1], [0], [0], [1], [0, 0, 1, 1], [], []>} : vector<2x32xf32>, vector<32x32xf32>, vector<2x32xf32> -> vector<2x32xf32>
    %c4_i32_21 = arith.constant 4 : i32
    %31 = arith.muli %c0_i32, %c4_i32_21 : i32
    %c3_i32 = arith.constant 3 : i32
    %32 = arith.addi %31, %c3_i32 : i32
    %33 = arith.index_cast %32 : i32 to index
    %c0_22 = arith.constant 0 : index
    %c0_23 = arith.constant 0 : index
    %34 = vector.load %arg0[%33, %c0_22, %c0_23] : memref<32x2x32xf32, #tpu.memory_space<vmem>>, vector<1x2x32xf32>
    %35 = vector.shape_cast %34 : vector<1x2x32xf32> to vector<2x32xf32>
    %36 = arith.addf %35, %30 : vector<2x32xf32>
    %37 = arith.negf %9 : vector<2x32xf32>
    %38 = math.exp %37 : vector<2x32xf32>
    %cst_24 = arith.constant 1.000000e+00 : f32
    %39 = vector.broadcast %cst_24 : f32 to vector<2x32xf32>
    %40 = arith.addf %39, %38 : vector<2x32xf32>
    %41 = arith.divf %39, %40 : vector<2x32xf32>
    %42 = arith.negf %18 : vector<2x32xf32>
    %43 = math.exp %42 : vector<2x32xf32>
    %cst_25 = arith.constant 1.000000e+00 : f32
    %44 = vector.broadcast %cst_25 : f32 to vector<2x32xf32>
    %45 = arith.addf %44, %43 : vector<2x32xf32>
    %46 = arith.divf %44, %45 : vector<2x32xf32>
    %47 = math.tanh %27 : vector<2x32xf32>
    %48 = arith.negf %36 : vector<2x32xf32>
    %49 = math.exp %48 : vector<2x32xf32>
    %cst_26 = arith.constant 1.000000e+00 : f32
    %50 = vector.broadcast %cst_26 : f32 to vector<2x32xf32>
    %51 = arith.addf %50, %49 : vector<2x32xf32>
    %52 = arith.divf %50, %51 : vector<2x32xf32>
    %53 = arith.mulf %46, %0 : vector<2x32xf32>
    %54 = arith.mulf %41, %47 : vector<2x32xf32>
    %55 = arith.addf %53, %54 : vector<2x32xf32>
    %56 = math.tanh %55 : vector<2x32xf32>
    %57 = arith.mulf %52, %56 : vector<2x32xf32>
    %c4 = arith.constant 4 : index
    %c0_27 = arith.constant 0 : index
    %c0_28 = arith.constant 0 : index
    %58 = vector.load %arg2[%c4, %c0_27, %c0_28] : memref<8x32x32xf32, #tpu.memory_space<vmem>>, vector<1x32x32xf32>
    %59 = vector.shape_cast %58 : vector<1x32x32xf32> to vector<32x32xf32>
    %cst_29 = arith.constant dense<0.000000e+00> : vector<2x32xf32>
    %60 = tpu.matmul %0, %59, %cst_29 {dimension_numbers = #tpu.dot_dimension_numbers<[1], [0], [0], [1], [0, 0, 1, 1], [], []>} : vector<2x32xf32>, vector<32x32xf32>, vector<2x32xf32> -> vector<2x32xf32>
    %c0_30 = arith.constant 0 : index
    %c0_31 = arith.constant 0 : index
    %c0_32 = arith.constant 0 : index
    %61 = vector.load %arg3[%c0_30, %c0_31, %c0_32] : memref<4x1x32xf32, #tpu.memory_space<vmem>>, vector<1x1x32xf32>
    %62 = vector.shape_cast %61 : vector<1x1x32xf32> to vector<1x32xf32>
    %63 = vector.broadcast %62 : vector<1x32xf32> to vector<2x32xf32>
    %64 = arith.addf %63, %60 : vector<2x32xf32>
    %c0_33 = arith.constant 0 : index
    %c0_34 = arith.constant 0 : index
    %c0_35 = arith.constant 0 : index
    %65 = vector.load %arg1[%c0_33, %c0_34, %c0_35] : memref<4x32x32xf32, #tpu.memory_space<vmem>>, vector<1x32x32xf32>
    %66 = vector.shape_cast %65 : vector<1x32x32xf32> to vector<32x32xf32>
    %cst_36 = arith.constant dense<0.000000e+00> : vector<2x32xf32>
    %67 = tpu.matmul %57, %66, %cst_36 {dimension_numbers = #tpu.dot_dimension_numbers<[1], [0], [0], [1], [0, 0, 1, 1], [], []>} : vector<2x32xf32>, vector<32x32xf32>, vector<2x32xf32> -> vector<2x32xf32>
    %68 = arith.addf %64, %67 : vector<2x32xf32>
    %c5 = arith.constant 5 : index
    %c0_37 = arith.constant 0 : index
    %c0_38 = arith.constant 0 : index
    %69 = vector.load %arg2[%c5, %c0_37, %c0_38] : memref<8x32x32xf32, #tpu.memory_space<vmem>>, vector<1x32x32xf32>
    %70 = vector.shape_cast %69 : vector<1x32x32xf32> to vector<32x32xf32>
    %cst_39 = arith.constant dense<0.000000e+00> : vector<2x32xf32>
    %71 = tpu.matmul %0, %70, %cst_39 {dimension_numbers = #tpu.dot_dimension_numbers<[1], [0], [0], [1], [0, 0, 1, 1], [], []>} : vector<2x32xf32>, vector<32x32xf32>, vector<2x32xf32> -> vector<2x32xf32>
    %c1_40 = arith.constant 1 : index
    %c0_41 = arith.constant 0 : index
    %c0_42 = arith.constant 0 : index
    %72 = vector.load %arg3[%c1_40, %c0_41, %c0_42] : memref<4x1x32xf32, #tpu.memory_space<vmem>>, vector<1x1x32xf32>
    %73 = vector.shape_cast %72 : vector<1x1x32xf32> to vector<1x32xf32>
    %74 = vector.broadcast %73 : vector<1x32xf32> to vector<2x32xf32>
    %75 = arith.addf %74, %71 : vector<2x32xf32>
    %c1_43 = arith.constant 1 : index
    %c0_44 = arith.constant 0 : index
    %c0_45 = arith.constant 0 : index
    %76 = vector.load %arg1[%c1_43, %c0_44, %c0_45] : memref<4x32x32xf32, #tpu.memory_space<vmem>>, vector<1x32x32xf32>
    %77 = vector.shape_cast %76 : vector<1x32x32xf32> to vector<32x32xf32>
    %cst_46 = arith.constant dense<0.000000e+00> : vector<2x32xf32>
    %78 = tpu.matmul %57, %77, %cst_46 {dimension_numbers = #tpu.dot_dimension_numbers<[1], [0], [0], [1], [0, 0, 1, 1], [], []>} : vector<2x32xf32>, vector<32x32xf32>, vector<2x32xf32> -> vector<2x32xf32>
    %79 = arith.addf %75, %78 : vector<2x32xf32>
    %c6 = arith.constant 6 : index
    %c0_47 = arith.constant 0 : index
    %c0_48 = arith.constant 0 : index
    %80 = vector.load %arg2[%c6, %c0_47, %c0_48] : memref<8x32x32xf32, #tpu.memory_space<vmem>>, vector<1x32x32xf32>
    %81 = vector.shape_cast %80 : vector<1x32x32xf32> to vector<32x32xf32>
    %cst_49 = arith.constant dense<0.000000e+00> : vector<2x32xf32>
    %82 = tpu.matmul %0, %81, %cst_49 {dimension_numbers = #tpu.dot_dimension_numbers<[1], [0], [0], [1], [0, 0, 1, 1], [], []>} : vector<2x32xf32>, vector<32x32xf32>, vector<2x32xf32> -> vector<2x32xf32>
    %c2_50 = arith.constant 2 : index
    %c0_51 = arith.constant 0 : index
    %c0_52 = arith.constant 0 : index
    %83 = vector.load %arg3[%c2_50, %c0_51, %c0_52] : memref<4x1x32xf32, #tpu.memory_space<vmem>>, vector<1x1x32xf32>
    %84 = vector.shape_cast %83 : vector<1x1x32xf32> to vector<1x32xf32>
    %85 = vector.broadcast %84 : vector<1x32xf32> to vector<2x32xf32>
    %86 = arith.addf %85, %82 : vector<2x32xf32>
    %c2_53 = arith.constant 2 : index
    %c0_54 = arith.constant 0 : index
    %c0_55 = arith.constant 0 : index
    %87 = vector.load %arg1[%c2_53, %c0_54, %c0_55] : memref<4x32x32xf32, #tpu.memory_space<vmem>>, vector<1x32x32xf32>
    %88 = vector.shape_cast %87 : vector<1x32x32xf32> to vector<32x32xf32>
    %cst_56 = arith.constant dense<0.000000e+00> : vector<2x32xf32>
    %89 = tpu.matmul %57, %88, %cst_56 {dimension_numbers = #tpu.dot_dimension_numbers<[1], [0], [0], [1], [0, 0, 1, 1], [], []>} : vector<2x32xf32>, vector<32x32xf32>, vector<2x32xf32> -> vector<2x32xf32>
    %90 = arith.addf %86, %89 : vector<2x32xf32>
    %c7 = arith.constant 7 : index
    %c0_57 = arith.constant 0 : index
    %c0_58 = arith.constant 0 : index
    %91 = vector.load %arg2[%c7, %c0_57, %c0_58] : memref<8x32x32xf32, #tpu.memory_space<vmem>>, vector<1x32x32xf32>
    %92 = vector.shape_cast %91 : vector<1x32x32xf32> to vector<32x32xf32>
    %cst_59 = arith.constant dense<0.000000e+00> : vector<2x32xf32>
    %93 = tpu.matmul %0, %92, %cst_59 {dimension_numbers = #tpu.dot_dimension_numbers<[1], [0], [0], [1], [0, 0, 1, 1], [], []>} : vector<2x32xf32>, vector<32x32xf32>, vector<2x32xf32> -> vector<2x32xf32>
    %c3_60 = arith.constant 3 : index
    %c0_61 = arith.constant 0 : index
    %c0_62 = arith.constant 0 : index
    %94 = vector.load %arg3[%c3_60, %c0_61, %c0_62] : memref<4x1x32xf32, #tpu.memory_space<vmem>>, vector<1x1x32xf32>
    %95 = vector.shape_cast %94 : vector<1x1x32xf32> to vector<1x32xf32>
    %96 = vector.broadcast %95 : vector<1x32xf32> to vector<2x32xf32>
    %97 = arith.addf %96, %93 : vector<2x32xf32>
    %c3_63 = arith.constant 3 : index
    %c0_64 = arith.constant 0 : index
    %c0_65 = arith.constant 0 : index
    %98 = vector.load %arg1[%c3_63, %c0_64, %c0_65] : memref<4x32x32xf32, #tpu.memory_space<vmem>>, vector<1x32x32xf32>
    %99 = vector.shape_cast %98 : vector<1x32x32xf32> to vector<32x32xf32>
    %cst_66 = arith.constant dense<0.000000e+00> : vector<2x32xf32>
    %100 = tpu.matmul %57, %99, %cst_66 {dimension_numbers = #tpu.dot_dimension_numbers<[1], [0], [0], [1], [0, 0, 1, 1], [], []>} : vector<2x32xf32>, vector<32x32xf32>, vector<2x32xf32> -> vector<2x32xf32>
    %101 = arith.addf %97, %100 : vector<2x32xf32>
    %102 = arith.negf %68 : vector<2x32xf32>
    %103 = math.exp %102 : vector<2x32xf32>
    %cst_67 = arith.constant 1.000000e+00 : f32
    %104 = vector.broadcast %cst_67 : f32 to vector<2x32xf32>
    %105 = arith.addf %104, %103 : vector<2x32xf32>
    %106 = arith.divf %104, %105 : vector<2x32xf32>
    %107 = arith.negf %79 : vector<2x32xf32>
    %108 = math.exp %107 : vector<2x32xf32>
    %cst_68 = arith.constant 1.000000e+00 : f32
    %109 = vector.broadcast %cst_68 : f32 to vector<2x32xf32>
    %110 = arith.addf %109, %108 : vector<2x32xf32>
    %111 = arith.divf %109, %110 : vector<2x32xf32>
    %112 = math.tanh %90 : vector<2x32xf32>
    %113 = arith.negf %101 : vector<2x32xf32>
    %114 = math.exp %113 : vector<2x32xf32>
    %cst_69 = arith.constant 1.000000e+00 : f32
    %115 = vector.broadcast %cst_69 : f32 to vector<2x32xf32>
    %116 = arith.addf %115, %114 : vector<2x32xf32>
    %117 = arith.divf %115, %116 : vector<2x32xf32>
    %118 = arith.mulf %111, %0 : vector<2x32xf32>
    %119 = arith.mulf %106, %112 : vector<2x32xf32>
    %120 = arith.addf %118, %119 : vector<2x32xf32>
    %121 = math.tanh %120 : vector<2x32xf32>
    %122 = arith.mulf %117, %121 : vector<2x32xf32>
    %c1_i32_70 = arith.constant 1 : i32
    %c0_71 = arith.constant 0 : index
    %c0_72 = arith.constant 0 : index
    %c0_73 = arith.constant 0 : index
    %123 = vector.load %arg2[%c0_71, %c0_72, %c0_73] : memref<8x32x32xf32, #tpu.memory_space<vmem>>, vector<1x32x32xf32>
    %124 = vector.shape_cast %123 : vector<1x32x32xf32> to vector<32x32xf32>
    %cst_74 = arith.constant dense<0.000000e+00> : vector<2x32xf32>
    %125 = tpu.matmul %57, %124, %cst_74 {dimension_numbers = #tpu.dot_dimension_numbers<[1], [0], [0], [1], [0, 0, 1, 1], [], []>} : vector<2x32xf32>, vector<32x32xf32>, vector<2x32xf32> -> vector<2x32xf32>
    %c4_i32_75 = arith.constant 4 : i32
    %126 = arith.muli %c1_i32_70, %c4_i32_75 : i32
    %c0_i32_76 = arith.constant 0 : i32
    %127 = arith.addi %126, %c0_i32_76 : i32
    %128 = arith.index_cast %127 : i32 to index
    %c0_77 = arith.constant 0 : index
    %c0_78 = arith.constant 0 : index
    %129 = vector.load %arg0[%128, %c0_77, %c0_78] : memref<32x2x32xf32, #tpu.memory_space<vmem>>, vector<1x2x32xf32>
    %130 = vector.shape_cast %129 : vector<1x2x32xf32> to vector<2x32xf32>
    %131 = arith.addf %130, %125 : vector<2x32xf32>
    %c1_79 = arith.constant 1 : index
    %c0_80 = arith.constant 0 : index
    %c0_81 = arith.constant 0 : index
    %132 = vector.load %arg2[%c1_79, %c0_80, %c0_81] : memref<8x32x32xf32, #tpu.memory_space<vmem>>, vector<1x32x32xf32>
    %133 = vector.shape_cast %132 : vector<1x32x32xf32> to vector<32x32xf32>
    %cst_82 = arith.constant dense<0.000000e+00> : vector<2x32xf32>
    %134 = tpu.matmul %57, %133, %cst_82 {dimension_numbers = #tpu.dot_dimension_numbers<[1], [0], [0], [1], [0, 0, 1, 1], [], []>} : vector<2x32xf32>, vector<32x32xf32>, vector<2x32xf32> -> vector<2x32xf32>
    %c4_i32_83 = arith.constant 4 : i32
    %135 = arith.muli %c1_i32_70, %c4_i32_83 : i32
    %c1_i32_84 = arith.constant 1 : i32
    %136 = arith.addi %135, %c1_i32_84 : i32
    %137 = arith.index_cast %136 : i32 to index
    %c0_85 = arith.constant 0 : index
    %c0_86 = arith.constant 0 : index
    %138 = vector.load %arg0[%137, %c0_85, %c0_86] : memref<32x2x32xf32, #tpu.memory_space<vmem>>, vector<1x2x32xf32>
    %139 = vector.shape_cast %138 : vector<1x2x32xf32> to vector<2x32xf32>
    %140 = arith.addf %139, %134 : vector<2x32xf32>
    %c2_87 = arith.constant 2 : index
    %c0_88 = arith.constant 0 : index
    %c0_89 = arith.constant 0 : index
    %141 = vector.load %arg2[%c2_87, %c0_88, %c0_89] : memref<8x32x32xf32, #tpu.memory_space<vmem>>, vector<1x32x32xf32>
    %142 = vector.shape_cast %141 : vector<1x32x32xf32> to vector<32x32xf32>
    %cst_90 = arith.constant dense<0.000000e+00> : vector<2x32xf32>
    %143 = tpu.matmul %57, %142, %cst_90 {dimension_numbers = #tpu.dot_dimension_numbers<[1], [0], [0], [1], [0, 0, 1, 1], [], []>} : vector<2x32xf32>, vector<32x32xf32>, vector<2x32xf32> -> vector<2x32xf32>
    %c4_i32_91 = arith.constant 4 : i32
    %144 = arith.muli %c1_i32_70, %c4_i32_91 : i32
    %c2_i32_92 = arith.constant 2 : i32
    %145 = arith.addi %144, %c2_i32_92 : i32
    %146 = arith.index_cast %145 : i32 to index
    %c0_93 = arith.constant 0 : index
    %c0_94 = arith.constant 0 : index
    %147 = vector.load %arg0[%146, %c0_93, %c0_94] : memref<32x2x32xf32, #tpu.memory_space<vmem>>, vector<1x2x32xf32>
    %148 = vector.shape_cast %147 : vector<1x2x32xf32> to vector<2x32xf32>
    %149 = arith.addf %148, %143 : vector<2x32xf32>
    %c3_95 = arith.constant 3 : index
    %c0_96 = arith.constant 0 : index
    %c0_97 = arith.constant 0 : index
    %150 = vector.load %arg2[%c3_95, %c0_96, %c0_97] : memref<8x32x32xf32, #tpu.memory_space<vmem>>, vector<1x32x32xf32>
    %151 = vector.shape_cast %150 : vector<1x32x32xf32> to vector<32x32xf32>
    %cst_98 = arith.constant dense<0.000000e+00> : vector<2x32xf32>
    %152 = tpu.matmul %57, %151, %cst_98 {dimension_numbers = #tpu.dot_dimension_numbers<[1], [0], [0], [1], [0, 0, 1, 1], [], []>} : vector<2x32xf32>, vector<32x32xf32>, vector<2x32xf32> -> vector<2x32xf32>
    %c4_i32_99 = arith.constant 4 : i32
    %153 = arith.muli %c1_i32_70, %c4_i32_99 : i32
    %c3_i32_100 = arith.constant 3 : i32
    %154 = arith.addi %153, %c3_i32_100 : i32
    %155 = arith.index_cast %154 : i32 to index
    %c0_101 = arith.constant 0 : index
    %c0_102 = arith.constant 0 : index
    %156 = vector.load %arg0[%155, %c0_101, %c0_102] : memref<32x2x32xf32, #tpu.memory_space<vmem>>, vector<1x2x32xf32>
    %157 = vector.shape_cast %156 : vector<1x2x32xf32> to vector<2x32xf32>
    %158 = arith.addf %157, %152 : vector<2x32xf32>
    %159 = arith.negf %131 : vector<2x32xf32>
    %160 = math.exp %159 : vector<2x32xf32>
    %cst_103 = arith.constant 1.000000e+00 : f32
    %161 = vector.broadcast %cst_103 : f32 to vector<2x32xf32>
    %162 = arith.addf %161, %160 : vector<2x32xf32>
    %163 = arith.divf %161, %162 : vector<2x32xf32>
    %164 = arith.negf %140 : vector<2x32xf32>
    %165 = math.exp %164 : vector<2x32xf32>
    %cst_104 = arith.constant 1.000000e+00 : f32
    %166 = vector.broadcast %cst_104 : f32 to vector<2x32xf32>
    %167 = arith.addf %166, %165 : vector<2x32xf32>
    %168 = arith.divf %166, %167 : vector<2x32xf32>
    %169 = math.tanh %149 : vector<2x32xf32>
    %170 = arith.negf %158 : vector<2x32xf32>
    %171 = math.exp %170 : vector<2x32xf32>
    %cst_105 = arith.constant 1.000000e+00 : f32
    %172 = vector.broadcast %cst_105 : f32 to vector<2x32xf32>
    %173 = arith.addf %172, %171 : vector<2x32xf32>
    %174 = arith.divf %172, %173 : vector<2x32xf32>
    %175 = arith.mulf %168, %55 : vector<2x32xf32>
    %176 = arith.mulf %163, %169 : vector<2x32xf32>
    %177 = arith.addf %175, %176 : vector<2x32xf32>
    %178 = math.tanh %177 : vector<2x32xf32>
    %179 = arith.mulf %174, %178 : vector<2x32xf32>
    %c4_106 = arith.constant 4 : index
    %c0_107 = arith.constant 0 : index
    %c0_108 = arith.constant 0 : index
    %180 = vector.load %arg2[%c4_106, %c0_107, %c0_108] : memref<8x32x32xf32, #tpu.memory_space<vmem>>, vector<1x32x32xf32>
    %181 = vector.shape_cast %180 : vector<1x32x32xf32> to vector<32x32xf32>
    %cst_109 = arith.constant dense<0.000000e+00> : vector<2x32xf32>
    %182 = tpu.matmul %122, %181, %cst_109 {dimension_numbers = #tpu.dot_dimension_numbers<[1], [0], [0], [1], [0, 0, 1, 1], [], []>} : vector<2x32xf32>, vector<32x32xf32>, vector<2x32xf32> -> vector<2x32xf32>
    %c0_110 = arith.constant 0 : index
    %c0_111 = arith.constant 0 : index
    %c0_112 = arith.constant 0 : index
    %183 = vector.load %arg3[%c0_110, %c0_111, %c0_112] : memref<4x1x32xf32, #tpu.memory_space<vmem>>, vector<1x1x32xf32>
    %184 = vector.shape_cast %183 : vector<1x1x32xf32> to vector<1x32xf32>
    %185 = vector.broadcast %184 : vector<1x32xf32> to vector<2x32xf32>
    %186 = arith.addf %185, %182 : vector<2x32xf32>
    %c0_113 = arith.constant 0 : index
    %c0_114 = arith.constant 0 : index
    %c0_115 = arith.constant 0 : index
    %187 = vector.load %arg1[%c0_113, %c0_114, %c0_115] : memref<4x32x32xf32, #tpu.memory_space<vmem>>, vector<1x32x32xf32>
    %188 = vector.shape_cast %187 : vector<1x32x32xf32> to vector<32x32xf32>
    %cst_116 = arith.constant dense<0.000000e+00> : vector<2x32xf32>
    %189 = tpu.matmul %179, %188, %cst_116 {dimension_numbers = #tpu.dot_dimension_numbers<[1], [0], [0], [1], [0, 0, 1, 1], [], []>} : vector<2x32xf32>, vector<32x32xf32>, vector<2x32xf32> -> vector<2x32xf32>
    %190 = arith.addf %186, %189 : vector<2x32xf32>
    %c5_117 = arith.constant 5 : index
    %c0_118 = arith.constant 0 : index
    %c0_119 = arith.constant 0 : index
    %191 = vector.load %arg2[%c5_117, %c0_118, %c0_119] : memref<8x32x32xf32, #tpu.memory_space<vmem>>, vector<1x32x32xf32>
    %192 = vector.shape_cast %191 : vector<1x32x32xf32> to vector<32x32xf32>
    %cst_120 = arith.constant dense<0.000000e+00> : vector<2x32xf32>
    %193 = tpu.matmul %122, %192, %cst_120 {dimension_numbers = #tpu.dot_dimension_numbers<[1], [0], [0], [1], [0, 0, 1, 1], [], []>} : vector<2x32xf32>, vector<32x32xf32>, vector<2x32xf32> -> vector<2x32xf32>
    %c1_121 = arith.constant 1 : index
    %c0_122 = arith.constant 0 : index
    %c0_123 = arith.constant 0 : index
    %194 = vector.load %arg3[%c1_121, %c0_122, %c0_123] : memref<4x1x32xf32, #tpu.memory_space<vmem>>, vector<1x1x32xf32>
    %195 = vector.shape_cast %194 : vector<1x1x32xf32> to vector<1x32xf32>
    %196 = vector.broadcast %195 : vector<1x32xf32> to vector<2x32xf32>
    %197 = arith.addf %196, %193 : vector<2x32xf32>
    %c1_124 = arith.constant 1 : index
    %c0_125 = arith.constant 0 : index
    %c0_126 = arith.constant 0 : index
    %198 = vector.load %arg1[%c1_124, %c0_125, %c0_126] : memref<4x32x32xf32, #tpu.memory_space<vmem>>, vector<1x32x32xf32>
    %199 = vector.shape_cast %198 : vector<1x32x32xf32> to vector<32x32xf32>
    %cst_127 = arith.constant dense<0.000000e+00> : vector<2x32xf32>
    %200 = tpu.matmul %179, %199, %cst_127 {dimension_numbers = #tpu.dot_dimension_numbers<[1], [0], [0], [1], [0, 0, 1, 1], [], []>} : vector<2x32xf32>, vector<32x32xf32>, vector<2x32xf32> -> vector<2x32xf32>
    %201 = arith.addf %197, %200 : vector<2x32xf32>
    %c6_128 = arith.constant 6 : index
    %c0_129 = arith.constant 0 : index
    %c0_130 = arith.constant 0 : index
    %202 = vector.load %arg2[%c6_128, %c0_129, %c0_130] : memref<8x32x32xf32, #tpu.memory_space<vmem>>, vector<1x32x32xf32>
    %203 = vector.shape_cast %202 : vector<1x32x32xf32> to vector<32x32xf32>
    %cst_131 = arith.constant dense<0.000000e+00> : vector<2x32xf32>
    %204 = tpu.matmul %122, %203, %cst_131 {dimension_numbers = #tpu.dot_dimension_numbers<[1], [0], [0], [1], [0, 0, 1, 1], [], []>} : vector<2x32xf32>, vector<32x32xf32>, vector<2x32xf32> -> vector<2x32xf32>
    %c2_132 = arith.constant 2 : index
    %c0_133 = arith.constant 0 : index
    %c0_134 = arith.constant 0 : index
    %205 = vector.load %arg3[%c2_132, %c0_133, %c0_134] : memref<4x1x32xf32, #tpu.memory_space<vmem>>, vector<1x1x32xf32>
    %206 = vector.shape_cast %205 : vector<1x1x32xf32> to vector<1x32xf32>
    %207 = vector.broadcast %206 : vector<1x32xf32> to vector<2x32xf32>
    %208 = arith.addf %207, %204 : vector<2x32xf32>
    %c2_135 = arith.constant 2 : index
    %c0_136 = arith.constant 0 : index
    %c0_137 = arith.constant 0 : index
    %209 = vector.load %arg1[%c2_135, %c0_136, %c0_137] : memref<4x32x32xf32, #tpu.memory_space<vmem>>, vector<1x32x32xf32>
    %210 = vector.shape_cast %209 : vector<1x32x32xf32> to vector<32x32xf32>
    %cst_138 = arith.constant dense<0.000000e+00> : vector<2x32xf32>
    %211 = tpu.matmul %179, %210, %cst_138 {dimension_numbers = #tpu.dot_dimension_numbers<[1], [0], [0], [1], [0, 0, 1, 1], [], []>} : vector<2x32xf32>, vector<32x32xf32>, vector<2x32xf32> -> vector<2x32xf32>
    %212 = arith.addf %208, %211 : vector<2x32xf32>
    %c7_139 = arith.constant 7 : index
    %c0_140 = arith.constant 0 : index
    %c0_141 = arith.constant 0 : index
    %213 = vector.load %arg2[%c7_139, %c0_140, %c0_141] : memref<8x32x32xf32, #tpu.memory_space<vmem>>, vector<1x32x32xf32>
    %214 = vector.shape_cast %213 : vector<1x32x32xf32> to vector<32x32xf32>
    %cst_142 = arith.constant dense<0.000000e+00> : vector<2x32xf32>
    %215 = tpu.matmul %122, %214, %cst_142 {dimension_numbers = #tpu.dot_dimension_numbers<[1], [0], [0], [1], [0, 0, 1, 1], [], []>} : vector<2x32xf32>, vector<32x32xf32>, vector<2x32xf32> -> vector<2x32xf32>
    %c3_143 = arith.constant 3 : index
    %c0_144 = arith.constant 0 : index
    %c0_145 = arith.constant 0 : index
    %216 = vector.load %arg3[%c3_143, %c0_144, %c0_145] : memref<4x1x32xf32, #tpu.memory_space<vmem>>, vector<1x1x32xf32>
    %217 = vector.shape_cast %216 : vector<1x1x32xf32> to vector<1x32xf32>
    %218 = vector.broadcast %217 : vector<1x32xf32> to vector<2x32xf32>
    %219 = arith.addf %218, %215 : vector<2x32xf32>
    %c3_146 = arith.constant 3 : index
    %c0_147 = arith.constant 0 : index
    %c0_148 = arith.constant 0 : index
    %220 = vector.load %arg1[%c3_146, %c0_147, %c0_148] : memref<4x32x32xf32, #tpu.memory_space<vmem>>, vector<1x32x32xf32>
    %221 = vector.shape_cast %220 : vector<1x32x32xf32> to vector<32x32xf32>
    %cst_149 = arith.constant dense<0.000000e+00> : vector<2x32xf32>
    %222 = tpu.matmul %179, %221, %cst_149 {dimension_numbers = #tpu.dot_dimension_numbers<[1], [0], [0], [1], [0, 0, 1, 1], [], []>} : vector<2x32xf32>, vector<32x32xf32>, vector<2x32xf32> -> vector<2x32xf32>
    %223 = arith.addf %219, %222 : vector<2x32xf32>
    %224 = arith.negf %190 : vector<2x32xf32>
    %225 = math.exp %224 : vector<2x32xf32>
    %cst_150 = arith.constant 1.000000e+00 : f32
    %226 = vector.broadcast %cst_150 : f32 to vector<2x32xf32>
    %227 = arith.addf %226, %225 : vector<2x32xf32>
    %228 = arith.divf %226, %227 : vector<2x32xf32>
    %229 = arith.negf %201 : vector<2x32xf32>
    %230 = math.exp %229 : vector<2x32xf32>
    %cst_151 = arith.constant 1.000000e+00 : f32
    %231 = vector.broadcast %cst_151 : f32 to vector<2x32xf32>
    %232 = arith.addf %231, %230 : vector<2x32xf32>
    %233 = arith.divf %231, %232 : vector<2x32xf32>
    %234 = math.tanh %212 : vector<2x32xf32>
    %235 = arith.negf %223 : vector<2x32xf32>
    %236 = math.exp %235 : vector<2x32xf32>
    %cst_152 = arith.constant 1.000000e+00 : f32
    %237 = vector.broadcast %cst_152 : f32 to vector<2x32xf32>
    %238 = arith.addf %237, %236 : vector<2x32xf32>
    %239 = arith.divf %237, %238 : vector<2x32xf32>
    %240 = arith.mulf %233, %120 : vector<2x32xf32>
    %241 = arith.mulf %228, %234 : vector<2x32xf32>
    %242 = arith.addf %240, %241 : vector<2x32xf32>
    %243 = math.tanh %242 : vector<2x32xf32>
    %244 = arith.mulf %239, %243 : vector<2x32xf32>
    %c2_i32_153 = arith.constant 2 : i32
    %c0_154 = arith.constant 0 : index
    %c0_155 = arith.constant 0 : index
    %c0_156 = arith.constant 0 : index
    %245 = vector.load %arg2[%c0_154, %c0_155, %c0_156] : memref<8x32x32xf32, #tpu.memory_space<vmem>>, vector<1x32x32xf32>
    %246 = vector.shape_cast %245 : vector<1x32x32xf32> to vector<32x32xf32>
    %cst_157 = arith.constant dense<0.000000e+00> : vector<2x32xf32>
    %247 = tpu.matmul %179, %246, %cst_157 {dimension_numbers = #tpu.dot_dimension_numbers<[1], [0], [0], [1], [0, 0, 1, 1], [], []>} : vector<2x32xf32>, vector<32x32xf32>, vector<2x32xf32> -> vector<2x32xf32>
    %c4_i32_158 = arith.constant 4 : i32
    %248 = arith.muli %c2_i32_153, %c4_i32_158 : i32
    %c0_i32_159 = arith.constant 0 : i32
    %249 = arith.addi %248, %c0_i32_159 : i32
    %250 = arith.index_cast %249 : i32 to index
    %c0_160 = arith.constant 0 : index
    %c0_161 = arith.constant 0 : index
    %251 = vector.load %arg0[%250, %c0_160, %c0_161] : memref<32x2x32xf32, #tpu.memory_space<vmem>>, vector<1x2x32xf32>
    %252 = vector.shape_cast %251 : vector<1x2x32xf32> to vector<2x32xf32>
    %253 = arith.addf %252, %247 : vector<2x32xf32>
    %c1_162 = arith.constant 1 : index
    %c0_163 = arith.constant 0 : index
    %c0_164 = arith.constant 0 : index
    %254 = vector.load %arg2[%c1_162, %c0_163, %c0_164] : memref<8x32x32xf32, #tpu.memory_space<vmem>>, vector<1x32x32xf32>
    %255 = vector.shape_cast %254 : vector<1x32x32xf32> to vector<32x32xf32>
    %cst_165 = arith.constant dense<0.000000e+00> : vector<2x32xf32>
    %256 = tpu.matmul %179, %255, %cst_165 {dimension_numbers = #tpu.dot_dimension_numbers<[1], [0], [0], [1], [0, 0, 1, 1], [], []>} : vector<2x32xf32>, vector<32x32xf32>, vector<2x32xf32> -> vector<2x32xf32>
    %c4_i32_166 = arith.constant 4 : i32
    %257 = arith.muli %c2_i32_153, %c4_i32_166 : i32
    %c1_i32_167 = arith.constant 1 : i32
    %258 = arith.addi %257, %c1_i32_167 : i32
    %259 = arith.index_cast %258 : i32 to index
    %c0_168 = arith.constant 0 : index
    %c0_169 = arith.constant 0 : index
    %260 = vector.load %arg0[%259, %c0_168, %c0_169] : memref<32x2x32xf32, #tpu.memory_space<vmem>>, vector<1x2x32xf32>
    %261 = vector.shape_cast %260 : vector<1x2x32xf32> to vector<2x32xf32>
    %262 = arith.addf %261, %256 : vector<2x32xf32>
    %c2_170 = arith.constant 2 : index
    %c0_171 = arith.constant 0 : index
    %c0_172 = arith.constant 0 : index
    %263 = vector.load %arg2[%c2_170, %c0_171, %c0_172] : memref<8x32x32xf32, #tpu.memory_space<vmem>>, vector<1x32x32xf32>
    %264 = vector.shape_cast %263 : vector<1x32x32xf32> to vector<32x32xf32>
    %cst_173 = arith.constant dense<0.000000e+00> : vector<2x32xf32>
    %265 = tpu.matmul %179, %264, %cst_173 {dimension_numbers = #tpu.dot_dimension_numbers<[1], [0], [0], [1], [0, 0, 1, 1], [], []>} : vector<2x32xf32>, vector<32x32xf32>, vector<2x32xf32> -> vector<2x32xf32>
    %c4_i32_174 = arith.constant 4 : i32
    %266 = arith.muli %c2_i32_153, %c4_i32_174 : i32
    %c2_i32_175 = arith.constant 2 : i32
    %267 = arith.addi %266, %c2_i32_175 : i32
    %268 = arith.index_cast %267 : i32 to index
    %c0_176 = arith.constant 0 : index
    %c0_177 = arith.constant 0 : index
    %269 = vector.load %arg0[%268, %c0_176, %c0_177] : memref<32x2x32xf32, #tpu.memory_space<vmem>>, vector<1x2x32xf32>
    %270 = vector.shape_cast %269 : vector<1x2x32xf32> to vector<2x32xf32>
    %271 = arith.addf %270, %265 : vector<2x32xf32>
    %c3_178 = arith.constant 3 : index
    %c0_179 = arith.constant 0 : index
    %c0_180 = arith.constant 0 : index
    %272 = vector.load %arg2[%c3_178, %c0_179, %c0_180] : memref<8x32x32xf32, #tpu.memory_space<vmem>>, vector<1x32x32xf32>
    %273 = vector.shape_cast %272 : vector<1x32x32xf32> to vector<32x32xf32>
    %cst_181 = arith.constant dense<0.000000e+00> : vector<2x32xf32>
    %274 = tpu.matmul %179, %273, %cst_181 {dimension_numbers = #tpu.dot_dimension_numbers<[1], [0], [0], [1], [0, 0, 1, 1], [], []>} : vector<2x32xf32>, vector<32x32xf32>, vector<2x32xf32> -> vector<2x32xf32>
    %c4_i32_182 = arith.constant 4 : i32
    %275 = arith.muli %c2_i32_153, %c4_i32_182 : i32
    %c3_i32_183 = arith.constant 3 : i32
    %276 = arith.addi %275, %c3_i32_183 : i32
    %277 = arith.index_cast %276 : i32 to index
    %c0_184 = arith.constant 0 : index
    %c0_185 = arith.constant 0 : index
    %278 = vector.load %arg0[%277, %c0_184, %c0_185] : memref<32x2x32xf32, #tpu.memory_space<vmem>>, vector<1x2x32xf32>
    %279 = vector.shape_cast %278 : vector<1x2x32xf32> to vector<2x32xf32>
    %280 = arith.addf %279, %274 : vector<2x32xf32>
    %281 = arith.negf %253 : vector<2x32xf32>
    %282 = math.exp %281 : vector<2x32xf32>
    %cst_186 = arith.constant 1.000000e+00 : f32
    %283 = vector.broadcast %cst_186 : f32 to vector<2x32xf32>
    %284 = arith.addf %283, %282 : vector<2x32xf32>
    %285 = arith.divf %283, %284 : vector<2x32xf32>
    %286 = arith.negf %262 : vector<2x32xf32>
    %287 = math.exp %286 : vector<2x32xf32>
    %cst_187 = arith.constant 1.000000e+00 : f32
    %288 = vector.broadcast %cst_187 : f32 to vector<2x32xf32>
    %289 = arith.addf %288, %287 : vector<2x32xf32>
    %290 = arith.divf %288, %289 : vector<2x32xf32>
    %291 = math.tanh %271 : vector<2x32xf32>
    %292 = arith.negf %280 : vector<2x32xf32>
    %293 = math.exp %292 : vector<2x32xf32>
    %cst_188 = arith.constant 1.000000e+00 : f32
    %294 = vector.broadcast %cst_188 : f32 to vector<2x32xf32>
    %295 = arith.addf %294, %293 : vector<2x32xf32>
    %296 = arith.divf %294, %295 : vector<2x32xf32>
    %297 = arith.mulf %290, %177 : vector<2x32xf32>
    %298 = arith.mulf %285, %291 : vector<2x32xf32>
    %299 = arith.addf %297, %298 : vector<2x32xf32>
    %300 = math.tanh %299 : vector<2x32xf32>
    %301 = arith.mulf %296, %300 : vector<2x32xf32>
    %c4_189 = arith.constant 4 : index
    %c0_190 = arith.constant 0 : index
    %c0_191 = arith.constant 0 : index
    %302 = vector.load %arg2[%c4_189, %c0_190, %c0_191] : memref<8x32x32xf32, #tpu.memory_space<vmem>>, vector<1x32x32xf32>
    %303 = vector.shape_cast %302 : vector<1x32x32xf32> to vector<32x32xf32>
    %cst_192 = arith.constant dense<0.000000e+00> : vector<2x32xf32>
    %304 = tpu.matmul %244, %303, %cst_192 {dimension_numbers = #tpu.dot_dimension_numbers<[1], [0], [0], [1], [0, 0, 1, 1], [], []>} : vector<2x32xf32>, vector<32x32xf32>, vector<2x32xf32> -> vector<2x32xf32>
    %c0_193 = arith.constant 0 : index
    %c0_194 = arith.constant 0 : index
    %c0_195 = arith.constant 0 : index
    %305 = vector.load %arg3[%c0_193, %c0_194, %c0_195] : memref<4x1x32xf32, #tpu.memory_space<vmem>>, vector<1x1x32xf32>
    %306 = vector.shape_cast %305 : vector<1x1x32xf32> to vector<1x32xf32>
    %307 = vector.broadcast %306 : vector<1x32xf32> to vector<2x32xf32>
    %308 = arith.addf %307, %304 : vector<2x32xf32>
    %c0_196 = arith.constant 0 : index
    %c0_197 = arith.constant 0 : index
    %c0_198 = arith.constant 0 : index
    %309 = vector.load %arg1[%c0_196, %c0_197, %c0_198] : memref<4x32x32xf32, #tpu.memory_space<vmem>>, vector<1x32x32xf32>
    %310 = vector.shape_cast %309 : vector<1x32x32xf32> to vector<32x32xf32>
    %cst_199 = arith.constant dense<0.000000e+00> : vector<2x32xf32>
    %311 = tpu.matmul %301, %310, %cst_199 {dimension_numbers = #tpu.dot_dimension_numbers<[1], [0], [0], [1], [0, 0, 1, 1], [], []>} : vector<2x32xf32>, vector<32x32xf32>, vector<2x32xf32> -> vector<2x32xf32>
    %312 = arith.addf %308, %311 : vector<2x32xf32>
    %c5_200 = arith.constant 5 : index
    %c0_201 = arith.constant 0 : index
    %c0_202 = arith.constant 0 : index
    %313 = vector.load %arg2[%c5_200, %c0_201, %c0_202] : memref<8x32x32xf32, #tpu.memory_space<vmem>>, vector<1x32x32xf32>
    %314 = vector.shape_cast %313 : vector<1x32x32xf32> to vector<32x32xf32>
    %cst_203 = arith.constant dense<0.000000e+00> : vector<2x32xf32>
    %315 = tpu.matmul %244, %314, %cst_203 {dimension_numbers = #tpu.dot_dimension_numbers<[1], [0], [0], [1], [0, 0, 1, 1], [], []>} : vector<2x32xf32>, vector<32x32xf32>, vector<2x32xf32> -> vector<2x32xf32>
    %c1_204 = arith.constant 1 : index
    %c0_205 = arith.constant 0 : index
    %c0_206 = arith.constant 0 : index
    %316 = vector.load %arg3[%c1_204, %c0_205, %c0_206] : memref<4x1x32xf32, #tpu.memory_space<vmem>>, vector<1x1x32xf32>
    %317 = vector.shape_cast %316 : vector<1x1x32xf32> to vector<1x32xf32>
    %318 = vector.broadcast %317 : vector<1x32xf32> to vector<2x32xf32>
    %319 = arith.addf %318, %315 : vector<2x32xf32>
    %c1_207 = arith.constant 1 : index
    %c0_208 = arith.constant 0 : index
    %c0_209 = arith.constant 0 : index
    %320 = vector.load %arg1[%c1_207, %c0_208, %c0_209] : memref<4x32x32xf32, #tpu.memory_space<vmem>>, vector<1x32x32xf32>
    %321 = vector.shape_cast %320 : vector<1x32x32xf32> to vector<32x32xf32>
    %cst_210 = arith.constant dense<0.000000e+00> : vector<2x32xf32>
    %322 = tpu.matmul %301, %321, %cst_210 {dimension_numbers = #tpu.dot_dimension_numbers<[1], [0], [0], [1], [0, 0, 1, 1], [], []>} : vector<2x32xf32>, vector<32x32xf32>, vector<2x32xf32> -> vector<2x32xf32>
    %323 = arith.addf %319, %322 : vector<2x32xf32>
    %c6_211 = arith.constant 6 : index
    %c0_212 = arith.constant 0 : index
    %c0_213 = arith.constant 0 : index
    %324 = vector.load %arg2[%c6_211, %c0_212, %c0_213] : memref<8x32x32xf32, #tpu.memory_space<vmem>>, vector<1x32x32xf32>
    %325 = vector.shape_cast %324 : vector<1x32x32xf32> to vector<32x32xf32>
    %cst_214 = arith.constant dense<0.000000e+00> : vector<2x32xf32>
    %326 = tpu.matmul %244, %325, %cst_214 {dimension_numbers = #tpu.dot_dimension_numbers<[1], [0], [0], [1], [0, 0, 1, 1], [], []>} : vector<2x32xf32>, vector<32x32xf32>, vector<2x32xf32> -> vector<2x32xf32>
    %c2_215 = arith.constant 2 : index
    %c0_216 = arith.constant 0 : index
    %c0_217 = arith.constant 0 : index
    %327 = vector.load %arg3[%c2_215, %c0_216, %c0_217] : memref<4x1x32xf32, #tpu.memory_space<vmem>>, vector<1x1x32xf32>
    %328 = vector.shape_cast %327 : vector<1x1x32xf32> to vector<1x32xf32>
    %329 = vector.broadcast %328 : vector<1x32xf32> to vector<2x32xf32>
    %330 = arith.addf %329, %326 : vector<2x32xf32>
    %c2_218 = arith.constant 2 : index
    %c0_219 = arith.constant 0 : index
    %c0_220 = arith.constant 0 : index
    %331 = vector.load %arg1[%c2_218, %c0_219, %c0_220] : memref<4x32x32xf32, #tpu.memory_space<vmem>>, vector<1x32x32xf32>
    %332 = vector.shape_cast %331 : vector<1x32x32xf32> to vector<32x32xf32>
    %cst_221 = arith.constant dense<0.000000e+00> : vector<2x32xf32>
    %333 = tpu.matmul %301, %332, %cst_221 {dimension_numbers = #tpu.dot_dimension_numbers<[1], [0], [0], [1], [0, 0, 1, 1], [], []>} : vector<2x32xf32>, vector<32x32xf32>, vector<2x32xf32> -> vector<2x32xf32>
    %334 = arith.addf %330, %333 : vector<2x32xf32>
    %c7_222 = arith.constant 7 : index
    %c0_223 = arith.constant 0 : index
    %c0_224 = arith.constant 0 : index
    %335 = vector.load %arg2[%c7_222, %c0_223, %c0_224] : memref<8x32x32xf32, #tpu.memory_space<vmem>>, vector<1x32x32xf32>
    %336 = vector.shape_cast %335 : vector<1x32x32xf32> to vector<32x32xf32>
    %cst_225 = arith.constant dense<0.000000e+00> : vector<2x32xf32>
    %337 = tpu.matmul %244, %336, %cst_225 {dimension_numbers = #tpu.dot_dimension_numbers<[1], [0], [0], [1], [0, 0, 1, 1], [], []>} : vector<2x32xf32>, vector<32x32xf32>, vector<2x32xf32> -> vector<2x32xf32>
    %c3_226 = arith.constant 3 : index
    %c0_227 = arith.constant 0 : index
    %c0_228 = arith.constant 0 : index
    %338 = vector.load %arg3[%c3_226, %c0_227, %c0_228] : memref<4x1x32xf32, #tpu.memory_space<vmem>>, vector<1x1x32xf32>
    %339 = vector.shape_cast %338 : vector<1x1x32xf32> to vector<1x32xf32>
    %340 = vector.broadcast %339 : vector<1x32xf32> to vector<2x32xf32>
    %341 = arith.addf %340, %337 : vector<2x32xf32>
    %c3_229 = arith.constant 3 : index
    %c0_230 = arith.constant 0 : index
    %c0_231 = arith.constant 0 : index
    %342 = vector.load %arg1[%c3_229, %c0_230, %c0_231] : memref<4x32x32xf32, #tpu.memory_space<vmem>>, vector<1x32x32xf32>
    %343 = vector.shape_cast %342 : vector<1x32x32xf32> to vector<32x32xf32>
    %cst_232 = arith.constant dense<0.000000e+00> : vector<2x32xf32>
    %344 = tpu.matmul %301, %343, %cst_232 {dimension_numbers = #tpu.dot_dimension_numbers<[1], [0], [0], [1], [0, 0, 1, 1], [], []>} : vector<2x32xf32>, vector<32x32xf32>, vector<2x32xf32> -> vector<2x32xf32>
    %345 = arith.addf %341, %344 : vector<2x32xf32>
    %346 = arith.negf %312 : vector<2x32xf32>
    %347 = math.exp %346 : vector<2x32xf32>
    %cst_233 = arith.constant 1.000000e+00 : f32
    %348 = vector.broadcast %cst_233 : f32 to vector<2x32xf32>
    %349 = arith.addf %348, %347 : vector<2x32xf32>
    %350 = arith.divf %348, %349 : vector<2x32xf32>
    %351 = arith.negf %323 : vector<2x32xf32>
    %352 = math.exp %351 : vector<2x32xf32>
    %cst_234 = arith.constant 1.000000e+00 : f32
    %353 = vector.broadcast %cst_234 : f32 to vector<2x32xf32>
    %354 = arith.addf %353, %352 : vector<2x32xf32>
    %355 = arith.divf %353, %354 : vector<2x32xf32>
    %356 = math.tanh %334 : vector<2x32xf32>
    %357 = arith.negf %345 : vector<2x32xf32>
    %358 = math.exp %357 : vector<2x32xf32>
    %cst_235 = arith.constant 1.000000e+00 : f32
    %359 = vector.broadcast %cst_235 : f32 to vector<2x32xf32>
    %360 = arith.addf %359, %358 : vector<2x32xf32>
    %361 = arith.divf %359, %360 : vector<2x32xf32>
    %362 = arith.mulf %355, %242 : vector<2x32xf32>
    %363 = arith.mulf %350, %356 : vector<2x32xf32>
    %364 = arith.addf %362, %363 : vector<2x32xf32>
    %365 = math.tanh %364 : vector<2x32xf32>
    %366 = arith.mulf %361, %365 : vector<2x32xf32>
    %c3_i32_236 = arith.constant 3 : i32
    %c0_237 = arith.constant 0 : index
    %c0_238 = arith.constant 0 : index
    %c0_239 = arith.constant 0 : index
    %367 = vector.load %arg2[%c0_237, %c0_238, %c0_239] : memref<8x32x32xf32, #tpu.memory_space<vmem>>, vector<1x32x32xf32>
    %368 = vector.shape_cast %367 : vector<1x32x32xf32> to vector<32x32xf32>
    %cst_240 = arith.constant dense<0.000000e+00> : vector<2x32xf32>
    %369 = tpu.matmul %301, %368, %cst_240 {dimension_numbers = #tpu.dot_dimension_numbers<[1], [0], [0], [1], [0, 0, 1, 1], [], []>} : vector<2x32xf32>, vector<32x32xf32>, vector<2x32xf32> -> vector<2x32xf32>
    %c4_i32_241 = arith.constant 4 : i32
    %370 = arith.muli %c3_i32_236, %c4_i32_241 : i32
    %c0_i32_242 = arith.constant 0 : i32
    %371 = arith.addi %370, %c0_i32_242 : i32
    %372 = arith.index_cast %371 : i32 to index
    %c0_243 = arith.constant 0 : index
    %c0_244 = arith.constant 0 : index
    %373 = vector.load %arg0[%372, %c0_243, %c0_244] : memref<32x2x32xf32, #tpu.memory_space<vmem>>, vector<1x2x32xf32>
    %374 = vector.shape_cast %373 : vector<1x2x32xf32> to vector<2x32xf32>
    %375 = arith.addf %374, %369 : vector<2x32xf32>
    %c1_245 = arith.constant 1 : index
    %c0_246 = arith.constant 0 : index
    %c0_247 = arith.constant 0 : index
    %376 = vector.load %arg2[%c1_245, %c0_246, %c0_247] : memref<8x32x32xf32, #tpu.memory_space<vmem>>, vector<1x32x32xf32>
    %377 = vector.shape_cast %376 : vector<1x32x32xf32> to vector<32x32xf32>
    %cst_248 = arith.constant dense<0.000000e+00> : vector<2x32xf32>
    %378 = tpu.matmul %301, %377, %cst_248 {dimension_numbers = #tpu.dot_dimension_numbers<[1], [0], [0], [1], [0, 0, 1, 1], [], []>} : vector<2x32xf32>, vector<32x32xf32>, vector<2x32xf32> -> vector<2x32xf32>
    %c4_i32_249 = arith.constant 4 : i32
    %379 = arith.muli %c3_i32_236, %c4_i32_249 : i32
    %c1_i32_250 = arith.constant 1 : i32
    %380 = arith.addi %379, %c1_i32_250 : i32
    %381 = arith.index_cast %380 : i32 to index
    %c0_251 = arith.constant 0 : index
    %c0_252 = arith.constant 0 : index
    %382 = vector.load %arg0[%381, %c0_251, %c0_252] : memref<32x2x32xf32, #tpu.memory_space<vmem>>, vector<1x2x32xf32>
    %383 = vector.shape_cast %382 : vector<1x2x32xf32> to vector<2x32xf32>
    %384 = arith.addf %383, %378 : vector<2x32xf32>
    %c2_253 = arith.constant 2 : index
    %c0_254 = arith.constant 0 : index
    %c0_255 = arith.constant 0 : index
    %385 = vector.load %arg2[%c2_253, %c0_254, %c0_255] : memref<8x32x32xf32, #tpu.memory_space<vmem>>, vector<1x32x32xf32>
    %386 = vector.shape_cast %385 : vector<1x32x32xf32> to vector<32x32xf32>
    %cst_256 = arith.constant dense<0.000000e+00> : vector<2x32xf32>
    %387 = tpu.matmul %301, %386, %cst_256 {dimension_numbers = #tpu.dot_dimension_numbers<[1], [0], [0], [1], [0, 0, 1, 1], [], []>} : vector<2x32xf32>, vector<32x32xf32>, vector<2x32xf32> -> vector<2x32xf32>
    %c4_i32_257 = arith.constant 4 : i32
    %388 = arith.muli %c3_i32_236, %c4_i32_257 : i32
    %c2_i32_258 = arith.constant 2 : i32
    %389 = arith.addi %388, %c2_i32_258 : i32
    %390 = arith.index_cast %389 : i32 to index
    %c0_259 = arith.constant 0 : index
    %c0_260 = arith.constant 0 : index
    %391 = vector.load %arg0[%390, %c0_259, %c0_260] : memref<32x2x32xf32, #tpu.memory_space<vmem>>, vector<1x2x32xf32>
    %392 = vector.shape_cast %391 : vector<1x2x32xf32> to vector<2x32xf32>
    %393 = arith.addf %392, %387 : vector<2x32xf32>
    %c3_261 = arith.constant 3 : index
    %c0_262 = arith.constant 0 : index
    %c0_263 = arith.constant 0 : index
    %394 = vector.load %arg2[%c3_261, %c0_262, %c0_263] : memref<8x32x32xf32, #tpu.memory_space<vmem>>, vector<1x32x32xf32>
    %395 = vector.shape_cast %394 : vector<1x32x32xf32> to vector<32x32xf32>
    %cst_264 = arith.constant dense<0.000000e+00> : vector<2x32xf32>
    %396 = tpu.matmul %301, %395, %cst_264 {dimension_numbers = #tpu.dot_dimension_numbers<[1], [0], [0], [1], [0, 0, 1, 1], [], []>} : vector<2x32xf32>, vector<32x32xf32>, vector<2x32xf32> -> vector<2x32xf32>
    %c4_i32_265 = arith.constant 4 : i32
    %397 = arith.muli %c3_i32_236, %c4_i32_265 : i32
    %c3_i32_266 = arith.constant 3 : i32
    %398 = arith.addi %397, %c3_i32_266 : i32
    %399 = arith.index_cast %398 : i32 to index
    %c0_267 = arith.constant 0 : index
    %c0_268 = arith.constant 0 : index
    %400 = vector.load %arg0[%399, %c0_267, %c0_268] : memref<32x2x32xf32, #tpu.memory_space<vmem>>, vector<1x2x32xf32>
    %401 = vector.shape_cast %400 : vector<1x2x32xf32> to vector<2x32xf32>
    %402 = arith.addf %401, %396 : vector<2x32xf32>
    %403 = arith.negf %375 : vector<2x32xf32>
    %404 = math.exp %403 : vector<2x32xf32>
    %cst_269 = arith.constant 1.000000e+00 : f32
    %405 = vector.broadcast %cst_269 : f32 to vector<2x32xf32>
    %406 = arith.addf %405, %404 : vector<2x32xf32>
    %407 = arith.divf %405, %406 : vector<2x32xf32>
    %408 = arith.negf %384 : vector<2x32xf32>
    %409 = math.exp %408 : vector<2x32xf32>
    %cst_270 = arith.constant 1.000000e+00 : f32
    %410 = vector.broadcast %cst_270 : f32 to vector<2x32xf32>
    %411 = arith.addf %410, %409 : vector<2x32xf32>
    %412 = arith.divf %410, %411 : vector<2x32xf32>
    %413 = math.tanh %393 : vector<2x32xf32>
    %414 = arith.negf %402 : vector<2x32xf32>
    %415 = math.exp %414 : vector<2x32xf32>
    %cst_271 = arith.constant 1.000000e+00 : f32
    %416 = vector.broadcast %cst_271 : f32 to vector<2x32xf32>
    %417 = arith.addf %416, %415 : vector<2x32xf32>
    %418 = arith.divf %416, %417 : vector<2x32xf32>
    %419 = arith.mulf %412, %299 : vector<2x32xf32>
    %420 = arith.mulf %407, %413 : vector<2x32xf32>
    %421 = arith.addf %419, %420 : vector<2x32xf32>
    %422 = math.tanh %421 : vector<2x32xf32>
    %423 = arith.mulf %418, %422 : vector<2x32xf32>
    %c4_272 = arith.constant 4 : index
    %c0_273 = arith.constant 0 : index
    %c0_274 = arith.constant 0 : index
    %424 = vector.load %arg2[%c4_272, %c0_273, %c0_274] : memref<8x32x32xf32, #tpu.memory_space<vmem>>, vector<1x32x32xf32>
    %425 = vector.shape_cast %424 : vector<1x32x32xf32> to vector<32x32xf32>
    %cst_275 = arith.constant dense<0.000000e+00> : vector<2x32xf32>
    %426 = tpu.matmul %366, %425, %cst_275 {dimension_numbers = #tpu.dot_dimension_numbers<[1], [0], [0], [1], [0, 0, 1, 1], [], []>} : vector<2x32xf32>, vector<32x32xf32>, vector<2x32xf32> -> vector<2x32xf32>
    %c0_276 = arith.constant 0 : index
    %c0_277 = arith.constant 0 : index
    %c0_278 = arith.constant 0 : index
    %427 = vector.load %arg3[%c0_276, %c0_277, %c0_278] : memref<4x1x32xf32, #tpu.memory_space<vmem>>, vector<1x1x32xf32>
    %428 = vector.shape_cast %427 : vector<1x1x32xf32> to vector<1x32xf32>
    %429 = vector.broadcast %428 : vector<1x32xf32> to vector<2x32xf32>
    %430 = arith.addf %429, %426 : vector<2x32xf32>
    %c0_279 = arith.constant 0 : index
    %c0_280 = arith.constant 0 : index
    %c0_281 = arith.constant 0 : index
    %431 = vector.load %arg1[%c0_279, %c0_280, %c0_281] : memref<4x32x32xf32, #tpu.memory_space<vmem>>, vector<1x32x32xf32>
    %432 = vector.shape_cast %431 : vector<1x32x32xf32> to vector<32x32xf32>
    %cst_282 = arith.constant dense<0.000000e+00> : vector<2x32xf32>
    %433 = tpu.matmul %423, %432, %cst_282 {dimension_numbers = #tpu.dot_dimension_numbers<[1], [0], [0], [1], [0, 0, 1, 1], [], []>} : vector<2x32xf32>, vector<32x32xf32>, vector<2x32xf32> -> vector<2x32xf32>
    %434 = arith.addf %430, %433 : vector<2x32xf32>
    %c5_283 = arith.constant 5 : index
    %c0_284 = arith.constant 0 : index
    %c0_285 = arith.constant 0 : index
    %435 = vector.load %arg2[%c5_283, %c0_284, %c0_285] : memref<8x32x32xf32, #tpu.memory_space<vmem>>, vector<1x32x32xf32>
    %436 = vector.shape_cast %435 : vector<1x32x32xf32> to vector<32x32xf32>
    %cst_286 = arith.constant dense<0.000000e+00> : vector<2x32xf32>
    %437 = tpu.matmul %366, %436, %cst_286 {dimension_numbers = #tpu.dot_dimension_numbers<[1], [0], [0], [1], [0, 0, 1, 1], [], []>} : vector<2x32xf32>, vector<32x32xf32>, vector<2x32xf32> -> vector<2x32xf32>
    %c1_287 = arith.constant 1 : index
    %c0_288 = arith.constant 0 : index
    %c0_289 = arith.constant 0 : index
    %438 = vector.load %arg3[%c1_287, %c0_288, %c0_289] : memref<4x1x32xf32, #tpu.memory_space<vmem>>, vector<1x1x32xf32>
    %439 = vector.shape_cast %438 : vector<1x1x32xf32> to vector<1x32xf32>
    %440 = vector.broadcast %439 : vector<1x32xf32> to vector<2x32xf32>
    %441 = arith.addf %440, %437 : vector<2x32xf32>
    %c1_290 = arith.constant 1 : index
    %c0_291 = arith.constant 0 : index
    %c0_292 = arith.constant 0 : index
    %442 = vector.load %arg1[%c1_290, %c0_291, %c0_292] : memref<4x32x32xf32, #tpu.memory_space<vmem>>, vector<1x32x32xf32>
    %443 = vector.shape_cast %442 : vector<1x32x32xf32> to vector<32x32xf32>
    %cst_293 = arith.constant dense<0.000000e+00> : vector<2x32xf32>
    %444 = tpu.matmul %423, %443, %cst_293 {dimension_numbers = #tpu.dot_dimension_numbers<[1], [0], [0], [1], [0, 0, 1, 1], [], []>} : vector<2x32xf32>, vector<32x32xf32>, vector<2x32xf32> -> vector<2x32xf32>
    %445 = arith.addf %441, %444 : vector<2x32xf32>
    %c6_294 = arith.constant 6 : index
    %c0_295 = arith.constant 0 : index
    %c0_296 = arith.constant 0 : index
    %446 = vector.load %arg2[%c6_294, %c0_295, %c0_296] : memref<8x32x32xf32, #tpu.memory_space<vmem>>, vector<1x32x32xf32>
    %447 = vector.shape_cast %446 : vector<1x32x32xf32> to vector<32x32xf32>
    %cst_297 = arith.constant dense<0.000000e+00> : vector<2x32xf32>
    %448 = tpu.matmul %366, %447, %cst_297 {dimension_numbers = #tpu.dot_dimension_numbers<[1], [0], [0], [1], [0, 0, 1, 1], [], []>} : vector<2x32xf32>, vector<32x32xf32>, vector<2x32xf32> -> vector<2x32xf32>
    %c2_298 = arith.constant 2 : index
    %c0_299 = arith.constant 0 : index
    %c0_300 = arith.constant 0 : index
    %449 = vector.load %arg3[%c2_298, %c0_299, %c0_300] : memref<4x1x32xf32, #tpu.memory_space<vmem>>, vector<1x1x32xf32>
    %450 = vector.shape_cast %449 : vector<1x1x32xf32> to vector<1x32xf32>
    %451 = vector.broadcast %450 : vector<1x32xf32> to vector<2x32xf32>
    %452 = arith.addf %451, %448 : vector<2x32xf32>
    %c2_301 = arith.constant 2 : index
    %c0_302 = arith.constant 0 : index
    %c0_303 = arith.constant 0 : index
    %453 = vector.load %arg1[%c2_301, %c0_302, %c0_303] : memref<4x32x32xf32, #tpu.memory_space<vmem>>, vector<1x32x32xf32>
    %454 = vector.shape_cast %453 : vector<1x32x32xf32> to vector<32x32xf32>
    %cst_304 = arith.constant dense<0.000000e+00> : vector<2x32xf32>
    %455 = tpu.matmul %423, %454, %cst_304 {dimension_numbers = #tpu.dot_dimension_numbers<[1], [0], [0], [1], [0, 0, 1, 1], [], []>} : vector<2x32xf32>, vector<32x32xf32>, vector<2x32xf32> -> vector<2x32xf32>
    %456 = arith.addf %452, %455 : vector<2x32xf32>
    %c7_305 = arith.constant 7 : index
    %c0_306 = arith.constant 0 : index
    %c0_307 = arith.constant 0 : index
    %457 = vector.load %arg2[%c7_305, %c0_306, %c0_307] : memref<8x32x32xf32, #tpu.memory_space<vmem>>, vector<1x32x32xf32>
    %458 = vector.shape_cast %457 : vector<1x32x32xf32> to vector<32x32xf32>
    %cst_308 = arith.constant dense<0.000000e+00> : vector<2x32xf32>
    %459 = tpu.matmul %366, %458, %cst_308 {dimension_numbers = #tpu.dot_dimension_numbers<[1], [0], [0], [1], [0, 0, 1, 1], [], []>} : vector<2x32xf32>, vector<32x32xf32>, vector<2x32xf32> -> vector<2x32xf32>
    %c3_309 = arith.constant 3 : index
    %c0_310 = arith.constant 0 : index
    %c0_311 = arith.constant 0 : index
    %460 = vector.load %arg3[%c3_309, %c0_310, %c0_311] : memref<4x1x32xf32, #tpu.memory_space<vmem>>, vector<1x1x32xf32>
    %461 = vector.shape_cast %460 : vector<1x1x32xf32> to vector<1x32xf32>
    %462 = vector.broadcast %461 : vector<1x32xf32> to vector<2x32xf32>
    %463 = arith.addf %462, %459 : vector<2x32xf32>
    %c3_312 = arith.constant 3 : index
    %c0_313 = arith.constant 0 : index
    %c0_314 = arith.constant 0 : index
    %464 = vector.load %arg1[%c3_312, %c0_313, %c0_314] : memref<4x32x32xf32, #tpu.memory_space<vmem>>, vector<1x32x32xf32>
    %465 = vector.shape_cast %464 : vector<1x32x32xf32> to vector<32x32xf32>
    %cst_315 = arith.constant dense<0.000000e+00> : vector<2x32xf32>
    %466 = tpu.matmul %423, %465, %cst_315 {dimension_numbers = #tpu.dot_dimension_numbers<[1], [0], [0], [1], [0, 0, 1, 1], [], []>} : vector<2x32xf32>, vector<32x32xf32>, vector<2x32xf32> -> vector<2x32xf32>
    %467 = arith.addf %463, %466 : vector<2x32xf32>
    %468 = arith.negf %434 : vector<2x32xf32>
    %469 = math.exp %468 : vector<2x32xf32>
    %cst_316 = arith.constant 1.000000e+00 : f32
    %470 = vector.broadcast %cst_316 : f32 to vector<2x32xf32>
    %471 = arith.addf %470, %469 : vector<2x32xf32>
    %472 = arith.divf %470, %471 : vector<2x32xf32>
    %473 = arith.negf %445 : vector<2x32xf32>
    %474 = math.exp %473 : vector<2x32xf32>
    %cst_317 = arith.constant 1.000000e+00 : f32
    %475 = vector.broadcast %cst_317 : f32 to vector<2x32xf32>
    %476 = arith.addf %475, %474 : vector<2x32xf32>
    %477 = arith.divf %475, %476 : vector<2x32xf32>
    %478 = math.tanh %456 : vector<2x32xf32>
    %479 = arith.negf %467 : vector<2x32xf32>
    %480 = math.exp %479 : vector<2x32xf32>
    %cst_318 = arith.constant 1.000000e+00 : f32
    %481 = vector.broadcast %cst_318 : f32 to vector<2x32xf32>
    %482 = arith.addf %481, %480 : vector<2x32xf32>
    %483 = arith.divf %481, %482 : vector<2x32xf32>
    %484 = arith.mulf %477, %364 : vector<2x32xf32>
    %485 = arith.mulf %472, %478 : vector<2x32xf32>
    %486 = arith.addf %484, %485 : vector<2x32xf32>
    %487 = math.tanh %486 : vector<2x32xf32>
    %488 = arith.mulf %483, %487 : vector<2x32xf32>
    %c4_i32_319 = arith.constant 4 : i32
    %c0_320 = arith.constant 0 : index
    %c0_321 = arith.constant 0 : index
    %c0_322 = arith.constant 0 : index
    %489 = vector.load %arg2[%c0_320, %c0_321, %c0_322] : memref<8x32x32xf32, #tpu.memory_space<vmem>>, vector<1x32x32xf32>
    %490 = vector.shape_cast %489 : vector<1x32x32xf32> to vector<32x32xf32>
    %cst_323 = arith.constant dense<0.000000e+00> : vector<2x32xf32>
    %491 = tpu.matmul %423, %490, %cst_323 {dimension_numbers = #tpu.dot_dimension_numbers<[1], [0], [0], [1], [0, 0, 1, 1], [], []>} : vector<2x32xf32>, vector<32x32xf32>, vector<2x32xf32> -> vector<2x32xf32>
    %c4_i32_324 = arith.constant 4 : i32
    %492 = arith.muli %c4_i32_319, %c4_i32_324 : i32
    %c0_i32_325 = arith.constant 0 : i32
    %493 = arith.addi %492, %c0_i32_325 : i32
    %494 = arith.index_cast %493 : i32 to index
    %c0_326 = arith.constant 0 : index
    %c0_327 = arith.constant 0 : index
    %495 = vector.load %arg0[%494, %c0_326, %c0_327] : memref<32x2x32xf32, #tpu.memory_space<vmem>>, vector<1x2x32xf32>
    %496 = vector.shape_cast %495 : vector<1x2x32xf32> to vector<2x32xf32>
    %497 = arith.addf %496, %491 : vector<2x32xf32>
    %c1_328 = arith.constant 1 : index
    %c0_329 = arith.constant 0 : index
    %c0_330 = arith.constant 0 : index
    %498 = vector.load %arg2[%c1_328, %c0_329, %c0_330] : memref<8x32x32xf32, #tpu.memory_space<vmem>>, vector<1x32x32xf32>
    %499 = vector.shape_cast %498 : vector<1x32x32xf32> to vector<32x32xf32>
    %cst_331 = arith.constant dense<0.000000e+00> : vector<2x32xf32>
    %500 = tpu.matmul %423, %499, %cst_331 {dimension_numbers = #tpu.dot_dimension_numbers<[1], [0], [0], [1], [0, 0, 1, 1], [], []>} : vector<2x32xf32>, vector<32x32xf32>, vector<2x32xf32> -> vector<2x32xf32>
    %c4_i32_332 = arith.constant 4 : i32
    %501 = arith.muli %c4_i32_319, %c4_i32_332 : i32
    %c1_i32_333 = arith.constant 1 : i32
    %502 = arith.addi %501, %c1_i32_333 : i32
    %503 = arith.index_cast %502 : i32 to index
    %c0_334 = arith.constant 0 : index
    %c0_335 = arith.constant 0 : index
    %504 = vector.load %arg0[%503, %c0_334, %c0_335] : memref<32x2x32xf32, #tpu.memory_space<vmem>>, vector<1x2x32xf32>
    %505 = vector.shape_cast %504 : vector<1x2x32xf32> to vector<2x32xf32>
    %506 = arith.addf %505, %500 : vector<2x32xf32>
    %c2_336 = arith.constant 2 : index
    %c0_337 = arith.constant 0 : index
    %c0_338 = arith.constant 0 : index
    %507 = vector.load %arg2[%c2_336, %c0_337, %c0_338] : memref<8x32x32xf32, #tpu.memory_space<vmem>>, vector<1x32x32xf32>
    %508 = vector.shape_cast %507 : vector<1x32x32xf32> to vector<32x32xf32>
    %cst_339 = arith.constant dense<0.000000e+00> : vector<2x32xf32>
    %509 = tpu.matmul %423, %508, %cst_339 {dimension_numbers = #tpu.dot_dimension_numbers<[1], [0], [0], [1], [0, 0, 1, 1], [], []>} : vector<2x32xf32>, vector<32x32xf32>, vector<2x32xf32> -> vector<2x32xf32>
    %c4_i32_340 = arith.constant 4 : i32
    %510 = arith.muli %c4_i32_319, %c4_i32_340 : i32
    %c2_i32_341 = arith.constant 2 : i32
    %511 = arith.addi %510, %c2_i32_341 : i32
    %512 = arith.index_cast %511 : i32 to index
    %c0_342 = arith.constant 0 : index
    %c0_343 = arith.constant 0 : index
    %513 = vector.load %arg0[%512, %c0_342, %c0_343] : memref<32x2x32xf32, #tpu.memory_space<vmem>>, vector<1x2x32xf32>
    %514 = vector.shape_cast %513 : vector<1x2x32xf32> to vector<2x32xf32>
    %515 = arith.addf %514, %509 : vector<2x32xf32>
    %c3_344 = arith.constant 3 : index
    %c0_345 = arith.constant 0 : index
    %c0_346 = arith.constant 0 : index
    %516 = vector.load %arg2[%c3_344, %c0_345, %c0_346] : memref<8x32x32xf32, #tpu.memory_space<vmem>>, vector<1x32x32xf32>
    %517 = vector.shape_cast %516 : vector<1x32x32xf32> to vector<32x32xf32>
    %cst_347 = arith.constant dense<0.000000e+00> : vector<2x32xf32>
    %518 = tpu.matmul %423, %517, %cst_347 {dimension_numbers = #tpu.dot_dimension_numbers<[1], [0], [0], [1], [0, 0, 1, 1], [], []>} : vector<2x32xf32>, vector<32x32xf32>, vector<2x32xf32> -> vector<2x32xf32>
    %c4_i32_348 = arith.constant 4 : i32
    %519 = arith.muli %c4_i32_319, %c4_i32_348 : i32
    %c3_i32_349 = arith.constant 3 : i32
    %520 = arith.addi %519, %c3_i32_349 : i32
    %521 = arith.index_cast %520 : i32 to index
    %c0_350 = arith.constant 0 : index
    %c0_351 = arith.constant 0 : index
    %522 = vector.load %arg0[%521, %c0_350, %c0_351] : memref<32x2x32xf32, #tpu.memory_space<vmem>>, vector<1x2x32xf32>
    %523 = vector.shape_cast %522 : vector<1x2x32xf32> to vector<2x32xf32>
    %524 = arith.addf %523, %518 : vector<2x32xf32>
    %525 = arith.negf %497 : vector<2x32xf32>
    %526 = math.exp %525 : vector<2x32xf32>
    %cst_352 = arith.constant 1.000000e+00 : f32
    %527 = vector.broadcast %cst_352 : f32 to vector<2x32xf32>
    %528 = arith.addf %527, %526 : vector<2x32xf32>
    %529 = arith.divf %527, %528 : vector<2x32xf32>
    %530 = arith.negf %506 : vector<2x32xf32>
    %531 = math.exp %530 : vector<2x32xf32>
    %cst_353 = arith.constant 1.000000e+00 : f32
    %532 = vector.broadcast %cst_353 : f32 to vector<2x32xf32>
    %533 = arith.addf %532, %531 : vector<2x32xf32>
    %534 = arith.divf %532, %533 : vector<2x32xf32>
    %535 = math.tanh %515 : vector<2x32xf32>
    %536 = arith.negf %524 : vector<2x32xf32>
    %537 = math.exp %536 : vector<2x32xf32>
    %cst_354 = arith.constant 1.000000e+00 : f32
    %538 = vector.broadcast %cst_354 : f32 to vector<2x32xf32>
    %539 = arith.addf %538, %537 : vector<2x32xf32>
    %540 = arith.divf %538, %539 : vector<2x32xf32>
    %541 = arith.mulf %534, %421 : vector<2x32xf32>
    %542 = arith.mulf %529, %535 : vector<2x32xf32>
    %543 = arith.addf %541, %542 : vector<2x32xf32>
    %544 = math.tanh %543 : vector<2x32xf32>
    %545 = arith.mulf %540, %544 : vector<2x32xf32>
    %c4_355 = arith.constant 4 : index
    %c0_356 = arith.constant 0 : index
    %c0_357 = arith.constant 0 : index
    %546 = vector.load %arg2[%c4_355, %c0_356, %c0_357] : memref<8x32x32xf32, #tpu.memory_space<vmem>>, vector<1x32x32xf32>
    %547 = vector.shape_cast %546 : vector<1x32x32xf32> to vector<32x32xf32>
    %cst_358 = arith.constant dense<0.000000e+00> : vector<2x32xf32>
    %548 = tpu.matmul %488, %547, %cst_358 {dimension_numbers = #tpu.dot_dimension_numbers<[1], [0], [0], [1], [0, 0, 1, 1], [], []>} : vector<2x32xf32>, vector<32x32xf32>, vector<2x32xf32> -> vector<2x32xf32>
    %c0_359 = arith.constant 0 : index
    %c0_360 = arith.constant 0 : index
    %c0_361 = arith.constant 0 : index
    %549 = vector.load %arg3[%c0_359, %c0_360, %c0_361] : memref<4x1x32xf32, #tpu.memory_space<vmem>>, vector<1x1x32xf32>
    %550 = vector.shape_cast %549 : vector<1x1x32xf32> to vector<1x32xf32>
    %551 = vector.broadcast %550 : vector<1x32xf32> to vector<2x32xf32>
    %552 = arith.addf %551, %548 : vector<2x32xf32>
    %c0_362 = arith.constant 0 : index
    %c0_363 = arith.constant 0 : index
    %c0_364 = arith.constant 0 : index
    %553 = vector.load %arg1[%c0_362, %c0_363, %c0_364] : memref<4x32x32xf32, #tpu.memory_space<vmem>>, vector<1x32x32xf32>
    %554 = vector.shape_cast %553 : vector<1x32x32xf32> to vector<32x32xf32>
    %cst_365 = arith.constant dense<0.000000e+00> : vector<2x32xf32>
    %555 = tpu.matmul %545, %554, %cst_365 {dimension_numbers = #tpu.dot_dimension_numbers<[1], [0], [0], [1], [0, 0, 1, 1], [], []>} : vector<2x32xf32>, vector<32x32xf32>, vector<2x32xf32> -> vector<2x32xf32>
    %556 = arith.addf %552, %555 : vector<2x32xf32>
    %c5_366 = arith.constant 5 : index
    %c0_367 = arith.constant 0 : index
    %c0_368 = arith.constant 0 : index
    %557 = vector.load %arg2[%c5_366, %c0_367, %c0_368] : memref<8x32x32xf32, #tpu.memory_space<vmem>>, vector<1x32x32xf32>
    %558 = vector.shape_cast %557 : vector<1x32x32xf32> to vector<32x32xf32>
    %cst_369 = arith.constant dense<0.000000e+00> : vector<2x32xf32>
    %559 = tpu.matmul %488, %558, %cst_369 {dimension_numbers = #tpu.dot_dimension_numbers<[1], [0], [0], [1], [0, 0, 1, 1], [], []>} : vector<2x32xf32>, vector<32x32xf32>, vector<2x32xf32> -> vector<2x32xf32>
    %c1_370 = arith.constant 1 : index
    %c0_371 = arith.constant 0 : index
    %c0_372 = arith.constant 0 : index
    %560 = vector.load %arg3[%c1_370, %c0_371, %c0_372] : memref<4x1x32xf32, #tpu.memory_space<vmem>>, vector<1x1x32xf32>
    %561 = vector.shape_cast %560 : vector<1x1x32xf32> to vector<1x32xf32>
    %562 = vector.broadcast %561 : vector<1x32xf32> to vector<2x32xf32>
    %563 = arith.addf %562, %559 : vector<2x32xf32>
    %c1_373 = arith.constant 1 : index
    %c0_374 = arith.constant 0 : index
    %c0_375 = arith.constant 0 : index
    %564 = vector.load %arg1[%c1_373, %c0_374, %c0_375] : memref<4x32x32xf32, #tpu.memory_space<vmem>>, vector<1x32x32xf32>
    %565 = vector.shape_cast %564 : vector<1x32x32xf32> to vector<32x32xf32>
    %cst_376 = arith.constant dense<0.000000e+00> : vector<2x32xf32>
    %566 = tpu.matmul %545, %565, %cst_376 {dimension_numbers = #tpu.dot_dimension_numbers<[1], [0], [0], [1], [0, 0, 1, 1], [], []>} : vector<2x32xf32>, vector<32x32xf32>, vector<2x32xf32> -> vector<2x32xf32>
    %567 = arith.addf %563, %566 : vector<2x32xf32>
    %c6_377 = arith.constant 6 : index
    %c0_378 = arith.constant 0 : index
    %c0_379 = arith.constant 0 : index
    %568 = vector.load %arg2[%c6_377, %c0_378, %c0_379] : memref<8x32x32xf32, #tpu.memory_space<vmem>>, vector<1x32x32xf32>
    %569 = vector.shape_cast %568 : vector<1x32x32xf32> to vector<32x32xf32>
    %cst_380 = arith.constant dense<0.000000e+00> : vector<2x32xf32>
    %570 = tpu.matmul %488, %569, %cst_380 {dimension_numbers = #tpu.dot_dimension_numbers<[1], [0], [0], [1], [0, 0, 1, 1], [], []>} : vector<2x32xf32>, vector<32x32xf32>, vector<2x32xf32> -> vector<2x32xf32>
    %c2_381 = arith.constant 2 : index
    %c0_382 = arith.constant 0 : index
    %c0_383 = arith.constant 0 : index
    %571 = vector.load %arg3[%c2_381, %c0_382, %c0_383] : memref<4x1x32xf32, #tpu.memory_space<vmem>>, vector<1x1x32xf32>
    %572 = vector.shape_cast %571 : vector<1x1x32xf32> to vector<1x32xf32>
    %573 = vector.broadcast %572 : vector<1x32xf32> to vector<2x32xf32>
    %574 = arith.addf %573, %570 : vector<2x32xf32>
    %c2_384 = arith.constant 2 : index
    %c0_385 = arith.constant 0 : index
    %c0_386 = arith.constant 0 : index
    %575 = vector.load %arg1[%c2_384, %c0_385, %c0_386] : memref<4x32x32xf32, #tpu.memory_space<vmem>>, vector<1x32x32xf32>
    %576 = vector.shape_cast %575 : vector<1x32x32xf32> to vector<32x32xf32>
    %cst_387 = arith.constant dense<0.000000e+00> : vector<2x32xf32>
    %577 = tpu.matmul %545, %576, %cst_387 {dimension_numbers = #tpu.dot_dimension_numbers<[1], [0], [0], [1], [0, 0, 1, 1], [], []>} : vector<2x32xf32>, vector<32x32xf32>, vector<2x32xf32> -> vector<2x32xf32>
    %578 = arith.addf %574, %577 : vector<2x32xf32>
    %c7_388 = arith.constant 7 : index
    %c0_389 = arith.constant 0 : index
    %c0_390 = arith.constant 0 : index
    %579 = vector.load %arg2[%c7_388, %c0_389, %c0_390] : memref<8x32x32xf32, #tpu.memory_space<vmem>>, vector<1x32x32xf32>
    %580 = vector.shape_cast %579 : vector<1x32x32xf32> to vector<32x32xf32>
    %cst_391 = arith.constant dense<0.000000e+00> : vector<2x32xf32>
    %581 = tpu.matmul %488, %580, %cst_391 {dimension_numbers = #tpu.dot_dimension_numbers<[1], [0], [0], [1], [0, 0, 1, 1], [], []>} : vector<2x32xf32>, vector<32x32xf32>, vector<2x32xf32> -> vector<2x32xf32>
    %c3_392 = arith.constant 3 : index
    %c0_393 = arith.constant 0 : index
    %c0_394 = arith.constant 0 : index
    %582 = vector.load %arg3[%c3_392, %c0_393, %c0_394] : memref<4x1x32xf32, #tpu.memory_space<vmem>>, vector<1x1x32xf32>
    %583 = vector.shape_cast %582 : vector<1x1x32xf32> to vector<1x32xf32>
    %584 = vector.broadcast %583 : vector<1x32xf32> to vector<2x32xf32>
    %585 = arith.addf %584, %581 : vector<2x32xf32>
    %c3_395 = arith.constant 3 : index
    %c0_396 = arith.constant 0 : index
    %c0_397 = arith.constant 0 : index
    %586 = vector.load %arg1[%c3_395, %c0_396, %c0_397] : memref<4x32x32xf32, #tpu.memory_space<vmem>>, vector<1x32x32xf32>
    %587 = vector.shape_cast %586 : vector<1x32x32xf32> to vector<32x32xf32>
    %cst_398 = arith.constant dense<0.000000e+00> : vector<2x32xf32>
    %588 = tpu.matmul %545, %587, %cst_398 {dimension_numbers = #tpu.dot_dimension_numbers<[1], [0], [0], [1], [0, 0, 1, 1], [], []>} : vector<2x32xf32>, vector<32x32xf32>, vector<2x32xf32> -> vector<2x32xf32>
    %589 = arith.addf %585, %588 : vector<2x32xf32>
    %590 = arith.negf %556 : vector<2x32xf32>
    %591 = math.exp %590 : vector<2x32xf32>
    %cst_399 = arith.constant 1.000000e+00 : f32
    %592 = vector.broadcast %cst_399 : f32 to vector<2x32xf32>
    %593 = arith.addf %592, %591 : vector<2x32xf32>
    %594 = arith.divf %592, %593 : vector<2x32xf32>
    %595 = arith.negf %567 : vector<2x32xf32>
    %596 = math.exp %595 : vector<2x32xf32>
    %cst_400 = arith.constant 1.000000e+00 : f32
    %597 = vector.broadcast %cst_400 : f32 to vector<2x32xf32>
    %598 = arith.addf %597, %596 : vector<2x32xf32>
    %599 = arith.divf %597, %598 : vector<2x32xf32>
    %600 = math.tanh %578 : vector<2x32xf32>
    %601 = arith.negf %589 : vector<2x32xf32>
    %602 = math.exp %601 : vector<2x32xf32>
    %cst_401 = arith.constant 1.000000e+00 : f32
    %603 = vector.broadcast %cst_401 : f32 to vector<2x32xf32>
    %604 = arith.addf %603, %602 : vector<2x32xf32>
    %605 = arith.divf %603, %604 : vector<2x32xf32>
    %606 = arith.mulf %599, %486 : vector<2x32xf32>
    %607 = arith.mulf %594, %600 : vector<2x32xf32>
    %608 = arith.addf %606, %607 : vector<2x32xf32>
    %609 = math.tanh %608 : vector<2x32xf32>
    %610 = arith.mulf %605, %609 : vector<2x32xf32>
    %c5_i32 = arith.constant 5 : i32
    %c0_402 = arith.constant 0 : index
    %c0_403 = arith.constant 0 : index
    %c0_404 = arith.constant 0 : index
    %611 = vector.load %arg2[%c0_402, %c0_403, %c0_404] : memref<8x32x32xf32, #tpu.memory_space<vmem>>, vector<1x32x32xf32>
    %612 = vector.shape_cast %611 : vector<1x32x32xf32> to vector<32x32xf32>
    %cst_405 = arith.constant dense<0.000000e+00> : vector<2x32xf32>
    %613 = tpu.matmul %545, %612, %cst_405 {dimension_numbers = #tpu.dot_dimension_numbers<[1], [0], [0], [1], [0, 0, 1, 1], [], []>} : vector<2x32xf32>, vector<32x32xf32>, vector<2x32xf32> -> vector<2x32xf32>
    %c4_i32_406 = arith.constant 4 : i32
    %614 = arith.muli %c5_i32, %c4_i32_406 : i32
    %c0_i32_407 = arith.constant 0 : i32
    %615 = arith.addi %614, %c0_i32_407 : i32
    %616 = arith.index_cast %615 : i32 to index
    %c0_408 = arith.constant 0 : index
    %c0_409 = arith.constant 0 : index
    %617 = vector.load %arg0[%616, %c0_408, %c0_409] : memref<32x2x32xf32, #tpu.memory_space<vmem>>, vector<1x2x32xf32>
    %618 = vector.shape_cast %617 : vector<1x2x32xf32> to vector<2x32xf32>
    %619 = arith.addf %618, %613 : vector<2x32xf32>
    %c1_410 = arith.constant 1 : index
    %c0_411 = arith.constant 0 : index
    %c0_412 = arith.constant 0 : index
    %620 = vector.load %arg2[%c1_410, %c0_411, %c0_412] : memref<8x32x32xf32, #tpu.memory_space<vmem>>, vector<1x32x32xf32>
    %621 = vector.shape_cast %620 : vector<1x32x32xf32> to vector<32x32xf32>
    %cst_413 = arith.constant dense<0.000000e+00> : vector<2x32xf32>
    %622 = tpu.matmul %545, %621, %cst_413 {dimension_numbers = #tpu.dot_dimension_numbers<[1], [0], [0], [1], [0, 0, 1, 1], [], []>} : vector<2x32xf32>, vector<32x32xf32>, vector<2x32xf32> -> vector<2x32xf32>
    %c4_i32_414 = arith.constant 4 : i32
    %623 = arith.muli %c5_i32, %c4_i32_414 : i32
    %c1_i32_415 = arith.constant 1 : i32
    %624 = arith.addi %623, %c1_i32_415 : i32
    %625 = arith.index_cast %624 : i32 to index
    %c0_416 = arith.constant 0 : index
    %c0_417 = arith.constant 0 : index
    %626 = vector.load %arg0[%625, %c0_416, %c0_417] : memref<32x2x32xf32, #tpu.memory_space<vmem>>, vector<1x2x32xf32>
    %627 = vector.shape_cast %626 : vector<1x2x32xf32> to vector<2x32xf32>
    %628 = arith.addf %627, %622 : vector<2x32xf32>
    %c2_418 = arith.constant 2 : index
    %c0_419 = arith.constant 0 : index
    %c0_420 = arith.constant 0 : index
    %629 = vector.load %arg2[%c2_418, %c0_419, %c0_420] : memref<8x32x32xf32, #tpu.memory_space<vmem>>, vector<1x32x32xf32>
    %630 = vector.shape_cast %629 : vector<1x32x32xf32> to vector<32x32xf32>
    %cst_421 = arith.constant dense<0.000000e+00> : vector<2x32xf32>
    %631 = tpu.matmul %545, %630, %cst_421 {dimension_numbers = #tpu.dot_dimension_numbers<[1], [0], [0], [1], [0, 0, 1, 1], [], []>} : vector<2x32xf32>, vector<32x32xf32>, vector<2x32xf32> -> vector<2x32xf32>
    %c4_i32_422 = arith.constant 4 : i32
    %632 = arith.muli %c5_i32, %c4_i32_422 : i32
    %c2_i32_423 = arith.constant 2 : i32
    %633 = arith.addi %632, %c2_i32_423 : i32
    %634 = arith.index_cast %633 : i32 to index
    %c0_424 = arith.constant 0 : index
    %c0_425 = arith.constant 0 : index
    %635 = vector.load %arg0[%634, %c0_424, %c0_425] : memref<32x2x32xf32, #tpu.memory_space<vmem>>, vector<1x2x32xf32>
    %636 = vector.shape_cast %635 : vector<1x2x32xf32> to vector<2x32xf32>
    %637 = arith.addf %636, %631 : vector<2x32xf32>
    %c3_426 = arith.constant 3 : index
    %c0_427 = arith.constant 0 : index
    %c0_428 = arith.constant 0 : index
    %638 = vector.load %arg2[%c3_426, %c0_427, %c0_428] : memref<8x32x32xf32, #tpu.memory_space<vmem>>, vector<1x32x32xf32>
    %639 = vector.shape_cast %638 : vector<1x32x32xf32> to vector<32x32xf32>
    %cst_429 = arith.constant dense<0.000000e+00> : vector<2x32xf32>
    %640 = tpu.matmul %545, %639, %cst_429 {dimension_numbers = #tpu.dot_dimension_numbers<[1], [0], [0], [1], [0, 0, 1, 1], [], []>} : vector<2x32xf32>, vector<32x32xf32>, vector<2x32xf32> -> vector<2x32xf32>
    %c4_i32_430 = arith.constant 4 : i32
    %641 = arith.muli %c5_i32, %c4_i32_430 : i32
    %c3_i32_431 = arith.constant 3 : i32
    %642 = arith.addi %641, %c3_i32_431 : i32
    %643 = arith.index_cast %642 : i32 to index
    %c0_432 = arith.constant 0 : index
    %c0_433 = arith.constant 0 : index
    %644 = vector.load %arg0[%643, %c0_432, %c0_433] : memref<32x2x32xf32, #tpu.memory_space<vmem>>, vector<1x2x32xf32>
    %645 = vector.shape_cast %644 : vector<1x2x32xf32> to vector<2x32xf32>
    %646 = arith.addf %645, %640 : vector<2x32xf32>
    %647 = arith.negf %619 : vector<2x32xf32>
    %648 = math.exp %647 : vector<2x32xf32>
    %cst_434 = arith.constant 1.000000e+00 : f32
    %649 = vector.broadcast %cst_434 : f32 to vector<2x32xf32>
    %650 = arith.addf %649, %648 : vector<2x32xf32>
    %651 = arith.divf %649, %650 : vector<2x32xf32>
    %652 = arith.negf %628 : vector<2x32xf32>
    %653 = math.exp %652 : vector<2x32xf32>
    %cst_435 = arith.constant 1.000000e+00 : f32
    %654 = vector.broadcast %cst_435 : f32 to vector<2x32xf32>
    %655 = arith.addf %654, %653 : vector<2x32xf32>
    %656 = arith.divf %654, %655 : vector<2x32xf32>
    %657 = math.tanh %637 : vector<2x32xf32>
    %658 = arith.negf %646 : vector<2x32xf32>
    %659 = math.exp %658 : vector<2x32xf32>
    %cst_436 = arith.constant 1.000000e+00 : f32
    %660 = vector.broadcast %cst_436 : f32 to vector<2x32xf32>
    %661 = arith.addf %660, %659 : vector<2x32xf32>
    %662 = arith.divf %660, %661 : vector<2x32xf32>
    %663 = arith.mulf %656, %543 : vector<2x32xf32>
    %664 = arith.mulf %651, %657 : vector<2x32xf32>
    %665 = arith.addf %663, %664 : vector<2x32xf32>
    %666 = math.tanh %665 : vector<2x32xf32>
    %667 = arith.mulf %662, %666 : vector<2x32xf32>
    %c4_437 = arith.constant 4 : index
    %c0_438 = arith.constant 0 : index
    %c0_439 = arith.constant 0 : index
    %668 = vector.load %arg2[%c4_437, %c0_438, %c0_439] : memref<8x32x32xf32, #tpu.memory_space<vmem>>, vector<1x32x32xf32>
    %669 = vector.shape_cast %668 : vector<1x32x32xf32> to vector<32x32xf32>
    %cst_440 = arith.constant dense<0.000000e+00> : vector<2x32xf32>
    %670 = tpu.matmul %610, %669, %cst_440 {dimension_numbers = #tpu.dot_dimension_numbers<[1], [0], [0], [1], [0, 0, 1, 1], [], []>} : vector<2x32xf32>, vector<32x32xf32>, vector<2x32xf32> -> vector<2x32xf32>
    %c0_441 = arith.constant 0 : index
    %c0_442 = arith.constant 0 : index
    %c0_443 = arith.constant 0 : index
    %671 = vector.load %arg3[%c0_441, %c0_442, %c0_443] : memref<4x1x32xf32, #tpu.memory_space<vmem>>, vector<1x1x32xf32>
    %672 = vector.shape_cast %671 : vector<1x1x32xf32> to vector<1x32xf32>
    %673 = vector.broadcast %672 : vector<1x32xf32> to vector<2x32xf32>
    %674 = arith.addf %673, %670 : vector<2x32xf32>
    %c0_444 = arith.constant 0 : index
    %c0_445 = arith.constant 0 : index
    %c0_446 = arith.constant 0 : index
    %675 = vector.load %arg1[%c0_444, %c0_445, %c0_446] : memref<4x32x32xf32, #tpu.memory_space<vmem>>, vector<1x32x32xf32>
    %676 = vector.shape_cast %675 : vector<1x32x32xf32> to vector<32x32xf32>
    %cst_447 = arith.constant dense<0.000000e+00> : vector<2x32xf32>
    %677 = tpu.matmul %667, %676, %cst_447 {dimension_numbers = #tpu.dot_dimension_numbers<[1], [0], [0], [1], [0, 0, 1, 1], [], []>} : vector<2x32xf32>, vector<32x32xf32>, vector<2x32xf32> -> vector<2x32xf32>
    %678 = arith.addf %674, %677 : vector<2x32xf32>
    %c5_448 = arith.constant 5 : index
    %c0_449 = arith.constant 0 : index
    %c0_450 = arith.constant 0 : index
    %679 = vector.load %arg2[%c5_448, %c0_449, %c0_450] : memref<8x32x32xf32, #tpu.memory_space<vmem>>, vector<1x32x32xf32>
    %680 = vector.shape_cast %679 : vector<1x32x32xf32> to vector<32x32xf32>
    %cst_451 = arith.constant dense<0.000000e+00> : vector<2x32xf32>
    %681 = tpu.matmul %610, %680, %cst_451 {dimension_numbers = #tpu.dot_dimension_numbers<[1], [0], [0], [1], [0, 0, 1, 1], [], []>} : vector<2x32xf32>, vector<32x32xf32>, vector<2x32xf32> -> vector<2x32xf32>
    %c1_452 = arith.constant 1 : index
    %c0_453 = arith.constant 0 : index
    %c0_454 = arith.constant 0 : index
    %682 = vector.load %arg3[%c1_452, %c0_453, %c0_454] : memref<4x1x32xf32, #tpu.memory_space<vmem>>, vector<1x1x32xf32>
    %683 = vector.shape_cast %682 : vector<1x1x32xf32> to vector<1x32xf32>
    %684 = vector.broadcast %683 : vector<1x32xf32> to vector<2x32xf32>
    %685 = arith.addf %684, %681 : vector<2x32xf32>
    %c1_455 = arith.constant 1 : index
    %c0_456 = arith.constant 0 : index
    %c0_457 = arith.constant 0 : index
    %686 = vector.load %arg1[%c1_455, %c0_456, %c0_457] : memref<4x32x32xf32, #tpu.memory_space<vmem>>, vector<1x32x32xf32>
    %687 = vector.shape_cast %686 : vector<1x32x32xf32> to vector<32x32xf32>
    %cst_458 = arith.constant dense<0.000000e+00> : vector<2x32xf32>
    %688 = tpu.matmul %667, %687, %cst_458 {dimension_numbers = #tpu.dot_dimension_numbers<[1], [0], [0], [1], [0, 0, 1, 1], [], []>} : vector<2x32xf32>, vector<32x32xf32>, vector<2x32xf32> -> vector<2x32xf32>
    %689 = arith.addf %685, %688 : vector<2x32xf32>
    %c6_459 = arith.constant 6 : index
    %c0_460 = arith.constant 0 : index
    %c0_461 = arith.constant 0 : index
    %690 = vector.load %arg2[%c6_459, %c0_460, %c0_461] : memref<8x32x32xf32, #tpu.memory_space<vmem>>, vector<1x32x32xf32>
    %691 = vector.shape_cast %690 : vector<1x32x32xf32> to vector<32x32xf32>
    %cst_462 = arith.constant dense<0.000000e+00> : vector<2x32xf32>
    %692 = tpu.matmul %610, %691, %cst_462 {dimension_numbers = #tpu.dot_dimension_numbers<[1], [0], [0], [1], [0, 0, 1, 1], [], []>} : vector<2x32xf32>, vector<32x32xf32>, vector<2x32xf32> -> vector<2x32xf32>
    %c2_463 = arith.constant 2 : index
    %c0_464 = arith.constant 0 : index
    %c0_465 = arith.constant 0 : index
    %693 = vector.load %arg3[%c2_463, %c0_464, %c0_465] : memref<4x1x32xf32, #tpu.memory_space<vmem>>, vector<1x1x32xf32>
    %694 = vector.shape_cast %693 : vector<1x1x32xf32> to vector<1x32xf32>
    %695 = vector.broadcast %694 : vector<1x32xf32> to vector<2x32xf32>
    %696 = arith.addf %695, %692 : vector<2x32xf32>
    %c2_466 = arith.constant 2 : index
    %c0_467 = arith.constant 0 : index
    %c0_468 = arith.constant 0 : index
    %697 = vector.load %arg1[%c2_466, %c0_467, %c0_468] : memref<4x32x32xf32, #tpu.memory_space<vmem>>, vector<1x32x32xf32>
    %698 = vector.shape_cast %697 : vector<1x32x32xf32> to vector<32x32xf32>
    %cst_469 = arith.constant dense<0.000000e+00> : vector<2x32xf32>
    %699 = tpu.matmul %667, %698, %cst_469 {dimension_numbers = #tpu.dot_dimension_numbers<[1], [0], [0], [1], [0, 0, 1, 1], [], []>} : vector<2x32xf32>, vector<32x32xf32>, vector<2x32xf32> -> vector<2x32xf32>
    %700 = arith.addf %696, %699 : vector<2x32xf32>
    %c7_470 = arith.constant 7 : index
    %c0_471 = arith.constant 0 : index
    %c0_472 = arith.constant 0 : index
    %701 = vector.load %arg2[%c7_470, %c0_471, %c0_472] : memref<8x32x32xf32, #tpu.memory_space<vmem>>, vector<1x32x32xf32>
    %702 = vector.shape_cast %701 : vector<1x32x32xf32> to vector<32x32xf32>
    %cst_473 = arith.constant dense<0.000000e+00> : vector<2x32xf32>
    %703 = tpu.matmul %610, %702, %cst_473 {dimension_numbers = #tpu.dot_dimension_numbers<[1], [0], [0], [1], [0, 0, 1, 1], [], []>} : vector<2x32xf32>, vector<32x32xf32>, vector<2x32xf32> -> vector<2x32xf32>
    %c3_474 = arith.constant 3 : index
    %c0_475 = arith.constant 0 : index
    %c0_476 = arith.constant 0 : index
    %704 = vector.load %arg3[%c3_474, %c0_475, %c0_476] : memref<4x1x32xf32, #tpu.memory_space<vmem>>, vector<1x1x32xf32>
    %705 = vector.shape_cast %704 : vector<1x1x32xf32> to vector<1x32xf32>
    %706 = vector.broadcast %705 : vector<1x32xf32> to vector<2x32xf32>
    %707 = arith.addf %706, %703 : vector<2x32xf32>
    %c3_477 = arith.constant 3 : index
    %c0_478 = arith.constant 0 : index
    %c0_479 = arith.constant 0 : index
    %708 = vector.load %arg1[%c3_477, %c0_478, %c0_479] : memref<4x32x32xf32, #tpu.memory_space<vmem>>, vector<1x32x32xf32>
    %709 = vector.shape_cast %708 : vector<1x32x32xf32> to vector<32x32xf32>
    %cst_480 = arith.constant dense<0.000000e+00> : vector<2x32xf32>
    %710 = tpu.matmul %667, %709, %cst_480 {dimension_numbers = #tpu.dot_dimension_numbers<[1], [0], [0], [1], [0, 0, 1, 1], [], []>} : vector<2x32xf32>, vector<32x32xf32>, vector<2x32xf32> -> vector<2x32xf32>
    %711 = arith.addf %707, %710 : vector<2x32xf32>
    %712 = arith.negf %678 : vector<2x32xf32>
    %713 = math.exp %712 : vector<2x32xf32>
    %cst_481 = arith.constant 1.000000e+00 : f32
    %714 = vector.broadcast %cst_481 : f32 to vector<2x32xf32>
    %715 = arith.addf %714, %713 : vector<2x32xf32>
    %716 = arith.divf %714, %715 : vector<2x32xf32>
    %717 = arith.negf %689 : vector<2x32xf32>
    %718 = math.exp %717 : vector<2x32xf32>
    %cst_482 = arith.constant 1.000000e+00 : f32
    %719 = vector.broadcast %cst_482 : f32 to vector<2x32xf32>
    %720 = arith.addf %719, %718 : vector<2x32xf32>
    %721 = arith.divf %719, %720 : vector<2x32xf32>
    %722 = math.tanh %700 : vector<2x32xf32>
    %723 = arith.negf %711 : vector<2x32xf32>
    %724 = math.exp %723 : vector<2x32xf32>
    %cst_483 = arith.constant 1.000000e+00 : f32
    %725 = vector.broadcast %cst_483 : f32 to vector<2x32xf32>
    %726 = arith.addf %725, %724 : vector<2x32xf32>
    %727 = arith.divf %725, %726 : vector<2x32xf32>
    %728 = arith.mulf %721, %608 : vector<2x32xf32>
    %729 = arith.mulf %716, %722 : vector<2x32xf32>
    %730 = arith.addf %728, %729 : vector<2x32xf32>
    %731 = math.tanh %730 : vector<2x32xf32>
    %732 = arith.mulf %727, %731 : vector<2x32xf32>
    %c6_i32 = arith.constant 6 : i32
    %c0_484 = arith.constant 0 : index
    %c0_485 = arith.constant 0 : index
    %c0_486 = arith.constant 0 : index
    %733 = vector.load %arg2[%c0_484, %c0_485, %c0_486] : memref<8x32x32xf32, #tpu.memory_space<vmem>>, vector<1x32x32xf32>
    %734 = vector.shape_cast %733 : vector<1x32x32xf32> to vector<32x32xf32>
    %cst_487 = arith.constant dense<0.000000e+00> : vector<2x32xf32>
    %735 = tpu.matmul %667, %734, %cst_487 {dimension_numbers = #tpu.dot_dimension_numbers<[1], [0], [0], [1], [0, 0, 1, 1], [], []>} : vector<2x32xf32>, vector<32x32xf32>, vector<2x32xf32> -> vector<2x32xf32>
    %c4_i32_488 = arith.constant 4 : i32
    %736 = arith.muli %c6_i32, %c4_i32_488 : i32
    %c0_i32_489 = arith.constant 0 : i32
    %737 = arith.addi %736, %c0_i32_489 : i32
    %738 = arith.index_cast %737 : i32 to index
    %c0_490 = arith.constant 0 : index
    %c0_491 = arith.constant 0 : index
    %739 = vector.load %arg0[%738, %c0_490, %c0_491] : memref<32x2x32xf32, #tpu.memory_space<vmem>>, vector<1x2x32xf32>
    %740 = vector.shape_cast %739 : vector<1x2x32xf32> to vector<2x32xf32>
    %741 = arith.addf %740, %735 : vector<2x32xf32>
    %c1_492 = arith.constant 1 : index
    %c0_493 = arith.constant 0 : index
    %c0_494 = arith.constant 0 : index
    %742 = vector.load %arg2[%c1_492, %c0_493, %c0_494] : memref<8x32x32xf32, #tpu.memory_space<vmem>>, vector<1x32x32xf32>
    %743 = vector.shape_cast %742 : vector<1x32x32xf32> to vector<32x32xf32>
    %cst_495 = arith.constant dense<0.000000e+00> : vector<2x32xf32>
    %744 = tpu.matmul %667, %743, %cst_495 {dimension_numbers = #tpu.dot_dimension_numbers<[1], [0], [0], [1], [0, 0, 1, 1], [], []>} : vector<2x32xf32>, vector<32x32xf32>, vector<2x32xf32> -> vector<2x32xf32>
    %c4_i32_496 = arith.constant 4 : i32
    %745 = arith.muli %c6_i32, %c4_i32_496 : i32
    %c1_i32_497 = arith.constant 1 : i32
    %746 = arith.addi %745, %c1_i32_497 : i32
    %747 = arith.index_cast %746 : i32 to index
    %c0_498 = arith.constant 0 : index
    %c0_499 = arith.constant 0 : index
    %748 = vector.load %arg0[%747, %c0_498, %c0_499] : memref<32x2x32xf32, #tpu.memory_space<vmem>>, vector<1x2x32xf32>
    %749 = vector.shape_cast %748 : vector<1x2x32xf32> to vector<2x32xf32>
    %750 = arith.addf %749, %744 : vector<2x32xf32>
    %c2_500 = arith.constant 2 : index
    %c0_501 = arith.constant 0 : index
    %c0_502 = arith.constant 0 : index
    %751 = vector.load %arg2[%c2_500, %c0_501, %c0_502] : memref<8x32x32xf32, #tpu.memory_space<vmem>>, vector<1x32x32xf32>
    %752 = vector.shape_cast %751 : vector<1x32x32xf32> to vector<32x32xf32>
    %cst_503 = arith.constant dense<0.000000e+00> : vector<2x32xf32>
    %753 = tpu.matmul %667, %752, %cst_503 {dimension_numbers = #tpu.dot_dimension_numbers<[1], [0], [0], [1], [0, 0, 1, 1], [], []>} : vector<2x32xf32>, vector<32x32xf32>, vector<2x32xf32> -> vector<2x32xf32>
    %c4_i32_504 = arith.constant 4 : i32
    %754 = arith.muli %c6_i32, %c4_i32_504 : i32
    %c2_i32_505 = arith.constant 2 : i32
    %755 = arith.addi %754, %c2_i32_505 : i32
    %756 = arith.index_cast %755 : i32 to index
    %c0_506 = arith.constant 0 : index
    %c0_507 = arith.constant 0 : index
    %757 = vector.load %arg0[%756, %c0_506, %c0_507] : memref<32x2x32xf32, #tpu.memory_space<vmem>>, vector<1x2x32xf32>
    %758 = vector.shape_cast %757 : vector<1x2x32xf32> to vector<2x32xf32>
    %759 = arith.addf %758, %753 : vector<2x32xf32>
    %c3_508 = arith.constant 3 : index
    %c0_509 = arith.constant 0 : index
    %c0_510 = arith.constant 0 : index
    %760 = vector.load %arg2[%c3_508, %c0_509, %c0_510] : memref<8x32x32xf32, #tpu.memory_space<vmem>>, vector<1x32x32xf32>
    %761 = vector.shape_cast %760 : vector<1x32x32xf32> to vector<32x32xf32>
    %cst_511 = arith.constant dense<0.000000e+00> : vector<2x32xf32>
    %762 = tpu.matmul %667, %761, %cst_511 {dimension_numbers = #tpu.dot_dimension_numbers<[1], [0], [0], [1], [0, 0, 1, 1], [], []>} : vector<2x32xf32>, vector<32x32xf32>, vector<2x32xf32> -> vector<2x32xf32>
    %c4_i32_512 = arith.constant 4 : i32
    %763 = arith.muli %c6_i32, %c4_i32_512 : i32
    %c3_i32_513 = arith.constant 3 : i32
    %764 = arith.addi %763, %c3_i32_513 : i32
    %765 = arith.index_cast %764 : i32 to index
    %c0_514 = arith.constant 0 : index
    %c0_515 = arith.constant 0 : index
    %766 = vector.load %arg0[%765, %c0_514, %c0_515] : memref<32x2x32xf32, #tpu.memory_space<vmem>>, vector<1x2x32xf32>
    %767 = vector.shape_cast %766 : vector<1x2x32xf32> to vector<2x32xf32>
    %768 = arith.addf %767, %762 : vector<2x32xf32>
    %769 = arith.negf %741 : vector<2x32xf32>
    %770 = math.exp %769 : vector<2x32xf32>
    %cst_516 = arith.constant 1.000000e+00 : f32
    %771 = vector.broadcast %cst_516 : f32 to vector<2x32xf32>
    %772 = arith.addf %771, %770 : vector<2x32xf32>
    %773 = arith.divf %771, %772 : vector<2x32xf32>
    %774 = arith.negf %750 : vector<2x32xf32>
    %775 = math.exp %774 : vector<2x32xf32>
    %cst_517 = arith.constant 1.000000e+00 : f32
    %776 = vector.broadcast %cst_517 : f32 to vector<2x32xf32>
    %777 = arith.addf %776, %775 : vector<2x32xf32>
    %778 = arith.divf %776, %777 : vector<2x32xf32>
    %779 = math.tanh %759 : vector<2x32xf32>
    %780 = arith.negf %768 : vector<2x32xf32>
    %781 = math.exp %780 : vector<2x32xf32>
    %cst_518 = arith.constant 1.000000e+00 : f32
    %782 = vector.broadcast %cst_518 : f32 to vector<2x32xf32>
    %783 = arith.addf %782, %781 : vector<2x32xf32>
    %784 = arith.divf %782, %783 : vector<2x32xf32>
    %785 = arith.mulf %778, %665 : vector<2x32xf32>
    %786 = arith.mulf %773, %779 : vector<2x32xf32>
    %787 = arith.addf %785, %786 : vector<2x32xf32>
    %788 = math.tanh %787 : vector<2x32xf32>
    %789 = arith.mulf %784, %788 : vector<2x32xf32>
    %c4_519 = arith.constant 4 : index
    %c0_520 = arith.constant 0 : index
    %c0_521 = arith.constant 0 : index
    %790 = vector.load %arg2[%c4_519, %c0_520, %c0_521] : memref<8x32x32xf32, #tpu.memory_space<vmem>>, vector<1x32x32xf32>
    %791 = vector.shape_cast %790 : vector<1x32x32xf32> to vector<32x32xf32>
    %cst_522 = arith.constant dense<0.000000e+00> : vector<2x32xf32>
    %792 = tpu.matmul %732, %791, %cst_522 {dimension_numbers = #tpu.dot_dimension_numbers<[1], [0], [0], [1], [0, 0, 1, 1], [], []>} : vector<2x32xf32>, vector<32x32xf32>, vector<2x32xf32> -> vector<2x32xf32>
    %c0_523 = arith.constant 0 : index
    %c0_524 = arith.constant 0 : index
    %c0_525 = arith.constant 0 : index
    %793 = vector.load %arg3[%c0_523, %c0_524, %c0_525] : memref<4x1x32xf32, #tpu.memory_space<vmem>>, vector<1x1x32xf32>
    %794 = vector.shape_cast %793 : vector<1x1x32xf32> to vector<1x32xf32>
    %795 = vector.broadcast %794 : vector<1x32xf32> to vector<2x32xf32>
    %796 = arith.addf %795, %792 : vector<2x32xf32>
    %c0_526 = arith.constant 0 : index
    %c0_527 = arith.constant 0 : index
    %c0_528 = arith.constant 0 : index
    %797 = vector.load %arg1[%c0_526, %c0_527, %c0_528] : memref<4x32x32xf32, #tpu.memory_space<vmem>>, vector<1x32x32xf32>
    %798 = vector.shape_cast %797 : vector<1x32x32xf32> to vector<32x32xf32>
    %cst_529 = arith.constant dense<0.000000e+00> : vector<2x32xf32>
    %799 = tpu.matmul %789, %798, %cst_529 {dimension_numbers = #tpu.dot_dimension_numbers<[1], [0], [0], [1], [0, 0, 1, 1], [], []>} : vector<2x32xf32>, vector<32x32xf32>, vector<2x32xf32> -> vector<2x32xf32>
    %800 = arith.addf %796, %799 : vector<2x32xf32>
    %c5_530 = arith.constant 5 : index
    %c0_531 = arith.constant 0 : index
    %c0_532 = arith.constant 0 : index
    %801 = vector.load %arg2[%c5_530, %c0_531, %c0_532] : memref<8x32x32xf32, #tpu.memory_space<vmem>>, vector<1x32x32xf32>
    %802 = vector.shape_cast %801 : vector<1x32x32xf32> to vector<32x32xf32>
    %cst_533 = arith.constant dense<0.000000e+00> : vector<2x32xf32>
    %803 = tpu.matmul %732, %802, %cst_533 {dimension_numbers = #tpu.dot_dimension_numbers<[1], [0], [0], [1], [0, 0, 1, 1], [], []>} : vector<2x32xf32>, vector<32x32xf32>, vector<2x32xf32> -> vector<2x32xf32>
    %c1_534 = arith.constant 1 : index
    %c0_535 = arith.constant 0 : index
    %c0_536 = arith.constant 0 : index
    %804 = vector.load %arg3[%c1_534, %c0_535, %c0_536] : memref<4x1x32xf32, #tpu.memory_space<vmem>>, vector<1x1x32xf32>
    %805 = vector.shape_cast %804 : vector<1x1x32xf32> to vector<1x32xf32>
    %806 = vector.broadcast %805 : vector<1x32xf32> to vector<2x32xf32>
    %807 = arith.addf %806, %803 : vector<2x32xf32>
    %c1_537 = arith.constant 1 : index
    %c0_538 = arith.constant 0 : index
    %c0_539 = arith.constant 0 : index
    %808 = vector.load %arg1[%c1_537, %c0_538, %c0_539] : memref<4x32x32xf32, #tpu.memory_space<vmem>>, vector<1x32x32xf32>
    %809 = vector.shape_cast %808 : vector<1x32x32xf32> to vector<32x32xf32>
    %cst_540 = arith.constant dense<0.000000e+00> : vector<2x32xf32>
    %810 = tpu.matmul %789, %809, %cst_540 {dimension_numbers = #tpu.dot_dimension_numbers<[1], [0], [0], [1], [0, 0, 1, 1], [], []>} : vector<2x32xf32>, vector<32x32xf32>, vector<2x32xf32> -> vector<2x32xf32>
    %811 = arith.addf %807, %810 : vector<2x32xf32>
    %c6_541 = arith.constant 6 : index
    %c0_542 = arith.constant 0 : index
    %c0_543 = arith.constant 0 : index
    %812 = vector.load %arg2[%c6_541, %c0_542, %c0_543] : memref<8x32x32xf32, #tpu.memory_space<vmem>>, vector<1x32x32xf32>
    %813 = vector.shape_cast %812 : vector<1x32x32xf32> to vector<32x32xf32>
    %cst_544 = arith.constant dense<0.000000e+00> : vector<2x32xf32>
    %814 = tpu.matmul %732, %813, %cst_544 {dimension_numbers = #tpu.dot_dimension_numbers<[1], [0], [0], [1], [0, 0, 1, 1], [], []>} : vector<2x32xf32>, vector<32x32xf32>, vector<2x32xf32> -> vector<2x32xf32>
    %c2_545 = arith.constant 2 : index
    %c0_546 = arith.constant 0 : index
    %c0_547 = arith.constant 0 : index
    %815 = vector.load %arg3[%c2_545, %c0_546, %c0_547] : memref<4x1x32xf32, #tpu.memory_space<vmem>>, vector<1x1x32xf32>
    %816 = vector.shape_cast %815 : vector<1x1x32xf32> to vector<1x32xf32>
    %817 = vector.broadcast %816 : vector<1x32xf32> to vector<2x32xf32>
    %818 = arith.addf %817, %814 : vector<2x32xf32>
    %c2_548 = arith.constant 2 : index
    %c0_549 = arith.constant 0 : index
    %c0_550 = arith.constant 0 : index
    %819 = vector.load %arg1[%c2_548, %c0_549, %c0_550] : memref<4x32x32xf32, #tpu.memory_space<vmem>>, vector<1x32x32xf32>
    %820 = vector.shape_cast %819 : vector<1x32x32xf32> to vector<32x32xf32>
    %cst_551 = arith.constant dense<0.000000e+00> : vector<2x32xf32>
    %821 = tpu.matmul %789, %820, %cst_551 {dimension_numbers = #tpu.dot_dimension_numbers<[1], [0], [0], [1], [0, 0, 1, 1], [], []>} : vector<2x32xf32>, vector<32x32xf32>, vector<2x32xf32> -> vector<2x32xf32>
    %822 = arith.addf %818, %821 : vector<2x32xf32>
    %c7_552 = arith.constant 7 : index
    %c0_553 = arith.constant 0 : index
    %c0_554 = arith.constant 0 : index
    %823 = vector.load %arg2[%c7_552, %c0_553, %c0_554] : memref<8x32x32xf32, #tpu.memory_space<vmem>>, vector<1x32x32xf32>
    %824 = vector.shape_cast %823 : vector<1x32x32xf32> to vector<32x32xf32>
    %cst_555 = arith.constant dense<0.000000e+00> : vector<2x32xf32>
    %825 = tpu.matmul %732, %824, %cst_555 {dimension_numbers = #tpu.dot_dimension_numbers<[1], [0], [0], [1], [0, 0, 1, 1], [], []>} : vector<2x32xf32>, vector<32x32xf32>, vector<2x32xf32> -> vector<2x32xf32>
    %c3_556 = arith.constant 3 : index
    %c0_557 = arith.constant 0 : index
    %c0_558 = arith.constant 0 : index
    %826 = vector.load %arg3[%c3_556, %c0_557, %c0_558] : memref<4x1x32xf32, #tpu.memory_space<vmem>>, vector<1x1x32xf32>
    %827 = vector.shape_cast %826 : vector<1x1x32xf32> to vector<1x32xf32>
    %828 = vector.broadcast %827 : vector<1x32xf32> to vector<2x32xf32>
    %829 = arith.addf %828, %825 : vector<2x32xf32>
    %c3_559 = arith.constant 3 : index
    %c0_560 = arith.constant 0 : index
    %c0_561 = arith.constant 0 : index
    %830 = vector.load %arg1[%c3_559, %c0_560, %c0_561] : memref<4x32x32xf32, #tpu.memory_space<vmem>>, vector<1x32x32xf32>
    %831 = vector.shape_cast %830 : vector<1x32x32xf32> to vector<32x32xf32>
    %cst_562 = arith.constant dense<0.000000e+00> : vector<2x32xf32>
    %832 = tpu.matmul %789, %831, %cst_562 {dimension_numbers = #tpu.dot_dimension_numbers<[1], [0], [0], [1], [0, 0, 1, 1], [], []>} : vector<2x32xf32>, vector<32x32xf32>, vector<2x32xf32> -> vector<2x32xf32>
    %833 = arith.addf %829, %832 : vector<2x32xf32>
    %834 = arith.negf %800 : vector<2x32xf32>
    %835 = math.exp %834 : vector<2x32xf32>
    %cst_563 = arith.constant 1.000000e+00 : f32
    %836 = vector.broadcast %cst_563 : f32 to vector<2x32xf32>
    %837 = arith.addf %836, %835 : vector<2x32xf32>
    %838 = arith.divf %836, %837 : vector<2x32xf32>
    %839 = arith.negf %811 : vector<2x32xf32>
    %840 = math.exp %839 : vector<2x32xf32>
    %cst_564 = arith.constant 1.000000e+00 : f32
    %841 = vector.broadcast %cst_564 : f32 to vector<2x32xf32>
    %842 = arith.addf %841, %840 : vector<2x32xf32>
    %843 = arith.divf %841, %842 : vector<2x32xf32>
    %844 = math.tanh %822 : vector<2x32xf32>
    %845 = arith.negf %833 : vector<2x32xf32>
    %846 = math.exp %845 : vector<2x32xf32>
    %cst_565 = arith.constant 1.000000e+00 : f32
    %847 = vector.broadcast %cst_565 : f32 to vector<2x32xf32>
    %848 = arith.addf %847, %846 : vector<2x32xf32>
    %849 = arith.divf %847, %848 : vector<2x32xf32>
    %850 = arith.mulf %843, %730 : vector<2x32xf32>
    %851 = arith.mulf %838, %844 : vector<2x32xf32>
    %852 = arith.addf %850, %851 : vector<2x32xf32>
    %853 = math.tanh %852 : vector<2x32xf32>
    %854 = arith.mulf %849, %853 : vector<2x32xf32>
    %c7_i32 = arith.constant 7 : i32
    %c0_566 = arith.constant 0 : index
    %c0_567 = arith.constant 0 : index
    %c0_568 = arith.constant 0 : index
    %855 = vector.load %arg2[%c0_566, %c0_567, %c0_568] : memref<8x32x32xf32, #tpu.memory_space<vmem>>, vector<1x32x32xf32>
    %856 = vector.shape_cast %855 : vector<1x32x32xf32> to vector<32x32xf32>
    %cst_569 = arith.constant dense<0.000000e+00> : vector<2x32xf32>
    %857 = tpu.matmul %789, %856, %cst_569 {dimension_numbers = #tpu.dot_dimension_numbers<[1], [0], [0], [1], [0, 0, 1, 1], [], []>} : vector<2x32xf32>, vector<32x32xf32>, vector<2x32xf32> -> vector<2x32xf32>
    %c4_i32_570 = arith.constant 4 : i32
    %858 = arith.muli %c7_i32, %c4_i32_570 : i32
    %c0_i32_571 = arith.constant 0 : i32
    %859 = arith.addi %858, %c0_i32_571 : i32
    %860 = arith.index_cast %859 : i32 to index
    %c0_572 = arith.constant 0 : index
    %c0_573 = arith.constant 0 : index
    %861 = vector.load %arg0[%860, %c0_572, %c0_573] : memref<32x2x32xf32, #tpu.memory_space<vmem>>, vector<1x2x32xf32>
    %862 = vector.shape_cast %861 : vector<1x2x32xf32> to vector<2x32xf32>
    %863 = arith.addf %862, %857 : vector<2x32xf32>
    %c1_574 = arith.constant 1 : index
    %c0_575 = arith.constant 0 : index
    %c0_576 = arith.constant 0 : index
    %864 = vector.load %arg2[%c1_574, %c0_575, %c0_576] : memref<8x32x32xf32, #tpu.memory_space<vmem>>, vector<1x32x32xf32>
    %865 = vector.shape_cast %864 : vector<1x32x32xf32> to vector<32x32xf32>
    %cst_577 = arith.constant dense<0.000000e+00> : vector<2x32xf32>
    %866 = tpu.matmul %789, %865, %cst_577 {dimension_numbers = #tpu.dot_dimension_numbers<[1], [0], [0], [1], [0, 0, 1, 1], [], []>} : vector<2x32xf32>, vector<32x32xf32>, vector<2x32xf32> -> vector<2x32xf32>
    %c4_i32_578 = arith.constant 4 : i32
    %867 = arith.muli %c7_i32, %c4_i32_578 : i32
    %c1_i32_579 = arith.constant 1 : i32
    %868 = arith.addi %867, %c1_i32_579 : i32
    %869 = arith.index_cast %868 : i32 to index
    %c0_580 = arith.constant 0 : index
    %c0_581 = arith.constant 0 : index
    %870 = vector.load %arg0[%869, %c0_580, %c0_581] : memref<32x2x32xf32, #tpu.memory_space<vmem>>, vector<1x2x32xf32>
    %871 = vector.shape_cast %870 : vector<1x2x32xf32> to vector<2x32xf32>
    %872 = arith.addf %871, %866 : vector<2x32xf32>
    %c2_582 = arith.constant 2 : index
    %c0_583 = arith.constant 0 : index
    %c0_584 = arith.constant 0 : index
    %873 = vector.load %arg2[%c2_582, %c0_583, %c0_584] : memref<8x32x32xf32, #tpu.memory_space<vmem>>, vector<1x32x32xf32>
    %874 = vector.shape_cast %873 : vector<1x32x32xf32> to vector<32x32xf32>
    %cst_585 = arith.constant dense<0.000000e+00> : vector<2x32xf32>
    %875 = tpu.matmul %789, %874, %cst_585 {dimension_numbers = #tpu.dot_dimension_numbers<[1], [0], [0], [1], [0, 0, 1, 1], [], []>} : vector<2x32xf32>, vector<32x32xf32>, vector<2x32xf32> -> vector<2x32xf32>
    %c4_i32_586 = arith.constant 4 : i32
    %876 = arith.muli %c7_i32, %c4_i32_586 : i32
    %c2_i32_587 = arith.constant 2 : i32
    %877 = arith.addi %876, %c2_i32_587 : i32
    %878 = arith.index_cast %877 : i32 to index
    %c0_588 = arith.constant 0 : index
    %c0_589 = arith.constant 0 : index
    %879 = vector.load %arg0[%878, %c0_588, %c0_589] : memref<32x2x32xf32, #tpu.memory_space<vmem>>, vector<1x2x32xf32>
    %880 = vector.shape_cast %879 : vector<1x2x32xf32> to vector<2x32xf32>
    %881 = arith.addf %880, %875 : vector<2x32xf32>
    %c3_590 = arith.constant 3 : index
    %c0_591 = arith.constant 0 : index
    %c0_592 = arith.constant 0 : index
    %882 = vector.load %arg2[%c3_590, %c0_591, %c0_592] : memref<8x32x32xf32, #tpu.memory_space<vmem>>, vector<1x32x32xf32>
    %883 = vector.shape_cast %882 : vector<1x32x32xf32> to vector<32x32xf32>
    %cst_593 = arith.constant dense<0.000000e+00> : vector<2x32xf32>
    %884 = tpu.matmul %789, %883, %cst_593 {dimension_numbers = #tpu.dot_dimension_numbers<[1], [0], [0], [1], [0, 0, 1, 1], [], []>} : vector<2x32xf32>, vector<32x32xf32>, vector<2x32xf32> -> vector<2x32xf32>
    %c4_i32_594 = arith.constant 4 : i32
    %885 = arith.muli %c7_i32, %c4_i32_594 : i32
    %c3_i32_595 = arith.constant 3 : i32
    %886 = arith.addi %885, %c3_i32_595 : i32
    %887 = arith.index_cast %886 : i32 to index
    %c0_596 = arith.constant 0 : index
    %c0_597 = arith.constant 0 : index
    %888 = vector.load %arg0[%887, %c0_596, %c0_597] : memref<32x2x32xf32, #tpu.memory_space<vmem>>, vector<1x2x32xf32>
    %889 = vector.shape_cast %888 : vector<1x2x32xf32> to vector<2x32xf32>
    %890 = arith.addf %889, %884 : vector<2x32xf32>
    %891 = arith.negf %863 : vector<2x32xf32>
    %892 = math.exp %891 : vector<2x32xf32>
    %cst_598 = arith.constant 1.000000e+00 : f32
    %893 = vector.broadcast %cst_598 : f32 to vector<2x32xf32>
    %894 = arith.addf %893, %892 : vector<2x32xf32>
    %895 = arith.divf %893, %894 : vector<2x32xf32>
    %896 = arith.negf %872 : vector<2x32xf32>
    %897 = math.exp %896 : vector<2x32xf32>
    %cst_599 = arith.constant 1.000000e+00 : f32
    %898 = vector.broadcast %cst_599 : f32 to vector<2x32xf32>
    %899 = arith.addf %898, %897 : vector<2x32xf32>
    %900 = arith.divf %898, %899 : vector<2x32xf32>
    %901 = math.tanh %881 : vector<2x32xf32>
    %902 = arith.negf %890 : vector<2x32xf32>
    %903 = math.exp %902 : vector<2x32xf32>
    %cst_600 = arith.constant 1.000000e+00 : f32
    %904 = vector.broadcast %cst_600 : f32 to vector<2x32xf32>
    %905 = arith.addf %904, %903 : vector<2x32xf32>
    %906 = arith.divf %904, %905 : vector<2x32xf32>
    %907 = arith.mulf %900, %787 : vector<2x32xf32>
    %908 = arith.mulf %895, %901 : vector<2x32xf32>
    %909 = arith.addf %907, %908 : vector<2x32xf32>
    %910 = math.tanh %909 : vector<2x32xf32>
    %911 = arith.mulf %906, %910 : vector<2x32xf32>
    %c4_601 = arith.constant 4 : index
    %c0_602 = arith.constant 0 : index
    %c0_603 = arith.constant 0 : index
    %912 = vector.load %arg2[%c4_601, %c0_602, %c0_603] : memref<8x32x32xf32, #tpu.memory_space<vmem>>, vector<1x32x32xf32>
    %913 = vector.shape_cast %912 : vector<1x32x32xf32> to vector<32x32xf32>
    %cst_604 = arith.constant dense<0.000000e+00> : vector<2x32xf32>
    %914 = tpu.matmul %854, %913, %cst_604 {dimension_numbers = #tpu.dot_dimension_numbers<[1], [0], [0], [1], [0, 0, 1, 1], [], []>} : vector<2x32xf32>, vector<32x32xf32>, vector<2x32xf32> -> vector<2x32xf32>
    %c0_605 = arith.constant 0 : index
    %c0_606 = arith.constant 0 : index
    %c0_607 = arith.constant 0 : index
    %915 = vector.load %arg3[%c0_605, %c0_606, %c0_607] : memref<4x1x32xf32, #tpu.memory_space<vmem>>, vector<1x1x32xf32>
    %916 = vector.shape_cast %915 : vector<1x1x32xf32> to vector<1x32xf32>
    %917 = vector.broadcast %916 : vector<1x32xf32> to vector<2x32xf32>
    %918 = arith.addf %917, %914 : vector<2x32xf32>
    %c0_608 = arith.constant 0 : index
    %c0_609 = arith.constant 0 : index
    %c0_610 = arith.constant 0 : index
    %919 = vector.load %arg1[%c0_608, %c0_609, %c0_610] : memref<4x32x32xf32, #tpu.memory_space<vmem>>, vector<1x32x32xf32>
    %920 = vector.shape_cast %919 : vector<1x32x32xf32> to vector<32x32xf32>
    %cst_611 = arith.constant dense<0.000000e+00> : vector<2x32xf32>
    %921 = tpu.matmul %911, %920, %cst_611 {dimension_numbers = #tpu.dot_dimension_numbers<[1], [0], [0], [1], [0, 0, 1, 1], [], []>} : vector<2x32xf32>, vector<32x32xf32>, vector<2x32xf32> -> vector<2x32xf32>
    %922 = arith.addf %918, %921 : vector<2x32xf32>
    %c5_612 = arith.constant 5 : index
    %c0_613 = arith.constant 0 : index
    %c0_614 = arith.constant 0 : index
    %923 = vector.load %arg2[%c5_612, %c0_613, %c0_614] : memref<8x32x32xf32, #tpu.memory_space<vmem>>, vector<1x32x32xf32>
    %924 = vector.shape_cast %923 : vector<1x32x32xf32> to vector<32x32xf32>
    %cst_615 = arith.constant dense<0.000000e+00> : vector<2x32xf32>
    %925 = tpu.matmul %854, %924, %cst_615 {dimension_numbers = #tpu.dot_dimension_numbers<[1], [0], [0], [1], [0, 0, 1, 1], [], []>} : vector<2x32xf32>, vector<32x32xf32>, vector<2x32xf32> -> vector<2x32xf32>
    %c1_616 = arith.constant 1 : index
    %c0_617 = arith.constant 0 : index
    %c0_618 = arith.constant 0 : index
    %926 = vector.load %arg3[%c1_616, %c0_617, %c0_618] : memref<4x1x32xf32, #tpu.memory_space<vmem>>, vector<1x1x32xf32>
    %927 = vector.shape_cast %926 : vector<1x1x32xf32> to vector<1x32xf32>
    %928 = vector.broadcast %927 : vector<1x32xf32> to vector<2x32xf32>
    %929 = arith.addf %928, %925 : vector<2x32xf32>
    %c1_619 = arith.constant 1 : index
    %c0_620 = arith.constant 0 : index
    %c0_621 = arith.constant 0 : index
    %930 = vector.load %arg1[%c1_619, %c0_620, %c0_621] : memref<4x32x32xf32, #tpu.memory_space<vmem>>, vector<1x32x32xf32>
    %931 = vector.shape_cast %930 : vector<1x32x32xf32> to vector<32x32xf32>
    %cst_622 = arith.constant dense<0.000000e+00> : vector<2x32xf32>
    %932 = tpu.matmul %911, %931, %cst_622 {dimension_numbers = #tpu.dot_dimension_numbers<[1], [0], [0], [1], [0, 0, 1, 1], [], []>} : vector<2x32xf32>, vector<32x32xf32>, vector<2x32xf32> -> vector<2x32xf32>
    %933 = arith.addf %929, %932 : vector<2x32xf32>
    %c6_623 = arith.constant 6 : index
    %c0_624 = arith.constant 0 : index
    %c0_625 = arith.constant 0 : index
    %934 = vector.load %arg2[%c6_623, %c0_624, %c0_625] : memref<8x32x32xf32, #tpu.memory_space<vmem>>, vector<1x32x32xf32>
    %935 = vector.shape_cast %934 : vector<1x32x32xf32> to vector<32x32xf32>
    %cst_626 = arith.constant dense<0.000000e+00> : vector<2x32xf32>
    %936 = tpu.matmul %854, %935, %cst_626 {dimension_numbers = #tpu.dot_dimension_numbers<[1], [0], [0], [1], [0, 0, 1, 1], [], []>} : vector<2x32xf32>, vector<32x32xf32>, vector<2x32xf32> -> vector<2x32xf32>
    %c2_627 = arith.constant 2 : index
    %c0_628 = arith.constant 0 : index
    %c0_629 = arith.constant 0 : index
    %937 = vector.load %arg3[%c2_627, %c0_628, %c0_629] : memref<4x1x32xf32, #tpu.memory_space<vmem>>, vector<1x1x32xf32>
    %938 = vector.shape_cast %937 : vector<1x1x32xf32> to vector<1x32xf32>
    %939 = vector.broadcast %938 : vector<1x32xf32> to vector<2x32xf32>
    %940 = arith.addf %939, %936 : vector<2x32xf32>
    %c2_630 = arith.constant 2 : index
    %c0_631 = arith.constant 0 : index
    %c0_632 = arith.constant 0 : index
    %941 = vector.load %arg1[%c2_630, %c0_631, %c0_632] : memref<4x32x32xf32, #tpu.memory_space<vmem>>, vector<1x32x32xf32>
    %942 = vector.shape_cast %941 : vector<1x32x32xf32> to vector<32x32xf32>
    %cst_633 = arith.constant dense<0.000000e+00> : vector<2x32xf32>
    %943 = tpu.matmul %911, %942, %cst_633 {dimension_numbers = #tpu.dot_dimension_numbers<[1], [0], [0], [1], [0, 0, 1, 1], [], []>} : vector<2x32xf32>, vector<32x32xf32>, vector<2x32xf32> -> vector<2x32xf32>
    %944 = arith.addf %940, %943 : vector<2x32xf32>
    %c7_634 = arith.constant 7 : index
    %c0_635 = arith.constant 0 : index
    %c0_636 = arith.constant 0 : index
    %945 = vector.load %arg2[%c7_634, %c0_635, %c0_636] : memref<8x32x32xf32, #tpu.memory_space<vmem>>, vector<1x32x32xf32>
    %946 = vector.shape_cast %945 : vector<1x32x32xf32> to vector<32x32xf32>
    %cst_637 = arith.constant dense<0.000000e+00> : vector<2x32xf32>
    %947 = tpu.matmul %854, %946, %cst_637 {dimension_numbers = #tpu.dot_dimension_numbers<[1], [0], [0], [1], [0, 0, 1, 1], [], []>} : vector<2x32xf32>, vector<32x32xf32>, vector<2x32xf32> -> vector<2x32xf32>
    %c3_638 = arith.constant 3 : index
    %c0_639 = arith.constant 0 : index
    %c0_640 = arith.constant 0 : index
    %948 = vector.load %arg3[%c3_638, %c0_639, %c0_640] : memref<4x1x32xf32, #tpu.memory_space<vmem>>, vector<1x1x32xf32>
    %949 = vector.shape_cast %948 : vector<1x1x32xf32> to vector<1x32xf32>
    %950 = vector.broadcast %949 : vector<1x32xf32> to vector<2x32xf32>
    %951 = arith.addf %950, %947 : vector<2x32xf32>
    %c3_641 = arith.constant 3 : index
    %c0_642 = arith.constant 0 : index
    %c0_643 = arith.constant 0 : index
    %952 = vector.load %arg1[%c3_641, %c0_642, %c0_643] : memref<4x32x32xf32, #tpu.memory_space<vmem>>, vector<1x32x32xf32>
    %953 = vector.shape_cast %952 : vector<1x32x32xf32> to vector<32x32xf32>
    %cst_644 = arith.constant dense<0.000000e+00> : vector<2x32xf32>
    %954 = tpu.matmul %911, %953, %cst_644 {dimension_numbers = #tpu.dot_dimension_numbers<[1], [0], [0], [1], [0, 0, 1, 1], [], []>} : vector<2x32xf32>, vector<32x32xf32>, vector<2x32xf32> -> vector<2x32xf32>
    %955 = arith.addf %951, %954 : vector<2x32xf32>
    %956 = arith.negf %922 : vector<2x32xf32>
    %957 = math.exp %956 : vector<2x32xf32>
    %cst_645 = arith.constant 1.000000e+00 : f32
    %958 = vector.broadcast %cst_645 : f32 to vector<2x32xf32>
    %959 = arith.addf %958, %957 : vector<2x32xf32>
    %960 = arith.divf %958, %959 : vector<2x32xf32>
    %961 = arith.negf %933 : vector<2x32xf32>
    %962 = math.exp %961 : vector<2x32xf32>
    %cst_646 = arith.constant 1.000000e+00 : f32
    %963 = vector.broadcast %cst_646 : f32 to vector<2x32xf32>
    %964 = arith.addf %963, %962 : vector<2x32xf32>
    %965 = arith.divf %963, %964 : vector<2x32xf32>
    %966 = math.tanh %944 : vector<2x32xf32>
    %967 = arith.negf %955 : vector<2x32xf32>
    %968 = math.exp %967 : vector<2x32xf32>
    %cst_647 = arith.constant 1.000000e+00 : f32
    %969 = vector.broadcast %cst_647 : f32 to vector<2x32xf32>
    %970 = arith.addf %969, %968 : vector<2x32xf32>
    %971 = arith.divf %969, %970 : vector<2x32xf32>
    %972 = arith.mulf %965, %852 : vector<2x32xf32>
    %973 = arith.mulf %960, %966 : vector<2x32xf32>
    %974 = arith.addf %972, %973 : vector<2x32xf32>
    %975 = math.tanh %974 : vector<2x32xf32>
    %976 = arith.mulf %971, %975 : vector<2x32xf32>
    %c8_i32 = arith.constant 8 : i32
    %c0_648 = arith.constant 0 : index
    %c0_649 = arith.constant 0 : index
    %977 = vector.load %arg4[%c0_648, %c0_649] : memref<32x4xf32, #tpu.memory_space<vmem>>, vector<32x4xf32>
    %cst_650 = arith.constant dense<0.000000e+00> : vector<2x4xf32>
    %978 = tpu.matmul %976, %977, %cst_650 {dimension_numbers = #tpu.dot_dimension_numbers<[1], [0], [0], [1], [0, 0, 1, 1], [], []>} : vector<2x32xf32>, vector<32x4xf32>, vector<2x4xf32> -> vector<2x4xf32>
    %c0_651 = arith.constant 0 : index
    %c0_652 = arith.constant 0 : index
    %979 = vector.load %arg5[%c0_651, %c0_652] : memref<1x4xf32, #tpu.memory_space<vmem>>, vector<1x4xf32>
    %980 = vector.broadcast %979 : vector<1x4xf32> to vector<2x4xf32>
    %981 = arith.addf %978, %980 : vector<2x4xf32>
    %c0_653 = arith.constant 0 : index
    %c0_654 = arith.constant 0 : index
    %982 = vector.load %arg6[%c0_653, %c0_654] : memref<2x4xf32, #tpu.memory_space<vmem>>, vector<2x4xf32>
    tpu.vector_store %arg6[%c0_653, %c0_654], %981 {strides = array<i32>} : memref<2x4xf32, #tpu.memory_space<vmem>>, vector<2x4xf32>,
    return
  }
}

</mosaic_0001>

<llo_original>
// kernel: lstm_model_forward.1
$region0: #{lstm_model_forward.1}
  #allocation0 [shape = 'u32[]', space=smem, size = 0x4, offset = 0x4, fixed_abs, tag = 'smem constant byte address 0x4 - core index']
  #allocation1 [shape = 'u32[72,128]{1,0:T(1,128)}', space=vmem, size = 0x9000, scoped, tag = 'internal scratch']
  %s0 = inlined_call_operand.vmem [shape: f32[32,2,32], index: 0, kind: input, shape index: {}]
  %s1 = inlined_call_operand.vmem [shape: f32[4,32,32], index: 1, kind: input, shape index: {}]
  %s2 = inlined_call_operand.vmem [shape: f32[8,32,32], index: 2, kind: input, shape index: {}]
  %s3 = inlined_call_operand.vmem [shape: f32[4,1,32], index: 3, kind: input, shape index: {}]
  %s4 = inlined_call_operand.vmem [shape: f32[32,4], index: 4, kind: input, shape index: {}]
  %s5 = inlined_call_operand.vmem [shape: f32[1,4], index: 5, kind: input, shape index: {}]
  %s6 = inlined_call_operand.hbm [shape: f32[2,4], index: 6, kind: output, shape index: {}]
  %s7 = sld [smem:[#allocation0]]
  $region34: #{lstm_model_forward.1} parent=0
    _
  %s9 = ssub.s32 1, %s7
  %s10 = scalar_select 0, %s9, %s7
  $region1: #{lstm_model_forward.1} parent=0
    #allocation2 [shape = 'u8[1024]{0}', space=vmem, size = 0x400, scoped, tag = 'output window, operand 0, single buffered']
    #allocation3 [shape = 's32[1]{0}', space=sflag, size = 0x4, scoped, tag = 'scoped memory for lstm_model_forward.1']
    %11 = vsyncpa [#allocation3], 0
    // Predicated region
    $region2: #{lstm_model_forward.1} parent=1 // pred_check
      _
    $region3: #{lstm_model_forward.1} parent=1 // pred_check_branch
      %13 = sbr.rel (0) target = $region5
    $region4: #{lstm_model_forward.1} parent=1 // pred_region
      _
    $region5: #{lstm_model_forward.1} parent=1 // pred_fallthru
      _
    // Predicated region
    $region6: #{lstm_model_forward.1} parent=1 // pred_check
      _
    $region7: #{lstm_model_forward.1} parent=1 // pred_check_branch
      %15 = sbr.rel (0) target = $region9
    $region8: #{lstm_model_forward.1} parent=1 // pred_region
      _
    $region9: #{lstm_model_forward.1} parent=1 // pred_fallthru
      _
    // Predicated region
    $region10: #{lstm_model_forward.1} parent=1 // pred_check
      _
    $region11: #{lstm_model_forward.1} parent=1 // pred_check_branch
      %17 = sbr.rel (0) target = $region13
    $region12: #{lstm_model_forward.1} parent=1 // pred_region
      _
    $region13: #{lstm_model_forward.1} parent=1 // pred_fallthru
      _
    // Predicated region
    $region14: #{lstm_model_forward.1} parent=1 // pred_check
      _
    $region15: #{lstm_model_forward.1} parent=1 // pred_check_branch
      %19 = sbr.rel (0) target = $region17
    $region16: #{lstm_model_forward.1} parent=1 // pred_region
      _
    $region17: #{lstm_model_forward.1} parent=1 // pred_fallthru
      _
    // Predicated region
    $region18: #{lstm_model_forward.1} parent=1 // pred_check
      _
    $region19: #{lstm_model_forward.1} parent=1 // pred_check_branch
      %21 = sbr.rel (0) target = $region21
    $region20: #{lstm_model_forward.1} parent=1 // pred_region
      _
    $region21: #{lstm_model_forward.1} parent=1 // pred_fallthru
      _
    // Predicated region
    $region22: #{lstm_model_forward.1} parent=1 // pred_check
      _
    $region23: #{lstm_model_forward.1} parent=1 // pred_check_branch
      %23 = sbr.rel (0) target = $region25
    $region24: #{lstm_model_forward.1} parent=1 // pred_region
      _
    $region25: #{lstm_model_forward.1} parent=1 // pred_fallthru
      _
    %v24 = vld [vmem:[%s2] sm:$0xff]
    %v25 = vld [vmem:[%s2 + $0x8] sm:$0xff]
    %v26 = vld [vmem:[%s2 + $0x10] sm:$0xff]
    %v27 = vld [vmem:[%s2 + $0x18] sm:$0xff]
    %vm28 = vcmask 261120
    %v30 = vsel %vm28, 0.0, 0
    %32 = vmatpush.msra.mxu0 0.0
    %33 = vmatpush.msra.mxu0 0.0
    %34 = vmatpush.msra.mxu0 0.0
    %35 = vmatpush.msra.mxu0 0.0
    %36 = vmatpush.msra.mxu0 0.0
    %37 = vmatpush.msra.mxu0 0.0
    %38 = vmatpush.msra.mxu0 0.0
    %39 = vmatpush.msra.mxu0 0.0
    %40 = vmatpush.msra.mxu0 0.0
    %41 = vmatpush.msra.mxu0 0.0
    %42 = vmatpush.msra.mxu0 0.0
    %43 = vmatpush.msra.mxu0 0.0
    %44 = vmatpush.msra.mxu0 %v27
    %45 = vmatpush.msra.mxu0 %v26
    %46 = vmatpush.msra.mxu0 %v25
    %47 = vmatpush.msra.mxu0 %v24
    %48 = vmatmul.f32.gmra.mxu0 %v30
    %v49 = vpop.f32.mrf.mxu0
    %v50 = vadd.f32 0.0, %v49
    %51 = vdwg.mxu0
    %v52 = vld [vmem:[%s0] sm:$0x3]
    %v53 = vadd.f32 %v52, %v50
    %s54 = scalar_lea.vmem %s2, 32
    %v55 = vld [vmem:[%s54] sm:$0xff]
    %v56 = vld [vmem:[%s54 + $0x8] sm:$0xff]
    %v57 = vld [vmem:[%s54 + $0x10] sm:$0xff]
    %v58 = vld [vmem:[%s54 + $0x18] sm:$0xff]
    %59 = vmatpush.msra.mxu0 0.0
    %60 = vmatpush.msra.mxu0 0.0
    %61 = vmatpush.msra.mxu0 0.0
    %62 = vmatpush.msra.mxu0 0.0
    %63 = vmatpush.msra.mxu0 0.0
    %64 = vmatpush.msra.mxu0 0.0
    %65 = vmatpush.msra.mxu0 0.0
    %66 = vmatpush.msra.mxu0 0.0
    %67 = vmatpush.msra.mxu0 0.0
    %68 = vmatpush.msra.mxu0 0.0
    %69 = vmatpush.msra.mxu0 0.0
    %70 = vmatpush.msra.mxu0 0.0
    %71 = vmatpush.msra.mxu0 %v58
    %72 = vmatpush.msra.mxu0 %v57
    %73 = vmatpush.msra.mxu0 %v56
    %74 = vmatpush.msra.mxu0 %v55
    %75 = vmatmul.f32.gmra.mxu0 %v30
    %v76 = vpop.f32.mrf.mxu0
    %v77 = vadd.f32 0.0, %v76
    %78 = vdwg.mxu0
    %s79 = scalar_lea.vmem %s0, 2
    %v80 = vld [vmem:[%s79] sm:$0x3]
    %v81 = vadd.f32 %v80, %v77
    %s82 = scalar_lea.vmem %s2, 64
    %v83 = vld [vmem:[%s82] sm:$0xff]
    %v84 = vld [vmem:[%s82 + $0x8] sm:$0xff]
    %v85 = vld [vmem:[%s82 + $0x10] sm:$0xff]
    %v86 = vld [vmem:[%s82 + $0x18] sm:$0xff]
    %87 = vmatpush.msra.mxu0 0.0
    %88 = vmatpush.msra.mxu0 0.0
    %89 = vmatpush.msra.mxu0 0.0
    %90 = vmatpush.msra.mxu0 0.0
    %91 = vmatpush.msra.mxu0 0.0
    %92 = vmatpush.msra.mxu0 0.0
    %93 = vmatpush.msra.mxu0 0.0
    %94 = vmatpush.msra.mxu0 0.0
    %95 = vmatpush.msra.mxu0 0.0
    %96 = vmatpush.msra.mxu0 0.0
    %97 = vmatpush.msra.mxu0 0.0
    %98 = vmatpush.msra.mxu0 0.0
    %99 = vmatpush.msra.mxu0 %v86
    %100 = vmatpush.msra.mxu0 %v85
    %101 = vmatpush.msra.mxu0 %v84
    %102 = vmatpush.msra.mxu0 %v83
    %103 = vmatmul.f32.gmra.mxu0 %v30
    %v104 = vpop.f32.mrf.mxu0
    %v105 = vadd.f32 0.0, %v104
    %106 = vdwg.mxu0
    %s107 = scalar_lea.vmem %s0, 4
    %v108 = vld [vmem:[%s107] sm:$0x3]
    %v109 = vadd.f32 %v108, %v105
    %s110 = scalar_lea.vmem %s2, 96
    %v111 = vld [vmem:[%s110] sm:$0xff]
    %v112 = vld [vmem:[%s110 + $0x8] sm:$0xff]
    %v113 = vld [vmem:[%s110 + $0x10] sm:$0xff]
    %v114 = vld [vmem:[%s110 + $0x18] sm:$0xff]
    %115 = vmatpush.msra.mxu0 0.0
    %116 = vmatpush.msra.mxu0 0.0
    %117 = vmatpush.msra.mxu0 0.0
    %118 = vmatpush.msra.mxu0 0.0
    %119 = vmatpush.msra.mxu0 0.0
    %120 = vmatpush.msra.mxu0 0.0
    %121 = vmatpush.msra.mxu0 0.0
    %122 = vmatpush.msra.mxu0 0.0
    %123 = vmatpush.msra.mxu0 0.0
    %124 = vmatpush.msra.mxu0 0.0
    %125 = vmatpush.msra.mxu0 0.0
    %126 = vmatpush.msra.mxu0 0.0
    %127 = vmatpush.msra.mxu0 %v114
    %128 = vmatpush.msra.mxu0 %v113
    %129 = vmatpush.msra.mxu0 %v112
    %130 = vmatpush.msra.mxu0 %v111
    %131 = vmatmul.f32.gmra.mxu0 %v30
    %v132 = vpop.f32.mrf.mxu0
    %v133 = vadd.f32 0.0, %v132
    %134 = vdwg.mxu0
    %s135 = scalar_lea.vmem %s0, 6
    %v136 = vld [vmem:[%s135] sm:$0x3]
    %v137 = vadd.f32 %v136, %v133
    %v138 = vxor.u32 %v53, 2147483648
    %v139 = vmul.f32 %v138, 1.442695
    %v140 = vpow.pop %v139
    %v141 = vadd.f32 %v140, 1.0
    %v142 = vrcp.pop %v141
    %v143 = vmul.f32 %v141, %v142
    %v144 = vsub.f32 1.0, %v143
    %v145 = vmul.f32 %v142, %v144
    %v146 = vadd.f32 %v142, %v145
    %vm147 = vweird.f32 %v141
    %vm148 = vweird.f32 %v142
    %vm149 = vmor %vm147, %vm148
    %v150 = vsel %vm149, %v142, %v146
    %v151 = vand.u32 2147483647, %v141
    %vm152 = vcmp.eq.f32.partialorder %v151, 8.507059e+37
    %v153 = vand.u32 %v141, 2147483648
    %v154 = vor.u32 1.1754944e-38, %v153
    %v155 = vsel %vm152, %v154, %v150
    %v156 = vmul.f32 1.0, %v155
    %v157 = vxor.u32 %v81, 2147483648
    %v158 = vmul.f32 %v157, 1.442695
    %v159 = vpow.pop %v158
    %v160 = vadd.f32 %v159, 1.0
    %v161 = vrcp.pop %v160
    %v162 = vmul.f32 %v160, %v161
    %v163 = vsub.f32 1.0, %v162
    %v164 = vmul.f32 %v161, %v163
    %v165 = vadd.f32 %v161, %v164
    %vm166 = vweird.f32 %v160
    %vm167 = vweird.f32 %v161
    %vm168 = vmor %vm166, %vm167
    %v169 = vsel %vm168, %v161, %v165
    %v170 = vand.u32 2147483647, %v160
    %vm171 = vcmp.eq.f32.partialorder %v170, 8.507059e+37
    %v172 = vand.u32 %v160, 2147483648
    %v173 = vor.u32 1.1754944e-38, %v172
    %v174 = vsel %vm171, %v173, %v169
    %v175 = vmul.f32 1.0, %v174
    %v176 = vtanh.pop %v109
    %v177 = vxor.u32 %v137, 2147483648
    %v178 = vmul.f32 %v177, 1.442695
    %v179 = vpow.pop %v178
    %v180 = vadd.f32 %v179, 1.0
    %v181 = vrcp.pop %v180
    %v182 = vmul.f32 %v180, %v181
    %v183 = vsub.f32 1.0, %v182
    %v184 = vmul.f32 %v181, %v183
    %v185 = vadd.f32 %v181, %v184
    %vm186 = vweird.f32 %v180
    %vm187 = vweird.f32 %v181
    %vm188 = vmor %vm186, %vm187
    %v189 = vsel %vm188, %v181, %v185
    %v190 = vand.u32 2147483647, %v180
    %vm191 = vcmp.eq.f32.partialorder %v190, 8.507059e+37
    %v192 = vand.u32 %v180, 2147483648
    %v193 = vor.u32 1.1754944e-38, %v192
    %v194 = vsel %vm191, %v193, %v189
    %v195 = vmul.f32 1.0, %v194
    %v196 = vmul.f32 %v175, 0.0
    %v197 = vmul.f32 %v156, %v176
    %v198 = vadd.f32 %v196, %v197
    %v199 = vtanh.pop %v198
    %v200 = vmul.f32 %v195, %v199
    %s201 = scalar_lea.vmem %s2, 128
    %v202 = vld [vmem:[%s201] sm:$0xff]
    %v203 = vld [vmem:[%s201 + $0x8] sm:$0xff]
    %v204 = vld [vmem:[%s201 + $0x10] sm:$0xff]
    %v205 = vld [vmem:[%s201 + $0x18] sm:$0xff]
    %206 = vmatpush.msra.mxu0 0.0
    %207 = vmatpush.msra.mxu0 0.0
    %208 = vmatpush.msra.mxu0 0.0
    %209 = vmatpush.msra.mxu0 0.0
    %210 = vmatpush.msra.mxu0 0.0
    %211 = vmatpush.msra.mxu0 0.0
    %212 = vmatpush.msra.mxu0 0.0
    %213 = vmatpush.msra.mxu0 0.0
    %214 = vmatpush.msra.mxu0 0.0
    %215 = vmatpush.msra.mxu0 0.0
    %216 = vmatpush.msra.mxu0 0.0
    %217 = vmatpush.msra.mxu0 0.0
    %218 = vmatpush.msra.mxu0 %v205
    %219 = vmatpush.msra.mxu0 %v204
    %220 = vmatpush.msra.mxu0 %v203
    %221 = vmatpush.msra.mxu0 %v202
    %222 = vmatmul.f32.gmra.mxu0 %v30
    %v223 = vpop.f32.mrf.mxu0
    %v224 = vadd.f32 0.0, %v223
    %225 = vdwg.mxu0
    %v226 = vld [vmem:[%s3] sm:$0x1]
    %v228 = vperm.slane %v226, 0
    %v230 = vadd.f32 %v228, %v224
    %v231 = vld [vmem:[%s1] sm:$0xff]
    %v232 = vld [vmem:[%s1 + $0x8] sm:$0xff]
    %v233 = vld [vmem:[%s1 + $0x10] sm:$0xff]
    %v234 = vld [vmem:[%s1 + $0x18] sm:$0xff]
    %v236 = vsel %vm28, %v200, 0
    %238 = vmatpush.msra.mxu0 0.0
    %239 = vmatpush.msra.mxu0 0.0
    %240 = vmatpush.msra.mxu0 0.0
    %241 = vmatpush.msra.mxu0 0.0
    %242 = vmatpush.msra.mxu0 0.0
    %243 = vmatpush.msra.mxu0 0.0
    %244 = vmatpush.msra.mxu0 0.0
    %245 = vmatpush.msra.mxu0 0.0
    %246 = vmatpush.msra.mxu0 0.0
    %247 = vmatpush.msra.mxu0 0.0
    %248 = vmatpush.msra.mxu0 0.0
    %249 = vmatpush.msra.mxu0 0.0
    %250 = vmatpush.msra.mxu0 %v234
    %251 = vmatpush.msra.mxu0 %v233
    %252 = vmatpush.msra.mxu0 %v232
    %253 = vmatpush.msra.mxu0 %v231
    %254 = vmatmul.f32.gmra.mxu0 %v236
    %v255 = vpop.f32.mrf.mxu0
    %v256 = vadd.f32 0.0, %v255
    %257 = vdwg.mxu0
    %v258 = vadd.f32 %v230, %v256
    %s259 = scalar_lea.vmem %s2, 160
    %v260 = vld [vmem:[%s259] sm:$0xff]
    %v261 = vld [vmem:[%s259 + $0x8] sm:$0xff]
    %v262 = vld [vmem:[%s259 + $0x10] sm:$0xff]
    %v263 = vld [vmem:[%s259 + $0x18] sm:$0xff]
    %264 = vmatpush.msra.mxu0 0.0
    %265 = vmatpush.msra.mxu0 0.0
    %266 = vmatpush.msra.mxu0 0.0
    %267 = vmatpush.msra.mxu0 0.0
    %268 = vmatpush.msra.mxu0 0.0
    %269 = vmatpush.msra.mxu0 0.0
    %270 = vmatpush.msra.mxu0 0.0
    %271 = vmatpush.msra.mxu0 0.0
    %272 = vmatpush.msra.mxu0 0.0
    %273 = vmatpush.msra.mxu0 0.0
    %274 = vmatpush.msra.mxu0 0.0
    %275 = vmatpush.msra.mxu0 0.0
    %276 = vmatpush.msra.mxu0 %v263
    %277 = vmatpush.msra.mxu0 %v262
    %278 = vmatpush.msra.mxu0 %v261
    %279 = vmatpush.msra.mxu0 %v260
    %280 = vmatmul.f32.gmra.mxu0 %v30
    %v281 = vpop.f32.mrf.mxu0
    %v282 = vadd.f32 0.0, %v281
    %283 = vdwg.mxu0
    %s284 = scalar_lea.vmem %s3, 1
    %v285 = vld [vmem:[%s284] sm:$0x1]
    %v287 = vperm.slane %v285, 0
    %v289 = vadd.f32 %v287, %v282
    %s290 = scalar_lea.vmem %s1, 32
    %v291 = vld [vmem:[%s290] sm:$0xff]
    %v292 = vld [vmem:[%s290 + $0x8] sm:$0xff]
    %v293 = vld [vmem:[%s290 + $0x10] sm:$0xff]
    %v294 = vld [vmem:[%s290 + $0x18] sm:$0xff]
    %295 = vmatpush.msra.mxu0 0.0
    %296 = vmatpush.msra.mxu0 0.0
    %297 = vmatpush.msra.mxu0 0.0
    %298 = vmatpush.msra.mxu0 0.0
    %299 = vmatpush.msra.mxu0 0.0
    %300 = vmatpush.msra.mxu0 0.0
    %301 = vmatpush.msra.mxu0 0.0
    %302 = vmatpush.msra.mxu0 0.0
    %303 = vmatpush.msra.mxu0 0.0
    %304 = vmatpush.msra.mxu0 0.0
    %305 = vmatpush.msra.mxu0 0.0
    %306 = vmatpush.msra.mxu0 0.0
    %307 = vmatpush.msra.mxu0 %v294
    %308 = vmatpush.msra.mxu0 %v293
    %309 = vmatpush.msra.mxu0 %v292
    %310 = vmatpush.msra.mxu0 %v291
    %311 = vmatmul.f32.gmra.mxu0 %v236
    %v312 = vpop.f32.mrf.mxu0
    %v313 = vadd.f32 0.0, %v312
    %314 = vdwg.mxu0
    %v315 = vadd.f32 %v289, %v313
    %s316 = scalar_lea.vmem %s2, 192
    %v317 = vld [vmem:[%s316] sm:$0xff]
    %v318 = vld [vmem:[%s316 + $0x8] sm:$0xff]
    %v319 = vld [vmem:[%s316 + $0x10] sm:$0xff]
    %v320 = vld [vmem:[%s316 + $0x18] sm:$0xff]
    %321 = vmatpush.msra.mxu0 0.0
    %322 = vmatpush.msra.mxu0 0.0
    %323 = vmatpush.msra.mxu0 0.0
    %324 = vmatpush.msra.mxu0 0.0
    %325 = vmatpush.msra.mxu0 0.0
    %326 = vmatpush.msra.mxu0 0.0
    %327 = vmatpush.msra.mxu0 0.0
    %328 = vmatpush.msra.mxu0 0.0
    %329 = vmatpush.msra.mxu0 0.0
    %330 = vmatpush.msra.mxu0 0.0
    %331 = vmatpush.msra.mxu0 0.0
    %332 = vmatpush.msra.mxu0 0.0
    %333 = vmatpush.msra.mxu0 %v320
    %334 = vmatpush.msra.mxu0 %v319
    %335 = vmatpush.msra.mxu0 %v318
    %336 = vmatpush.msra.mxu0 %v317
    %337 = vmatmul.f32.gmra.mxu0 %v30
    %v338 = vpop.f32.mrf.mxu0
    %v339 = vadd.f32 0.0, %v338
    %340 = vdwg.mxu0
    %s341 = scalar_lea.vmem %s3, 2
    %v342 = vld [vmem:[%s341] sm:$0x1]
    %v344 = vperm.slane %v342, 0
    %v346 = vadd.f32 %v344, %v339
    %s347 = scalar_lea.vmem %s1, 64
    %v348 = vld [vmem:[%s347] sm:$0xff]
    %v349 = vld [vmem:[%s347 + $0x8] sm:$0xff]
    %v350 = vld [vmem:[%s347 + $0x10] sm:$0xff]
    %v351 = vld [vmem:[%s347 + $0x18] sm:$0xff]
    %352 = vmatpush.msra.mxu0 0.0
    %353 = vmatpush.msra.mxu0 0.0
    %354 = vmatpush.msra.mxu0 0.0
    %355 = vmatpush.msra.mxu0 0.0
    %356 = vmatpush.msra.mxu0 0.0
    %357 = vmatpush.msra.mxu0 0.0
    %358 = vmatpush.msra.mxu0 0.0
    %359 = vmatpush.msra.mxu0 0.0
    %360 = vmatpush.msra.mxu0 0.0
    %361 = vmatpush.msra.mxu0 0.0
    %362 = vmatpush.msra.mxu0 0.0
    %363 = vmatpush.msra.mxu0 0.0
    %364 = vmatpush.msra.mxu0 %v351
    %365 = vmatpush.msra.mxu0 %v350
    %366 = vmatpush.msra.mxu0 %v349
    %367 = vmatpush.msra.mxu0 %v348
    %368 = vmatmul.f32.gmra.mxu0 %v236
    %v369 = vpop.f32.mrf.mxu0
    %v370 = vadd.f32 0.0, %v369
    %371 = vdwg.mxu0
    %v372 = vadd.f32 %v346, %v370
    %s373 = scalar_lea.vmem %s2, 224
    %v374 = vld [vmem:[%s373] sm:$0xff]
    %v375 = vld [vmem:[%s373 + $0x8] sm:$0xff]
    %v376 = vld [vmem:[%s373 + $0x10] sm:$0xff]
    %v377 = vld [vmem:[%s373 + $0x18] sm:$0xff]
    %378 = vmatpush.msra.mxu0 0.0
    %379 = vmatpush.msra.mxu0 0.0
    %380 = vmatpush.msra.mxu0 0.0
    %381 = vmatpush.msra.mxu0 0.0
    %382 = vmatpush.msra.mxu0 0.0
    %383 = vmatpush.msra.mxu0 0.0
    %384 = vmatpush.msra.mxu0 0.0
    %385 = vmatpush.msra.mxu0 0.0
    %386 = vmatpush.msra.mxu0 0.0
    %387 = vmatpush.msra.mxu0 0.0
    %388 = vmatpush.msra.mxu0 0.0
    %389 = vmatpush.msra.mxu0 0.0
    %390 = vmatpush.msra.mxu0 %v377
    %391 = vmatpush.msra.mxu0 %v376
    %392 = vmatpush.msra.mxu0 %v375
    %393 = vmatpush.msra.mxu0 %v374
    %394 = vmatmul.f32.gmra.mxu0 %v30
    %v395 = vpop.f32.mrf.mxu0
    %v396 = vadd.f32 0.0, %v395
    %397 = vdwg.mxu0
    %s398 = scalar_lea.vmem %s3, 3
    %v399 = vld [vmem:[%s398] sm:$0x1]
    %v401 = vperm.slane %v399, 0
    %v403 = vadd.f32 %v401, %v396
    %s404 = scalar_lea.vmem %s1, 96
    %v405 = vld [vmem:[%s404] sm:$0xff]
    %v406 = vld [vmem:[%s404 + $0x8] sm:$0xff]
    %v407 = vld [vmem:[%s404 + $0x10] sm:$0xff]
    %v408 = vld [vmem:[%s404 + $0x18] sm:$0xff]
    %409 = vmatpush.msra.mxu0 0.0
    %410 = vmatpush.msra.mxu0 0.0
    %411 = vmatpush.msra.mxu0 0.0
    %412 = vmatpush.msra.mxu0 0.0
    %413 = vmatpush.msra.mxu0 0.0
    %414 = vmatpush.msra.mxu0 0.0
    %415 = vmatpush.msra.mxu0 0.0
    %416 = vmatpush.msra.mxu0 0.0
    %417 = vmatpush.msra.mxu0 0.0
    %418 = vmatpush.msra.mxu0 0.0
    %419 = vmatpush.msra.mxu0 0.0
    %420 = vmatpush.msra.mxu0 0.0
    %421 = vmatpush.msra.mxu0 %v408
    %422 = vmatpush.msra.mxu0 %v407
    %423 = vmatpush.msra.mxu0 %v406
    %424 = vmatpush.msra.mxu0 %v405
    %425 = vmatmul.f32.gmra.mxu0 %v236
    %v426 = vpop.f32.mrf.mxu0
    %v427 = vadd.f32 0.0, %v426
    %428 = vdwg.mxu0
    %v429 = vadd.f32 %v403, %v427
    %v430 = vxor.u32 %v258, 2147483648
    %v431 = vmul.f32 %v430, 1.442695
    %v432 = vpow.pop %v431
    %v433 = vadd.f32 %v432, 1.0
    %v434 = vrcp.pop %v433
    %v435 = vmul.f32 %v433, %v434
    %v436 = vsub.f32 1.0, %v435
    %v437 = vmul.f32 %v434, %v436
    %v438 = vadd.f32 %v434, %v437
    %vm439 = vweird.f32 %v433
    %vm440 = vweird.f32 %v434
    %vm441 = vmor %vm439, %vm440
    %v442 = vsel %vm441, %v434, %v438
    %v443 = vand.u32 2147483647, %v433
    %vm444 = vcmp.eq.f32.partialorder %v443, 8.507059e+37
    %v445 = vand.u32 %v433, 2147483648
    %v446 = vor.u32 1.1754944e-38, %v445
    %v447 = vsel %vm444, %v446, %v442
    %v448 = vmul.f32 1.0, %v447
    %v449 = vxor.u32 %v315, 2147483648
    %v450 = vmul.f32 %v449, 1.442695
    %v451 = vpow.pop %v450
    %v452 = vadd.f32 %v451, 1.0
    %v453 = vrcp.pop %v452
    %v454 = vmul.f32 %v452, %v453
    %v455 = vsub.f32 1.0, %v454
    %v456 = vmul.f32 %v453, %v455
    %v457 = vadd.f32 %v453, %v456
    %vm458 = vweird.f32 %v452
    %vm459 = vweird.f32 %v453
    %vm460 = vmor %vm458, %vm459
    %v461 = vsel %vm460, %v453, %v457
    %v462 = vand.u32 2147483647, %v452
    %vm463 = vcmp.eq.f32.partialorder %v462, 8.507059e+37
    %v464 = vand.u32 %v452, 2147483648
    %v465 = vor.u32 1.1754944e-38, %v464
    %v466 = vsel %vm463, %v465, %v461
    %v467 = vmul.f32 1.0, %v466
    %v468 = vtanh.pop %v372
    %v469 = vxor.u32 %v429, 2147483648
    %v470 = vmul.f32 %v469, 1.442695
    %v471 = vpow.pop %v470
    %v472 = vadd.f32 %v471, 1.0
    %v473 = vrcp.pop %v472
    %v474 = vmul.f32 %v472, %v473
    %v475 = vsub.f32 1.0, %v474
    %v476 = vmul.f32 %v473, %v475
    %v477 = vadd.f32 %v473, %v476
    %vm478 = vweird.f32 %v472
    %vm479 = vweird.f32 %v473
    %vm480 = vmor %vm478, %vm479
    %v481 = vsel %vm480, %v473, %v477
    %v482 = vand.u32 2147483647, %v472
    %vm483 = vcmp.eq.f32.partialorder %v482, 8.507059e+37
    %v484 = vand.u32 %v472, 2147483648
    %v485 = vor.u32 1.1754944e-38, %v484
    %v486 = vsel %vm483, %v485, %v481
    %v487 = vmul.f32 1.0, %v486
    %v488 = vmul.f32 %v467, 0.0
    %v489 = vmul.f32 %v448, %v468
    %v490 = vadd.f32 %v488, %v489
    %v491 = vtanh.pop %v490
    %v492 = vmul.f32 %v487, %v491
    %493 = vmatpush.msra.mxu0 0.0
    %494 = vmatpush.msra.mxu0 0.0
    %495 = vmatpush.msra.mxu0 0.0
    %496 = vmatpush.msra.mxu0 0.0
    %497 = vmatpush.msra.mxu0 0.0
    %498 = vmatpush.msra.mxu0 0.0
    %499 = vmatpush.msra.mxu0 0.0
    %500 = vmatpush.msra.mxu0 0.0
    %501 = vmatpush.msra.mxu0 0.0
    %502 = vmatpush.msra.mxu0 0.0
    %503 = vmatpush.msra.mxu0 0.0
    %504 = vmatpush.msra.mxu0 0.0
    %505 = vmatpush.msra.mxu0 %v27
    %506 = vmatpush.msra.mxu0 %v26
    %507 = vmatpush.msra.mxu0 %v25
    %508 = vmatpush.msra.mxu0 %v24
    %509 = vmatmul.f32.gmra.mxu0 %v236
    %v510 = vpop.f32.mrf.mxu0
    %v511 = vadd.f32 0.0, %v510
    %512 = vdwg.mxu0
    %s513 = scalar_lea.vmem %s0, 8
    %v514 = vld [vmem:[%s513] sm:$0x3]
    %v515 = vadd.f32 %v514, %v511
    %516 = vmatpush.msra.mxu0 0.0
    %517 = vmatpush.msra.mxu0 0.0
    %518 = vmatpush.msra.mxu0 0.0
    %519 = vmatpush.msra.mxu0 0.0
    %520 = vmatpush.msra.mxu0 0.0
    %521 = vmatpush.msra.mxu0 0.0
    %522 = vmatpush.msra.mxu0 0.0
    %523 = vmatpush.msra.mxu0 0.0
    %524 = vmatpush.msra.mxu0 0.0
    %525 = vmatpush.msra.mxu0 0.0
    %526 = vmatpush.msra.mxu0 0.0
    %527 = vmatpush.msra.mxu0 0.0
    %528 = vmatpush.msra.mxu0 %v58
    %529 = vmatpush.msra.mxu0 %v57
    %530 = vmatpush.msra.mxu0 %v56
    %531 = vmatpush.msra.mxu0 %v55
    %532 = vmatmul.f32.gmra.mxu0 %v236
    %v533 = vpop.f32.mrf.mxu0
    %v534 = vadd.f32 0.0, %v533
    %535 = vdwg.mxu0
    %s536 = scalar_lea.vmem %s0, 10
    %v537 = vld [vmem:[%s536] sm:$0x3]
    %v538 = vadd.f32 %v537, %v534
    %539 = vmatpush.msra.mxu0 0.0
    %540 = vmatpush.msra.mxu0 0.0
    %541 = vmatpush.msra.mxu0 0.0
    %542 = vmatpush.msra.mxu0 0.0
    %543 = vmatpush.msra.mxu0 0.0
    %544 = vmatpush.msra.mxu0 0.0
    %545 = vmatpush.msra.mxu0 0.0
    %546 = vmatpush.msra.mxu0 0.0
    %547 = vmatpush.msra.mxu0 0.0
    %548 = vmatpush.msra.mxu0 0.0
    %549 = vmatpush.msra.mxu0 0.0
    %550 = vmatpush.msra.mxu0 0.0
    %551 = vmatpush.msra.mxu0 %v86
    %552 = vmatpush.msra.mxu0 %v85
    %553 = vmatpush.msra.mxu0 %v84
    %554 = vmatpush.msra.mxu0 %v83
    %555 = vmatmul.f32.gmra.mxu0 %v236
    %v556 = vpop.f32.mrf.mxu0
    %v557 = vadd.f32 0.0, %v556
    %558 = vdwg.mxu0
    %s559 = scalar_lea.vmem %s0, 12
    %v560 = vld [vmem:[%s559] sm:$0x3]
    %v561 = vadd.f32 %v560, %v557
    %562 = vmatpush.msra.mxu0 0.0
    %563 = vmatpush.msra.mxu0 0.0
    %564 = vmatpush.msra.mxu0 0.0
    %565 = vmatpush.msra.mxu0 0.0
    %566 = vmatpush.msra.mxu0 0.0
    %567 = vmatpush.msra.mxu0 0.0
    %568 = vmatpush.msra.mxu0 0.0
    %569 = vmatpush.msra.mxu0 0.0
    %570 = vmatpush.msra.mxu0 0.0
    %571 = vmatpush.msra.mxu0 0.0
    %572 = vmatpush.msra.mxu0 0.0
    %573 = vmatpush.msra.mxu0 0.0
    %574 = vmatpush.msra.mxu0 %v114
    %575 = vmatpush.msra.mxu0 %v113
    %576 = vmatpush.msra.mxu0 %v112
    %577 = vmatpush.msra.mxu0 %v111
    %578 = vmatmul.f32.gmra.mxu0 %v236
    %v579 = vpop.f32.mrf.mxu0
    %v580 = vadd.f32 0.0, %v579
    %581 = vdwg.mxu0
    %s582 = scalar_lea.vmem %s0, 14
    %v583 = vld [vmem:[%s582] sm:$0x3]
    %v584 = vadd.f32 %v583, %v580
    %v585 = vxor.u32 %v515, 2147483648
    %v586 = vmul.f32 %v585, 1.442695
    %v587 = vpow.pop %v586
    %v588 = vadd.f32 %v587, 1.0
    %v589 = vrcp.pop %v588
    %v590 = vmul.f32 %v588, %v589
    %v591 = vsub.f32 1.0, %v590
    %v592 = vmul.f32 %v589, %v591
    %v593 = vadd.f32 %v589, %v592
    %vm594 = vweird.f32 %v588
    %vm595 = vweird.f32 %v589
    %vm596 = vmor %vm594, %vm595
    %v597 = vsel %vm596, %v589, %v593
    %v598 = vand.u32 2147483647, %v588
    %vm599 = vcmp.eq.f32.partialorder %v598, 8.507059e+37
    %v600 = vand.u32 %v588, 2147483648
    %v601 = vor.u32 1.1754944e-38, %v600
    %v602 = vsel %vm599, %v601, %v597
    %v603 = vmul.f32 1.0, %v602
    %v604 = vxor.u32 %v538, 2147483648
    %v605 = vmul.f32 %v604, 1.442695
    %v606 = vpow.pop %v605
    %v607 = vadd.f32 %v606, 1.0
    %v608 = vrcp.pop %v607
    %v609 = vmul.f32 %v607, %v608
    %v610 = vsub.f32 1.0, %v609
    %v611 = vmul.f32 %v608, %v610
    %v612 = vadd.f32 %v608, %v611
    %vm613 = vweird.f32 %v607
    %vm614 = vweird.f32 %v608
    %vm615 = vmor %vm613, %vm614
    %v616 = vsel %vm615, %v608, %v612
    %v617 = vand.u32 2147483647, %v607
    %vm618 = vcmp.eq.f32.partialorder %v617, 8.507059e+37
    %v619 = vand.u32 %v607, 2147483648
    %v620 = vor.u32 1.1754944e-38, %v619
    %v621 = vsel %vm618, %v620, %v616
    %v622 = vmul.f32 1.0, %v621
    %v623 = vtanh.pop %v561
    %v624 = vxor.u32 %v584, 2147483648
    %v625 = vmul.f32 %v624, 1.442695
    %v626 = vpow.pop %v625
    %v627 = vadd.f32 %v626, 1.0
    %v628 = vrcp.pop %v627
    %v629 = vmul.f32 %v627, %v628
    %v630 = vsub.f32 1.0, %v629
    %v631 = vmul.f32 %v628, %v630
    %v632 = vadd.f32 %v628, %v631
    %vm633 = vweird.f32 %v627
    %vm634 = vweird.f32 %v628
    %vm635 = vmor %vm633, %vm634
    %v636 = vsel %vm635, %v628, %v632
    %v637 = vand.u32 2147483647, %v627
    %vm638 = vcmp.eq.f32.partialorder %v637, 8.507059e+37
    %v639 = vand.u32 %v627, 2147483648
    %v640 = vor.u32 1.1754944e-38, %v639
    %v641 = vsel %vm638, %v640, %v636
    %v642 = vmul.f32 1.0, %v641
    %v643 = vmul.f32 %v622, %v198
    %v644 = vmul.f32 %v603, %v623
    %v645 = vadd.f32 %v643, %v644
    %v646 = vtanh.pop %v645
    %v647 = vmul.f32 %v642, %v646
    %v649 = vsel %vm28, %v492, 0
    %651 = vmatpush.msra.mxu0 0.0
    %652 = vmatpush.msra.mxu0 0.0
    %653 = vmatpush.msra.mxu0 0.0
    %654 = vmatpush.msra.mxu0 0.0
    %655 = vmatpush.msra.mxu0 0.0
    %656 = vmatpush.msra.mxu0 0.0
    %657 = vmatpush.msra.mxu0 0.0
    %658 = vmatpush.msra.mxu0 0.0
    %659 = vmatpush.msra.mxu0 0.0
    %660 = vmatpush.msra.mxu0 0.0
    %661 = vmatpush.msra.mxu0 0.0
    %662 = vmatpush.msra.mxu0 0.0
    %663 = vmatpush.msra.mxu0 %v205
    %664 = vmatpush.msra.mxu0 %v204
    %665 = vmatpush.msra.mxu0 %v203
    %666 = vmatpush.msra.mxu0 %v202
    %667 = vmatmul.f32.gmra.mxu0 %v649
    %v668 = vpop.f32.mrf.mxu0
    %v669 = vadd.f32 0.0, %v668
    %670 = vdwg.mxu0
    %v671 = vadd.f32 %v228, %v669
    %v673 = vsel %vm28, %v647, 0
    %675 = vmatpush.msra.mxu0 0.0
    %676 = vmatpush.msra.mxu0 0.0
    %677 = vmatpush.msra.mxu0 0.0
    %678 = vmatpush.msra.mxu0 0.0
    %679 = vmatpush.msra.mxu0 0.0
    %680 = vmatpush.msra.mxu0 0.0
    %681 = vmatpush.msra.mxu0 0.0
    %682 = vmatpush.msra.mxu0 0.0
    %683 = vmatpush.msra.mxu0 0.0
    %684 = vmatpush.msra.mxu0 0.0
    %685 = vmatpush.msra.mxu0 0.0
    %686 = vmatpush.msra.mxu0 0.0
    %687 = vmatpush.msra.mxu0 %v234
    %688 = vmatpush.msra.mxu0 %v233
    %689 = vmatpush.msra.mxu0 %v232
    %690 = vmatpush.msra.mxu0 %v231
    %691 = vmatmul.f32.gmra.mxu0 %v673
    %v692 = vpop.f32.mrf.mxu0
    %v693 = vadd.f32 0.0, %v692
    %694 = vdwg.mxu0
    %v695 = vadd.f32 %v671, %v693
    %696 = vmatpush.msra.mxu0 0.0
    %697 = vmatpush.msra.mxu0 0.0
    %698 = vmatpush.msra.mxu0 0.0
    %699 = vmatpush.msra.mxu0 0.0
    %700 = vmatpush.msra.mxu0 0.0
    %701 = vmatpush.msra.mxu0 0.0
    %702 = vmatpush.msra.mxu0 0.0
    %703 = vmatpush.msra.mxu0 0.0
    %704 = vmatpush.msra.mxu0 0.0
    %705 = vmatpush.msra.mxu0 0.0
    %706 = vmatpush.msra.mxu0 0.0
    %707 = vmatpush.msra.mxu0 0.0
    %708 = vmatpush.msra.mxu0 %v263
    %709 = vmatpush.msra.mxu0 %v262
    %710 = vmatpush.msra.mxu0 %v261
    %711 = vmatpush.msra.mxu0 %v260
    %712 = vmatmul.f32.gmra.mxu0 %v649
    %v713 = vpop.f32.mrf.mxu0
    %v714 = vadd.f32 0.0, %v713
    %715 = vdwg.mxu0
    %v716 = vadd.f32 %v287, %v714
    %717 = vmatpush.msra.mxu0 0.0
    %718 = vmatpush.msra.mxu0 0.0
    %719 = vmatpush.msra.mxu0 0.0
    %720 = vmatpush.msra.mxu0 0.0
    %721 = vmatpush.msra.mxu0 0.0
    %722 = vmatpush.msra.mxu0 0.0
    %723 = vmatpush.msra.mxu0 0.0
    %724 = vmatpush.msra.mxu0 0.0
    %725 = vmatpush.msra.mxu0 0.0
    %726 = vmatpush.msra.mxu0 0.0
    %727 = vmatpush.msra.mxu0 0.0
    %728 = vmatpush.msra.mxu0 0.0
    %729 = vmatpush.msra.mxu0 %v294
    %730 = vmatpush.msra.mxu0 %v293
    %731 = vmatpush.msra.mxu0 %v292
    %732 = vmatpush.msra.mxu0 %v291
    %733 = vmatmul.f32.gmra.mxu0 %v673
    %v734 = vpop.f32.mrf.mxu0
    %v735 = vadd.f32 0.0, %v734
    %736 = vdwg.mxu0
    %v737 = vadd.f32 %v716, %v735
    %738 = vmatpush.msra.mxu0 0.0
    %739 = vmatpush.msra.mxu0 0.0
    %740 = vmatpush.msra.mxu0 0.0
    %741 = vmatpush.msra.mxu0 0.0
    %742 = vmatpush.msra.mxu0 0.0
    %743 = vmatpush.msra.mxu0 0.0
    %744 = vmatpush.msra.mxu0 0.0
    %745 = vmatpush.msra.mxu0 0.0
    %746 = vmatpush.msra.mxu0 0.0
    %747 = vmatpush.msra.mxu0 0.0
    %748 = vmatpush.msra.mxu0 0.0
    %749 = vmatpush.msra.mxu0 0.0
    %750 = vmatpush.msra.mxu0 %v320
    %751 = vmatpush.msra.mxu0 %v319
    %752 = vmatpush.msra.mxu0 %v318
    %753 = vmatpush.msra.mxu0 %v317
    %754 = vmatmul.f32.gmra.mxu0 %v649
    %v755 = vpop.f32.mrf.mxu0
    %v756 = vadd.f32 0.0, %v755
    %757 = vdwg.mxu0
    %v758 = vadd.f32 %v344, %v756
    %759 = vmatpush.msra.mxu0 0.0
    %760 = vmatpush.msra.mxu0 0.0
    %761 = vmatpush.msra.mxu0 0.0
    %762 = vmatpush.msra.mxu0 0.0
    %763 = vmatpush.msra.mxu0 0.0
    %764 = vmatpush.msra.mxu0 0.0
    %765 = vmatpush.msra.mxu0 0.0
    %766 = vmatpush.msra.mxu0 0.0
    %767 = vmatpush.msra.mxu0 0.0
    %768 = vmatpush.msra.mxu0 0.0
    %769 = vmatpush.msra.mxu0 0.0
    %770 = vmatpush.msra.mxu0 0.0
    %771 = vmatpush.msra.mxu0 %v351
    %772 = vmatpush.msra.mxu0 %v350
    %773 = vmatpush.msra.mxu0 %v349
    %774 = vmatpush.msra.mxu0 %v348
    %775 = vmatmul.f32.gmra.mxu0 %v673
    %v776 = vpop.f32.mrf.mxu0
    %v777 = vadd.f32 0.0, %v776
    %778 = vdwg.mxu0
    %v779 = vadd.f32 %v758, %v777
    %780 = vmatpush.msra.mxu0 0.0
    %781 = vmatpush.msra.mxu0 0.0
    %782 = vmatpush.msra.mxu0 0.0
    %783 = vmatpush.msra.mxu0 0.0
    %784 = vmatpush.msra.mxu0 0.0
    %785 = vmatpush.msra.mxu0 0.0
    %786 = vmatpush.msra.mxu0 0.0
    %787 = vmatpush.msra.mxu0 0.0
    %788 = vmatpush.msra.mxu0 0.0
    %789 = vmatpush.msra.mxu0 0.0
    %790 = vmatpush.msra.mxu0 0.0
    %791 = vmatpush.msra.mxu0 0.0
    %792 = vmatpush.msra.mxu0 %v377
    %793 = vmatpush.msra.mxu0 %v376
    %794 = vmatpush.msra.mxu0 %v375
    %795 = vmatpush.msra.mxu0 %v374
    %796 = vmatmul.f32.gmra.mxu0 %v649
    %v797 = vpop.f32.mrf.mxu0
    %v798 = vadd.f32 0.0, %v797
    %799 = vdwg.mxu0
    %v800 = vadd.f32 %v401, %v798
    %801 = vmatpush.msra.mxu0 0.0
    %802 = vmatpush.msra.mxu0 0.0
    %803 = vmatpush.msra.mxu0 0.0
    %804 = vmatpush.msra.mxu0 0.0
    %805 = vmatpush.msra.mxu0 0.0
    %806 = vmatpush.msra.mxu0 0.0
    %807 = vmatpush.msra.mxu0 0.0
    %808 = vmatpush.msra.mxu0 0.0
    %809 = vmatpush.msra.mxu0 0.0
    %810 = vmatpush.msra.mxu0 0.0
    %811 = vmatpush.msra.mxu0 0.0
    %812 = vmatpush.msra.mxu0 0.0
    %813 = vmatpush.msra.mxu0 %v408
    %814 = vmatpush.msra.mxu0 %v407
    %815 = vmatpush.msra.mxu0 %v406
    %816 = vmatpush.msra.mxu0 %v405
    %817 = vmatmul.f32.gmra.mxu0 %v673
    %v818 = vpop.f32.mrf.mxu0
    %v819 = vadd.f32 0.0, %v818
    %820 = vdwg.mxu0
    %v821 = vadd.f32 %v800, %v819
    %v822 = vxor.u32 %v695, 2147483648
    %v823 = vmul.f32 %v822, 1.442695
    %v824 = vpow.pop %v823
    %v825 = vadd.f32 %v824, 1.0
    %v826 = vrcp.pop %v825
    %v827 = vmul.f32 %v825, %v826
    %v828 = vsub.f32 1.0, %v827
    %v829 = vmul.f32 %v826, %v828
    %v830 = vadd.f32 %v826, %v829
    %vm831 = vweird.f32 %v825
    %vm832 = vweird.f32 %v826
    %vm833 = vmor %vm831, %vm832
    %v834 = vsel %vm833, %v826, %v830
    %v835 = vand.u32 2147483647, %v825
    %vm836 = vcmp.eq.f32.partialorder %v835, 8.507059e+37
    %v837 = vand.u32 %v825, 2147483648
    %v838 = vor.u32 1.1754944e-38, %v837
    %v839 = vsel %vm836, %v838, %v834
    %v840 = vmul.f32 1.0, %v839
    %v841 = vxor.u32 %v737, 2147483648
    %v842 = vmul.f32 %v841, 1.442695
    %v843 = vpow.pop %v842
    %v844 = vadd.f32 %v843, 1.0
    %v845 = vrcp.pop %v844
    %v846 = vmul.f32 %v844, %v845
    %v847 = vsub.f32 1.0, %v846
    %v848 = vmul.f32 %v845, %v847
    %v849 = vadd.f32 %v845, %v848
    %vm850 = vweird.f32 %v844
    %vm851 = vweird.f32 %v845
    %vm852 = vmor %vm850, %vm851
    %v853 = vsel %vm852, %v845, %v849
    %v854 = vand.u32 2147483647, %v844
    %vm855 = vcmp.eq.f32.partialorder %v854, 8.507059e+37
    %v856 = vand.u32 %v844, 2147483648
    %v857 = vor.u32 1.1754944e-38, %v856
    %v858 = vsel %vm855, %v857, %v853
    %v859 = vmul.f32 1.0, %v858
    %v860 = vtanh.pop %v779
    %v861 = vxor.u32 %v821, 2147483648
    %v862 = vmul.f32 %v861, 1.442695
    %v863 = vpow.pop %v862
    %v864 = vadd.f32 %v863, 1.0
    %v865 = vrcp.pop %v864
    %v866 = vmul.f32 %v864, %v865
    %v867 = vsub.f32 1.0, %v866
    %v868 = vmul.f32 %v865, %v867
    %v869 = vadd.f32 %v865, %v868
    %vm870 = vweird.f32 %v864
    %vm871 = vweird.f32 %v865
    %vm872 = vmor %vm870, %vm871
    %v873 = vsel %vm872, %v865, %v869
    %v874 = vand.u32 2147483647, %v864
    %vm875 = vcmp.eq.f32.partialorder %v874, 8.507059e+37
    %v876 = vand.u32 %v864, 2147483648
    %v877 = vor.u32 1.1754944e-38, %v876
    %v878 = vsel %vm875, %v877, %v873
    %v879 = vmul.f32 1.0, %v878
    %v880 = vmul.f32 %v859, %v490
    %v881 = vmul.f32 %v840, %v860
    %v882 = vadd.f32 %v880, %v881
    %v883 = vtanh.pop %v882
    %v884 = vmul.f32 %v879, %v883
    %885 = vmatpush.msra.mxu0 0.0
    %886 = vmatpush.msra.mxu0 0.0
    %887 = vmatpush.msra.mxu0 0.0
    %888 = vmatpush.msra.mxu0 0.0
    %889 = vmatpush.msra.mxu0 0.0
    %890 = vmatpush.msra.mxu0 0.0
    %891 = vmatpush.msra.mxu0 0.0
    %892 = vmatpush.msra.mxu0 0.0
    %893 = vmatpush.msra.mxu0 0.0
    %894 = vmatpush.msra.mxu0 0.0
    %895 = vmatpush.msra.mxu0 0.0
    %896 = vmatpush.msra.mxu0 0.0
    %897 = vmatpush.msra.mxu0 %v27
    %898 = vmatpush.msra.mxu0 %v26
    %899 = vmatpush.msra.mxu0 %v25
    %900 = vmatpush.msra.mxu0 %v24
    %901 = vmatmul.f32.gmra.mxu0 %v673
    %v902 = vpop.f32.mrf.mxu0
    %v903 = vadd.f32 0.0, %v902
    %904 = vdwg.mxu0
    %s905 = scalar_lea.vmem %s0, 16
    %v906 = vld [vmem:[%s905] sm:$0x3]
    %v907 = vadd.f32 %v906, %v903
    %908 = vmatpush.msra.mxu0 0.0
    %909 = vmatpush.msra.mxu0 0.0
    %910 = vmatpush.msra.mxu0 0.0
    %911 = vmatpush.msra.mxu0 0.0
    %912 = vmatpush.msra.mxu0 0.0
    %913 = vmatpush.msra.mxu0 0.0
    %914 = vmatpush.msra.mxu0 0.0
    %915 = vmatpush.msra.mxu0 0.0
    %916 = vmatpush.msra.mxu0 0.0
    %917 = vmatpush.msra.mxu0 0.0
    %918 = vmatpush.msra.mxu0 0.0
    %919 = vmatpush.msra.mxu0 0.0
    %920 = vmatpush.msra.mxu0 %v58
    %921 = vmatpush.msra.mxu0 %v57
    %922 = vmatpush.msra.mxu0 %v56
    %923 = vmatpush.msra.mxu0 %v55
    %924 = vmatmul.f32.gmra.mxu0 %v673
    %v925 = vpop.f32.mrf.mxu0
    %v926 = vadd.f32 0.0, %v925
    %927 = vdwg.mxu0
    %s928 = scalar_lea.vmem %s0, 18
    %v929 = vld [vmem:[%s928] sm:$0x3]
    %v930 = vadd.f32 %v929, %v926
    %931 = vmatpush.msra.mxu0 0.0
    %932 = vmatpush.msra.mxu0 0.0
    %933 = vmatpush.msra.mxu0 0.0
    %934 = vmatpush.msra.mxu0 0.0
    %935 = vmatpush.msra.mxu0 0.0
    %936 = vmatpush.msra.mxu0 0.0
    %937 = vmatpush.msra.mxu0 0.0
    %938 = vmatpush.msra.mxu0 0.0
    %939 = vmatpush.msra.mxu0 0.0
    %940 = vmatpush.msra.mxu0 0.0
    %941 = vmatpush.msra.mxu0 0.0
    %942 = vmatpush.msra.mxu0 0.0
    %943 = vmatpush.msra.mxu0 %v86
    %944 = vmatpush.msra.mxu0 %v85
    %945 = vmatpush.msra.mxu0 %v84
    %946 = vmatpush.msra.mxu0 %v83
    %947 = vmatmul.f32.gmra.mxu0 %v673
    %v948 = vpop.f32.mrf.mxu0
    %v949 = vadd.f32 0.0, %v948
    %950 = vdwg.mxu0
    %s951 = scalar_lea.vmem %s0, 20
    %v952 = vld [vmem:[%s951] sm:$0x3]
    %v953 = vadd.f32 %v952, %v949
    %954 = vmatpush.msra.mxu0 0.0
    %955 = vmatpush.msra.mxu0 0.0
    %956 = vmatpush.msra.mxu0 0.0
    %957 = vmatpush.msra.mxu0 0.0
    %958 = vmatpush.msra.mxu0 0.0
    %959 = vmatpush.msra.mxu0 0.0
    %960 = vmatpush.msra.mxu0 0.0
    %961 = vmatpush.msra.mxu0 0.0
    %962 = vmatpush.msra.mxu0 0.0
    %963 = vmatpush.msra.mxu0 0.0
    %964 = vmatpush.msra.mxu0 0.0
    %965 = vmatpush.msra.mxu0 0.0
    %966 = vmatpush.msra.mxu0 %v114
    %967 = vmatpush.msra.mxu0 %v113
    %968 = vmatpush.msra.mxu0 %v112
    %969 = vmatpush.msra.mxu0 %v111
    %970 = vmatmul.f32.gmra.mxu0 %v673
    %v971 = vpop.f32.mrf.mxu0
    %v972 = vadd.f32 0.0, %v971
    %973 = vdwg.mxu0
    %s974 = scalar_lea.vmem %s0, 22
    %v975 = vld [vmem:[%s974] sm:$0x3]
    %v976 = vadd.f32 %v975, %v972
    %v977 = vxor.u32 %v907, 2147483648
    %v978 = vmul.f32 %v977, 1.442695
    %v979 = vpow.pop %v978
    %v980 = vadd.f32 %v979, 1.0
    %v981 = vrcp.pop %v980
    %v982 = vmul.f32 %v980, %v981
    %v983 = vsub.f32 1.0, %v982
    %v984 = vmul.f32 %v981, %v983
    %v985 = vadd.f32 %v981, %v984
    %vm986 = vweird.f32 %v980
    %vm987 = vweird.f32 %v981
    %vm988 = vmor %vm986, %vm987
    %v989 = vsel %vm988, %v981, %v985
    %v990 = vand.u32 2147483647, %v980
    %vm991 = vcmp.eq.f32.partialorder %v990, 8.507059e+37
    %v992 = vand.u32 %v980, 2147483648
    %v993 = vor.u32 1.1754944e-38, %v992
    %v994 = vsel %vm991, %v993, %v989
    %v995 = vmul.f32 1.0, %v994
    %v996 = vxor.u32 %v930, 2147483648
    %v997 = vmul.f32 %v996, 1.442695
    %v998 = vpow.pop %v997
    %v999 = vadd.f32 %v998, 1.0
    %v1000 = vrcp.pop %v999
    %v1001 = vmul.f32 %v999, %v1000
    %v1002 = vsub.f32 1.0, %v1001
    %v1003 = vmul.f32 %v1000, %v1002
    %v1004 = vadd.f32 %v1000, %v1003
    %vm1005 = vweird.f32 %v999
    %vm1006 = vweird.f32 %v1000
    %vm1007 = vmor %vm1005, %vm1006
    %v1008 = vsel %vm1007, %v1000, %v1004
    %v1009 = vand.u32 2147483647, %v999
    %vm1010 = vcmp.eq.f32.partialorder %v1009, 8.507059e+37
    %v1011 = vand.u32 %v999, 2147483648
    %v1012 = vor.u32 1.1754944e-38, %v1011
    %v1013 = vsel %vm1010, %v1012, %v1008
    %v1014 = vmul.f32 1.0, %v1013
    %v1015 = vtanh.pop %v953
    %v1016 = vxor.u32 %v976, 2147483648
    %v1017 = vmul.f32 %v1016, 1.442695
    %v1018 = vpow.pop %v1017
    %v1019 = vadd.f32 %v1018, 1.0
    %v1020 = vrcp.pop %v1019
    %v1021 = vmul.f32 %v1019, %v1020
    %v1022 = vsub.f32 1.0, %v1021
    %v1023 = vmul.f32 %v1020, %v1022
    %v1024 = vadd.f32 %v1020, %v1023
    %vm1025 = vweird.f32 %v1019
    %vm1026 = vweird.f32 %v1020
    %vm1027 = vmor %vm1025, %vm1026
    %v1028 = vsel %vm1027, %v1020, %v1024
    %v1029 = vand.u32 2147483647, %v1019
    %vm1030 = vcmp.eq.f32.partialorder %v1029, 8.507059e+37
    %v1031 = vand.u32 %v1019, 2147483648
    %v1032 = vor.u32 1.1754944e-38, %v1031
    %v1033 = vsel %vm1030, %v1032, %v1028
    %v1034 = vmul.f32 1.0, %v1033
    %v1035 = vmul.f32 %v1014, %v645
    %v1036 = vmul.f32 %v995, %v1015
    %v1037 = vadd.f32 %v1035, %v1036
    %v1038 = vtanh.pop %v1037
    %v1039 = vmul.f32 %v1034, %v1038
    %v1041 = vsel %vm28, %v884, 0
    %1043 = vmatpush.msra.mxu0 0.0
    %1044 = vmatpush.msra.mxu0 0.0
    %1045 = vmatpush.msra.mxu0 0.0
    %1046 = vmatpush.msra.mxu0 0.0
    %1047 = vmatpush.msra.mxu0 0.0
    %1048 = vmatpush.msra.mxu0 0.0
    %1049 = vmatpush.msra.mxu0 0.0
    %1050 = vmatpush.msra.mxu0 0.0
    %1051 = vmatpush.msra.mxu0 0.0
    %1052 = vmatpush.msra.mxu0 0.0
    %1053 = vmatpush.msra.mxu0 0.0
    %1054 = vmatpush.msra.mxu0 0.0
    %1055 = vmatpush.msra.mxu0 %v205
    %1056 = vmatpush.msra.mxu0 %v204
    %1057 = vmatpush.msra.mxu0 %v203
    %1058 = vmatpush.msra.mxu0 %v202
    %1059 = vmatmul.f32.gmra.mxu0 %v1041
    %v1060 = vpop.f32.mrf.mxu0
    %v1061 = vadd.f32 0.0, %v1060
    %1062 = vdwg.mxu0
    %v1063 = vadd.f32 %v228, %v1061
    %v1065 = vsel %vm28, %v1039, 0
    %1067 = vmatpush.msra.mxu0 0.0
    %1068 = vmatpush.msra.mxu0 0.0
    %1069 = vmatpush.msra.mxu0 0.0
    %1070 = vmatpush.msra.mxu0 0.0
    %1071 = vmatpush.msra.mxu0 0.0
    %1072 = vmatpush.msra.mxu0 0.0
    %1073 = vmatpush.msra.mxu0 0.0
    %1074 = vmatpush.msra.mxu0 0.0
    %1075 = vmatpush.msra.mxu0 0.0
    %1076 = vmatpush.msra.mxu0 0.0
    %1077 = vmatpush.msra.mxu0 0.0
    %1078 = vmatpush.msra.mxu0 0.0
    %1079 = vmatpush.msra.mxu0 %v234
    %1080 = vmatpush.msra.mxu0 %v233
    %1081 = vmatpush.msra.mxu0 %v232
    %1082 = vmatpush.msra.mxu0 %v231
    %1083 = vmatmul.f32.gmra.mxu0 %v1065
    %v1084 = vpop.f32.mrf.mxu0
    %v1085 = vadd.f32 0.0, %v1084
    %1086 = vdwg.mxu0
    %v1087 = vadd.f32 %v1063, %v1085
    %1088 = vmatpush.msra.mxu0 0.0
    %1089 = vmatpush.msra.mxu0 0.0
    %1090 = vmatpush.msra.mxu0 0.0
    %1091 = vmatpush.msra.mxu0 0.0
    %1092 = vmatpush.msra.mxu0 0.0
    %1093 = vmatpush.msra.mxu0 0.0
    %1094 = vmatpush.msra.mxu0 0.0
    %1095 = vmatpush.msra.mxu0 0.0
    %1096 = vmatpush.msra.mxu0 0.0
    %1097 = vmatpush.msra.mxu0 0.0
    %1098 = vmatpush.msra.mxu0 0.0
    %1099 = vmatpush.msra.mxu0 0.0
    %1100 = vmatpush.msra.mxu0 %v263
    %1101 = vmatpush.msra.mxu0 %v262
    %1102 = vmatpush.msra.mxu0 %v261
    %1103 = vmatpush.msra.mxu0 %v260
    %1104 = vmatmul.f32.gmra.mxu0 %v1041
    %v1105 = vpop.f32.mrf.mxu0
    %v1106 = vadd.f32 0.0, %v1105
    %1107 = vdwg.mxu0
    %v1108 = vadd.f32 %v287, %v1106
    %1109 = vmatpush.msra.mxu0 0.0
    %1110 = vmatpush.msra.mxu0 0.0
    %1111 = vmatpush.msra.mxu0 0.0
    %1112 = vmatpush.msra.mxu0 0.0
    %1113 = vmatpush.msra.mxu0 0.0
    %1114 = vmatpush.msra.mxu0 0.0
    %1115 = vmatpush.msra.mxu0 0.0
    %1116 = vmatpush.msra.mxu0 0.0
    %1117 = vmatpush.msra.mxu0 0.0
    %1118 = vmatpush.msra.mxu0 0.0
    %1119 = vmatpush.msra.mxu0 0.0
    %1120 = vmatpush.msra.mxu0 0.0
    %1121 = vmatpush.msra.mxu0 %v294
    %1122 = vmatpush.msra.mxu0 %v293
    %1123 = vmatpush.msra.mxu0 %v292
    %1124 = vmatpush.msra.mxu0 %v291
    %1125 = vmatmul.f32.gmra.mxu0 %v1065
    %v1126 = vpop.f32.mrf.mxu0
    %v1127 = vadd.f32 0.0, %v1126
    %1128 = vdwg.mxu0
    %v1129 = vadd.f32 %v1108, %v1127
    %1130 = vmatpush.msra.mxu0 0.0
    %1131 = vmatpush.msra.mxu0 0.0
    %1132 = vmatpush.msra.mxu0 0.0
    %1133 = vmatpush.msra.mxu0 0.0
    %1134 = vmatpush.msra.mxu0 0.0
    %1135 = vmatpush.msra.mxu0 0.0
    %1136 = vmatpush.msra.mxu0 0.0
    %1137 = vmatpush.msra.mxu0 0.0
    %1138 = vmatpush.msra.mxu0 0.0
    %1139 = vmatpush.msra.mxu0 0.0
    %1140 = vmatpush.msra.mxu0 0.0
    %1141 = vmatpush.msra.mxu0 0.0
    %1142 = vmatpush.msra.mxu0 %v320
    %1143 = vmatpush.msra.mxu0 %v319
    %1144 = vmatpush.msra.mxu0 %v318
    %1145 = vmatpush.msra.mxu0 %v317
    %1146 = vmatmul.f32.gmra.mxu0 %v1041
    %v1147 = vpop.f32.mrf.mxu0
    %v1148 = vadd.f32 0.0, %v1147
    %1149 = vdwg.mxu0
    %v1150 = vadd.f32 %v344, %v1148
    %1151 = vmatpush.msra.mxu0 0.0
    %1152 = vmatpush.msra.mxu0 0.0
    %1153 = vmatpush.msra.mxu0 0.0
    %1154 = vmatpush.msra.mxu0 0.0
    %1155 = vmatpush.msra.mxu0 0.0
    %1156 = vmatpush.msra.mxu0 0.0
    %1157 = vmatpush.msra.mxu0 0.0
    %1158 = vmatpush.msra.mxu0 0.0
    %1159 = vmatpush.msra.mxu0 0.0
    %1160 = vmatpush.msra.mxu0 0.0
    %1161 = vmatpush.msra.mxu0 0.0
    %1162 = vmatpush.msra.mxu0 0.0
    %1163 = vmatpush.msra.mxu0 %v351
    %1164 = vmatpush.msra.mxu0 %v350
    %1165 = vmatpush.msra.mxu0 %v349
    %1166 = vmatpush.msra.mxu0 %v348
    %1167 = vmatmul.f32.gmra.mxu0 %v1065
    %v1168 = vpop.f32.mrf.mxu0
    %v1169 = vadd.f32 0.0, %v1168
    %1170 = vdwg.mxu0
    %v1171 = vadd.f32 %v1150, %v1169
    %1172 = vmatpush.msra.mxu0 0.0
    %1173 = vmatpush.msra.mxu0 0.0
    %1174 = vmatpush.msra.mxu0 0.0
    %1175 = vmatpush.msra.mxu0 0.0
    %1176 = vmatpush.msra.mxu0 0.0
    %1177 = vmatpush.msra.mxu0 0.0
    %1178 = vmatpush.msra.mxu0 0.0
    %1179 = vmatpush.msra.mxu0 0.0
    %1180 = vmatpush.msra.mxu0 0.0
    %1181 = vmatpush.msra.mxu0 0.0
    %1182 = vmatpush.msra.mxu0 0.0
    %1183 = vmatpush.msra.mxu0 0.0
    %1184 = vmatpush.msra.mxu0 %v377
    %1185 = vmatpush.msra.mxu0 %v376
    %1186 = vmatpush.msra.mxu0 %v375
    %1187 = vmatpush.msra.mxu0 %v374
    %1188 = vmatmul.f32.gmra.mxu0 %v1041
    %v1189 = vpop.f32.mrf.mxu0
    %v1190 = vadd.f32 0.0, %v1189
    %1191 = vdwg.mxu0
    %v1192 = vadd.f32 %v401, %v1190
    %1193 = vmatpush.msra.mxu0 0.0
    %1194 = vmatpush.msra.mxu0 0.0
    %1195 = vmatpush.msra.mxu0 0.0
    %1196 = vmatpush.msra.mxu0 0.0
    %1197 = vmatpush.msra.mxu0 0.0
    %1198 = vmatpush.msra.mxu0 0.0
    %1199 = vmatpush.msra.mxu0 0.0
    %1200 = vmatpush.msra.mxu0 0.0
    %1201 = vmatpush.msra.mxu0 0.0
    %1202 = vmatpush.msra.mxu0 0.0
    %1203 = vmatpush.msra.mxu0 0.0
    %1204 = vmatpush.msra.mxu0 0.0
    %1205 = vmatpush.msra.mxu0 %v408
    %1206 = vmatpush.msra.mxu0 %v407
    %1207 = vmatpush.msra.mxu0 %v406
    %1208 = vmatpush.msra.mxu0 %v405
    %1209 = vmatmul.f32.gmra.mxu0 %v1065
    %v1210 = vpop.f32.mrf.mxu0
    %v1211 = vadd.f32 0.0, %v1210
    %1212 = vdwg.mxu0
    %v1213 = vadd.f32 %v1192, %v1211
    %v1214 = vxor.u32 %v1087, 2147483648
    %v1215 = vmul.f32 %v1214, 1.442695
    %v1216 = vpow.pop %v1215
    %v1217 = vadd.f32 %v1216, 1.0
    %v1218 = vrcp.pop %v1217
    %v1219 = vmul.f32 %v1217, %v1218
    %v1220 = vsub.f32 1.0, %v1219
    %v1221 = vmul.f32 %v1218, %v1220
    %v1222 = vadd.f32 %v1218, %v1221
    %vm1223 = vweird.f32 %v1217
    %vm1224 = vweird.f32 %v1218
    %vm1225 = vmor %vm1223, %vm1224
    %v1226 = vsel %vm1225, %v1218, %v1222
    %v1227 = vand.u32 2147483647, %v1217
    %vm1228 = vcmp.eq.f32.partialorder %v1227, 8.507059e+37
    %v1229 = vand.u32 %v1217, 2147483648
    %v1230 = vor.u32 1.1754944e-38, %v1229
    %v1231 = vsel %vm1228, %v1230, %v1226
    %v1232 = vmul.f32 1.0, %v1231
    %v1233 = vxor.u32 %v1129, 2147483648
    %v1234 = vmul.f32 %v1233, 1.442695
    %v1235 = vpow.pop %v1234
    %v1236 = vadd.f32 %v1235, 1.0
    %v1237 = vrcp.pop %v1236
    %v1238 = vmul.f32 %v1236, %v1237
    %v1239 = vsub.f32 1.0, %v1238
    %v1240 = vmul.f32 %v1237, %v1239
    %v1241 = vadd.f32 %v1237, %v1240
    %vm1242 = vweird.f32 %v1236
    %vm1243 = vweird.f32 %v1237
    %vm1244 = vmor %vm1242, %vm1243
    %v1245 = vsel %vm1244, %v1237, %v1241
    %v1246 = vand.u32 2147483647, %v1236
    %vm1247 = vcmp.eq.f32.partialorder %v1246, 8.507059e+37
    %v1248 = vand.u32 %v1236, 2147483648
    %v1249 = vor.u32 1.1754944e-38, %v1248
    %v1250 = vsel %vm1247, %v1249, %v1245
    %v1251 = vmul.f32 1.0, %v1250
    %v1252 = vtanh.pop %v1171
    %v1253 = vxor.u32 %v1213, 2147483648
    %v1254 = vmul.f32 %v1253, 1.442695
    %v1255 = vpow.pop %v1254
    %v1256 = vadd.f32 %v1255, 1.0
    %v1257 = vrcp.pop %v1256
    %v1258 = vmul.f32 %v1256, %v1257
    %v1259 = vsub.f32 1.0, %v1258
    %v1260 = vmul.f32 %v1257, %v1259
    %v1261 = vadd.f32 %v1257, %v1260
    %vm1262 = vweird.f32 %v1256
    %vm1263 = vweird.f32 %v1257
    %vm1264 = vmor %vm1262, %vm1263
    %v1265 = vsel %vm1264, %v1257, %v1261
    %v1266 = vand.u32 2147483647, %v1256
    %vm1267 = vcmp.eq.f32.partialorder %v1266, 8.507059e+37
    %v1268 = vand.u32 %v1256, 2147483648
    %v1269 = vor.u32 1.1754944e-38, %v1268
    %v1270 = vsel %vm1267, %v1269, %v1265
    %v1271 = vmul.f32 1.0, %v1270
    %v1272 = vmul.f32 %v1251, %v882
    %v1273 = vmul.f32 %v1232, %v1252
    %v1274 = vadd.f32 %v1272, %v1273
    %v1275 = vtanh.pop %v1274
    %v1276 = vmul.f32 %v1271, %v1275
    %1277 = vmatpush.msra.mxu0 0.0
    %1278 = vmatpush.msra.mxu0 0.0
    %1279 = vmatpush.msra.mxu0 0.0
    %1280 = vmatpush.msra.mxu0 0.0
    %1281 = vmatpush.msra.mxu0 0.0
    %1282 = vmatpush.msra.mxu0 0.0
    %1283 = vmatpush.msra.mxu0 0.0
    %1284 = vmatpush.msra.mxu0 0.0
    %1285 = vmatpush.msra.mxu0 0.0
    %1286 = vmatpush.msra.mxu0 0.0
    %1287 = vmatpush.msra.mxu0 0.0
    %1288 = vmatpush.msra.mxu0 0.0
    %1289 = vmatpush.msra.mxu0 %v27
    %1290 = vmatpush.msra.mxu0 %v26
    %1291 = vmatpush.msra.mxu0 %v25
    %1292 = vmatpush.msra.mxu0 %v24
    %1293 = vmatmul.f32.gmra.mxu0 %v1065
    %v1294 = vpop.f32.mrf.mxu0
    %v1295 = vadd.f32 0.0, %v1294
    %1296 = vdwg.mxu0
    %s1297 = scalar_lea.vmem %s0, 24
    %v1298 = vld [vmem:[%s1297] sm:$0x3]
    %v1299 = vadd.f32 %v1298, %v1295
    %1300 = vmatpush.msra.mxu0 0.0
    %1301 = vmatpush.msra.mxu0 0.0
    %1302 = vmatpush.msra.mxu0 0.0
    %1303 = vmatpush.msra.mxu0 0.0
    %1304 = vmatpush.msra.mxu0 0.0
    %1305 = vmatpush.msra.mxu0 0.0
    %1306 = vmatpush.msra.mxu0 0.0
    %1307 = vmatpush.msra.mxu0 0.0
    %1308 = vmatpush.msra.mxu0 0.0
    %1309 = vmatpush.msra.mxu0 0.0
    %1310 = vmatpush.msra.mxu0 0.0
    %1311 = vmatpush.msra.mxu0 0.0
    %1312 = vmatpush.msra.mxu0 %v58
    %1313 = vmatpush.msra.mxu0 %v57
    %1314 = vmatpush.msra.mxu0 %v56
    %1315 = vmatpush.msra.mxu0 %v55
    %1316 = vmatmul.f32.gmra.mxu0 %v1065
    %v1317 = vpop.f32.mrf.mxu0
    %v1318 = vadd.f32 0.0, %v1317
    %1319 = vdwg.mxu0
    %s1320 = scalar_lea.vmem %s0, 26
    %v1321 = vld [vmem:[%s1320] sm:$0x3]
    %v1322 = vadd.f32 %v1321, %v1318
    %1323 = vmatpush.msra.mxu0 0.0
    %1324 = vmatpush.msra.mxu0 0.0
    %1325 = vmatpush.msra.mxu0 0.0
    %1326 = vmatpush.msra.mxu0 0.0
    %1327 = vmatpush.msra.mxu0 0.0
    %1328 = vmatpush.msra.mxu0 0.0
    %1329 = vmatpush.msra.mxu0 0.0
    %1330 = vmatpush.msra.mxu0 0.0
    %1331 = vmatpush.msra.mxu0 0.0
    %1332 = vmatpush.msra.mxu0 0.0
    %1333 = vmatpush.msra.mxu0 0.0
    %1334 = vmatpush.msra.mxu0 0.0
    %1335 = vmatpush.msra.mxu0 %v86
    %1336 = vmatpush.msra.mxu0 %v85
    %1337 = vmatpush.msra.mxu0 %v84
    %1338 = vmatpush.msra.mxu0 %v83
    %1339 = vmatmul.f32.gmra.mxu0 %v1065
    %v1340 = vpop.f32.mrf.mxu0
    %v1341 = vadd.f32 0.0, %v1340
    %1342 = vdwg.mxu0
    %s1343 = scalar_lea.vmem %s0, 28
    %v1344 = vld [vmem:[%s1343] sm:$0x3]
    %v1345 = vadd.f32 %v1344, %v1341
    %1346 = vmatpush.msra.mxu0 0.0
    %1347 = vmatpush.msra.mxu0 0.0
    %1348 = vmatpush.msra.mxu0 0.0
    %1349 = vmatpush.msra.mxu0 0.0
    %1350 = vmatpush.msra.mxu0 0.0
    %1351 = vmatpush.msra.mxu0 0.0
    %1352 = vmatpush.msra.mxu0 0.0
    %1353 = vmatpush.msra.mxu0 0.0
    %1354 = vmatpush.msra.mxu0 0.0
    %1355 = vmatpush.msra.mxu0 0.0
    %1356 = vmatpush.msra.mxu0 0.0
    %1357 = vmatpush.msra.mxu0 0.0
    %1358 = vmatpush.msra.mxu0 %v114
    %1359 = vmatpush.msra.mxu0 %v113
    %1360 = vmatpush.msra.mxu0 %v112
    %1361 = vmatpush.msra.mxu0 %v111
    %1362 = vmatmul.f32.gmra.mxu0 %v1065
    %v1363 = vpop.f32.mrf.mxu0
    %v1364 = vadd.f32 0.0, %v1363
    %1365 = vdwg.mxu0
    %s1366 = scalar_lea.vmem %s0, 30
    %v1367 = vld [vmem:[%s1366] sm:$0x3]
    %v1368 = vadd.f32 %v1367, %v1364
    %v1369 = vxor.u32 %v1299, 2147483648
    %v1370 = vmul.f32 %v1369, 1.442695
    %v1371 = vpow.pop %v1370
    %v1372 = vadd.f32 %v1371, 1.0
    %v1373 = vrcp.pop %v1372
    %v1374 = vmul.f32 %v1372, %v1373
    %v1375 = vsub.f32 1.0, %v1374
    %v1376 = vmul.f32 %v1373, %v1375
    %v1377 = vadd.f32 %v1373, %v1376
    %vm1378 = vweird.f32 %v1372
    %vm1379 = vweird.f32 %v1373
    %vm1380 = vmor %vm1378, %vm1379
    %v1381 = vsel %vm1380, %v1373, %v1377
    %v1382 = vand.u32 2147483647, %v1372
    %vm1383 = vcmp.eq.f32.partialorder %v1382, 8.507059e+37
    %v1384 = vand.u32 %v1372, 2147483648
    %v1385 = vor.u32 1.1754944e-38, %v1384
    %v1386 = vsel %vm1383, %v1385, %v1381
    %v1387 = vmul.f32 1.0, %v1386
    %v1388 = vxor.u32 %v1322, 2147483648
    %v1389 = vmul.f32 %v1388, 1.442695
    %v1390 = vpow.pop %v1389
    %v1391 = vadd.f32 %v1390, 1.0
    %v1392 = vrcp.pop %v1391
    %v1393 = vmul.f32 %v1391, %v1392
    %v1394 = vsub.f32 1.0, %v1393
    %v1395 = vmul.f32 %v1392, %v1394
    %v1396 = vadd.f32 %v1392, %v1395
    %vm1397 = vweird.f32 %v1391
    %vm1398 = vweird.f32 %v1392
    %vm1399 = vmor %vm1397, %vm1398
    %v1400 = vsel %vm1399, %v1392, %v1396
    %v1401 = vand.u32 2147483647, %v1391
    %vm1402 = vcmp.eq.f32.partialorder %v1401, 8.507059e+37
    %v1403 = vand.u32 %v1391, 2147483648
    %v1404 = vor.u32 1.1754944e-38, %v1403
    %v1405 = vsel %vm1402, %v1404, %v1400
    %v1406 = vmul.f32 1.0, %v1405
    %v1407 = vtanh.pop %v1345
    %v1408 = vxor.u32 %v1368, 2147483648
    %v1409 = vmul.f32 %v1408, 1.442695
    %v1410 = vpow.pop %v1409
    %v1411 = vadd.f32 %v1410, 1.0
    %v1412 = vrcp.pop %v1411
    %v1413 = vmul.f32 %v1411, %v1412
    %v1414 = vsub.f32 1.0, %v1413
    %v1415 = vmul.f32 %v1412, %v1414
    %v1416 = vadd.f32 %v1412, %v1415
    %vm1417 = vweird.f32 %v1411
    %vm1418 = vweird.f32 %v1412
    %vm1419 = vmor %vm1417, %vm1418
    %v1420 = vsel %vm1419, %v1412, %v1416
    %v1421 = vand.u32 2147483647, %v1411
    %vm1422 = vcmp.eq.f32.partialorder %v1421, 8.507059e+37
    %v1423 = vand.u32 %v1411, 2147483648
    %v1424 = vor.u32 1.1754944e-38, %v1423
    %v1425 = vsel %vm1422, %v1424, %v1420
    %v1426 = vmul.f32 1.0, %v1425
    %v1427 = vmul.f32 %v1406, %v1037
    %v1428 = vmul.f32 %v1387, %v1407
    %v1429 = vadd.f32 %v1427, %v1428
    %v1430 = vtanh.pop %v1429
    %v1431 = vmul.f32 %v1426, %v1430
    %v1433 = vsel %vm28, %v1276, 0
    %1435 = vmatpush.msra.mxu0 0.0
    %1436 = vmatpush.msra.mxu0 0.0
    %1437 = vmatpush.msra.mxu0 0.0
    %1438 = vmatpush.msra.mxu0 0.0
    %1439 = vmatpush.msra.mxu0 0.0
    %1440 = vmatpush.msra.mxu0 0.0
    %1441 = vmatpush.msra.mxu0 0.0
    %1442 = vmatpush.msra.mxu0 0.0
    %1443 = vmatpush.msra.mxu0 0.0
    %1444 = vmatpush.msra.mxu0 0.0
    %1445 = vmatpush.msra.mxu0 0.0
    %1446 = vmatpush.msra.mxu0 0.0
    %1447 = vmatpush.msra.mxu0 %v205
    %1448 = vmatpush.msra.mxu0 %v204
    %1449 = vmatpush.msra.mxu0 %v203
    %1450 = vmatpush.msra.mxu0 %v202
    %1451 = vmatmul.f32.gmra.mxu0 %v1433
    %v1452 = vpop.f32.mrf.mxu0
    %v1453 = vadd.f32 0.0, %v1452
    %1454 = vdwg.mxu0
    %v1455 = vadd.f32 %v228, %v1453
    %v1457 = vsel %vm28, %v1431, 0
    %1459 = vmatpush.msra.mxu0 0.0
    %1460 = vmatpush.msra.mxu0 0.0
    %1461 = vmatpush.msra.mxu0 0.0
    %1462 = vmatpush.msra.mxu0 0.0
    %1463 = vmatpush.msra.mxu0 0.0
    %1464 = vmatpush.msra.mxu0 0.0
    %1465 = vmatpush.msra.mxu0 0.0
    %1466 = vmatpush.msra.mxu0 0.0
    %1467 = vmatpush.msra.mxu0 0.0
    %1468 = vmatpush.msra.mxu0 0.0
    %1469 = vmatpush.msra.mxu0 0.0
    %1470 = vmatpush.msra.mxu0 0.0
    %1471 = vmatpush.msra.mxu0 %v234
    %1472 = vmatpush.msra.mxu0 %v233
    %1473 = vmatpush.msra.mxu0 %v232
    %1474 = vmatpush.msra.mxu0 %v231
    %1475 = vmatmul.f32.gmra.mxu0 %v1457
    %v1476 = vpop.f32.mrf.mxu0
    %v1477 = vadd.f32 0.0, %v1476
    %1478 = vdwg.mxu0
    %v1479 = vadd.f32 %v1455, %v1477
    %1480 = vmatpush.msra.mxu0 0.0
    %1481 = vmatpush.msra.mxu0 0.0
    %1482 = vmatpush.msra.mxu0 0.0
    %1483 = vmatpush.msra.mxu0 0.0
    %1484 = vmatpush.msra.mxu0 0.0
    %1485 = vmatpush.msra.mxu0 0.0
    %1486 = vmatpush.msra.mxu0 0.0
    %1487 = vmatpush.msra.mxu0 0.0
    %1488 = vmatpush.msra.mxu0 0.0
    %1489 = vmatpush.msra.mxu0 0.0
    %1490 = vmatpush.msra.mxu0 0.0
    %1491 = vmatpush.msra.mxu0 0.0
    %1492 = vmatpush.msra.mxu0 %v263
    %1493 = vmatpush.msra.mxu0 %v262
    %1494 = vmatpush.msra.mxu0 %v261
    %1495 = vmatpush.msra.mxu0 %v260
    %1496 = vmatmul.f32.gmra.mxu0 %v1433
    %v1497 = vpop.f32.mrf.mxu0
    %v1498 = vadd.f32 0.0, %v1497
    %1499 = vdwg.mxu0
    %v1500 = vadd.f32 %v287, %v1498
    %1501 = vmatpush.msra.mxu0 0.0
    %1502 = vmatpush.msra.mxu0 0.0
    %1503 = vmatpush.msra.mxu0 0.0
    %1504 = vmatpush.msra.mxu0 0.0
    %1505 = vmatpush.msra.mxu0 0.0
    %1506 = vmatpush.msra.mxu0 0.0
    %1507 = vmatpush.msra.mxu0 0.0
    %1508 = vmatpush.msra.mxu0 0.0
    %1509 = vmatpush.msra.mxu0 0.0
    %1510 = vmatpush.msra.mxu0 0.0
    %1511 = vmatpush.msra.mxu0 0.0
    %1512 = vmatpush.msra.mxu0 0.0
    %1513 = vmatpush.msra.mxu0 %v294
    %1514 = vmatpush.msra.mxu0 %v293
    %1515 = vmatpush.msra.mxu0 %v292
    %1516 = vmatpush.msra.mxu0 %v291
    %1517 = vmatmul.f32.gmra.mxu0 %v1457
    %v1518 = vpop.f32.mrf.mxu0
    %v1519 = vadd.f32 0.0, %v1518
    %1520 = vdwg.mxu0
    %v1521 = vadd.f32 %v1500, %v1519
    %1522 = vmatpush.msra.mxu0 0.0
    %1523 = vmatpush.msra.mxu0 0.0
    %1524 = vmatpush.msra.mxu0 0.0
    %1525 = vmatpush.msra.mxu0 0.0
    %1526 = vmatpush.msra.mxu0 0.0
    %1527 = vmatpush.msra.mxu0 0.0
    %1528 = vmatpush.msra.mxu0 0.0
    %1529 = vmatpush.msra.mxu0 0.0
    %1530 = vmatpush.msra.mxu0 0.0
    %1531 = vmatpush.msra.mxu0 0.0
    %1532 = vmatpush.msra.mxu0 0.0
    %1533 = vmatpush.msra.mxu0 0.0
    %1534 = vmatpush.msra.mxu0 %v320
    %1535 = vmatpush.msra.mxu0 %v319
    %1536 = vmatpush.msra.mxu0 %v318
    %1537 = vmatpush.msra.mxu0 %v317
    %1538 = vmatmul.f32.gmra.mxu0 %v1433
    %v1539 = vpop.f32.mrf.mxu0
    %v1540 = vadd.f32 0.0, %v1539
    %1541 = vdwg.mxu0
    %v1542 = vadd.f32 %v344, %v1540
    %1543 = vmatpush.msra.mxu0 0.0
    %1544 = vmatpush.msra.mxu0 0.0
    %1545 = vmatpush.msra.mxu0 0.0
    %1546 = vmatpush.msra.mxu0 0.0
    %1547 = vmatpush.msra.mxu0 0.0
    %1548 = vmatpush.msra.mxu0 0.0
    %1549 = vmatpush.msra.mxu0 0.0
    %1550 = vmatpush.msra.mxu0 0.0
    %1551 = vmatpush.msra.mxu0 0.0
    %1552 = vmatpush.msra.mxu0 0.0
    %1553 = vmatpush.msra.mxu0 0.0
    %1554 = vmatpush.msra.mxu0 0.0
    %1555 = vmatpush.msra.mxu0 %v351
    %1556 = vmatpush.msra.mxu0 %v350
    %1557 = vmatpush.msra.mxu0 %v349
    %1558 = vmatpush.msra.mxu0 %v348
    %1559 = vmatmul.f32.gmra.mxu0 %v1457
    %v1560 = vpop.f32.mrf.mxu0
    %v1561 = vadd.f32 0.0, %v1560
    %1562 = vdwg.mxu0
    %v1563 = vadd.f32 %v1542, %v1561
    %1564 = vmatpush.msra.mxu0 0.0
    %1565 = vmatpush.msra.mxu0 0.0
    %1566 = vmatpush.msra.mxu0 0.0
    %1567 = vmatpush.msra.mxu0 0.0
    %1568 = vmatpush.msra.mxu0 0.0
    %1569 = vmatpush.msra.mxu0 0.0
    %1570 = vmatpush.msra.mxu0 0.0
    %1571 = vmatpush.msra.mxu0 0.0
    %1572 = vmatpush.msra.mxu0 0.0
    %1573 = vmatpush.msra.mxu0 0.0
    %1574 = vmatpush.msra.mxu0 0.0
    %1575 = vmatpush.msra.mxu0 0.0
    %1576 = vmatpush.msra.mxu0 %v377
    %1577 = vmatpush.msra.mxu0 %v376
    %1578 = vmatpush.msra.mxu0 %v375
    %1579 = vmatpush.msra.mxu0 %v374
    %1580 = vmatmul.f32.gmra.mxu0 %v1433
    %v1581 = vpop.f32.mrf.mxu0
    %v1582 = vadd.f32 0.0, %v1581
    %1583 = vdwg.mxu0
    %v1584 = vadd.f32 %v401, %v1582
    %1585 = vmatpush.msra.mxu0 0.0
    %1586 = vmatpush.msra.mxu0 0.0
    %1587 = vmatpush.msra.mxu0 0.0
    %1588 = vmatpush.msra.mxu0 0.0
    %1589 = vmatpush.msra.mxu0 0.0
    %1590 = vmatpush.msra.mxu0 0.0
    %1591 = vmatpush.msra.mxu0 0.0
    %1592 = vmatpush.msra.mxu0 0.0
    %1593 = vmatpush.msra.mxu0 0.0
    %1594 = vmatpush.msra.mxu0 0.0
    %1595 = vmatpush.msra.mxu0 0.0
    %1596 = vmatpush.msra.mxu0 0.0
    %1597 = vmatpush.msra.mxu0 %v408
    %1598 = vmatpush.msra.mxu0 %v407
    %1599 = vmatpush.msra.mxu0 %v406
    %1600 = vmatpush.msra.mxu0 %v405
    %1601 = vmatmul.f32.gmra.mxu0 %v1457
    %v1602 = vpop.f32.mrf.mxu0
    %v1603 = vadd.f32 0.0, %v1602
    %1604 = vdwg.mxu0
    %v1605 = vadd.f32 %v1584, %v1603
    %v1606 = vxor.u32 %v1479, 2147483648
    %v1607 = vmul.f32 %v1606, 1.442695
    %v1608 = vpow.pop %v1607
    %v1609 = vadd.f32 %v1608, 1.0
    %v1610 = vrcp.pop %v1609
    %v1611 = vmul.f32 %v1609, %v1610
    %v1612 = vsub.f32 1.0, %v1611
    %v1613 = vmul.f32 %v1610, %v1612
    %v1614 = vadd.f32 %v1610, %v1613
    %vm1615 = vweird.f32 %v1609
    %vm1616 = vweird.f32 %v1610
    %vm1617 = vmor %vm1615, %vm1616
    %v1618 = vsel %vm1617, %v1610, %v1614
    %v1619 = vand.u32 2147483647, %v1609
    %vm1620 = vcmp.eq.f32.partialorder %v1619, 8.507059e+37
    %v1621 = vand.u32 %v1609, 2147483648
    %v1622 = vor.u32 1.1754944e-38, %v1621
    %v1623 = vsel %vm1620, %v1622, %v1618
    %v1624 = vmul.f32 1.0, %v1623
    %v1625 = vxor.u32 %v1521, 2147483648
    %v1626 = vmul.f32 %v1625, 1.442695
    %v1627 = vpow.pop %v1626
    %v1628 = vadd.f32 %v1627, 1.0
    %v1629 = vrcp.pop %v1628
    %v1630 = vmul.f32 %v1628, %v1629
    %v1631 = vsub.f32 1.0, %v1630
    %v1632 = vmul.f32 %v1629, %v1631
    %v1633 = vadd.f32 %v1629, %v1632
    %vm1634 = vweird.f32 %v1628
    %vm1635 = vweird.f32 %v1629
    %vm1636 = vmor %vm1634, %vm1635
    %v1637 = vsel %vm1636, %v1629, %v1633
    %v1638 = vand.u32 2147483647, %v1628
    %vm1639 = vcmp.eq.f32.partialorder %v1638, 8.507059e+37
    %v1640 = vand.u32 %v1628, 2147483648
    %v1641 = vor.u32 1.1754944e-38, %v1640
    %v1642 = vsel %vm1639, %v1641, %v1637
    %v1643 = vmul.f32 1.0, %v1642
    %v1644 = vtanh.pop %v1563
    %v1645 = vxor.u32 %v1605, 2147483648
    %v1646 = vmul.f32 %v1645, 1.442695
    %v1647 = vpow.pop %v1646
    %v1648 = vadd.f32 %v1647, 1.0
    %v1649 = vrcp.pop %v1648
    %v1650 = vmul.f32 %v1648, %v1649
    %v1651 = vsub.f32 1.0, %v1650
    %v1652 = vmul.f32 %v1649, %v1651
    %v1653 = vadd.f32 %v1649, %v1652
    %vm1654 = vweird.f32 %v1648
    %vm1655 = vweird.f32 %v1649
    %vm1656 = vmor %vm1654, %vm1655
    %v1657 = vsel %vm1656, %v1649, %v1653
    %v1658 = vand.u32 2147483647, %v1648
    %vm1659 = vcmp.eq.f32.partialorder %v1658, 8.507059e+37
    %v1660 = vand.u32 %v1648, 2147483648
    %v1661 = vor.u32 1.1754944e-38, %v1660
    %v1662 = vsel %vm1659, %v1661, %v1657
    %v1663 = vmul.f32 1.0, %v1662
    %v1664 = vmul.f32 %v1643, %v1274
    %v1665 = vmul.f32 %v1624, %v1644
    %v1666 = vadd.f32 %v1664, %v1665
    %v1667 = vtanh.pop %v1666
    %v1668 = vmul.f32 %v1663, %v1667
    %1669 = vmatpush.msra.mxu0 0.0
    %1670 = vmatpush.msra.mxu0 0.0
    %1671 = vmatpush.msra.mxu0 0.0
    %1672 = vmatpush.msra.mxu0 0.0
    %1673 = vmatpush.msra.mxu0 0.0
    %1674 = vmatpush.msra.mxu0 0.0
    %1675 = vmatpush.msra.mxu0 0.0
    %1676 = vmatpush.msra.mxu0 0.0
    %1677 = vmatpush.msra.mxu0 0.0
    %1678 = vmatpush.msra.mxu0 0.0
    %1679 = vmatpush.msra.mxu0 0.0
    %1680 = vmatpush.msra.mxu0 0.0
    %1681 = vmatpush.msra.mxu0 %v27
    %1682 = vmatpush.msra.mxu0 %v26
    %1683 = vmatpush.msra.mxu0 %v25
    %1684 = vmatpush.msra.mxu0 %v24
    %1685 = vmatmul.f32.gmra.mxu0 %v1457
    %v1686 = vpop.f32.mrf.mxu0
    %v1687 = vadd.f32 0.0, %v1686
    %1688 = vdwg.mxu0
    %s1689 = scalar_lea.vmem %s0, 32
    %v1690 = vld [vmem:[%s1689] sm:$0x3]
    %v1691 = vadd.f32 %v1690, %v1687
    %1692 = vmatpush.msra.mxu0 0.0
    %1693 = vmatpush.msra.mxu0 0.0
    %1694 = vmatpush.msra.mxu0 0.0
    %1695 = vmatpush.msra.mxu0 0.0
    %1696 = vmatpush.msra.mxu0 0.0
    %1697 = vmatpush.msra.mxu0 0.0
    %1698 = vmatpush.msra.mxu0 0.0
    %1699 = vmatpush.msra.mxu0 0.0
    %1700 = vmatpush.msra.mxu0 0.0
    %1701 = vmatpush.msra.mxu0 0.0
    %1702 = vmatpush.msra.mxu0 0.0
    %1703 = vmatpush.msra.mxu0 0.0
    %1704 = vmatpush.msra.mxu0 %v58
    %1705 = vmatpush.msra.mxu0 %v57
    %1706 = vmatpush.msra.mxu0 %v56
    %1707 = vmatpush.msra.mxu0 %v55
    %1708 = vmatmul.f32.gmra.mxu0 %v1457
    %v1709 = vpop.f32.mrf.mxu0
    %v1710 = vadd.f32 0.0, %v1709
    %1711 = vdwg.mxu0
    %s1712 = scalar_lea.vmem %s0, 34
    %v1713 = vld [vmem:[%s1712] sm:$0x3]
    %v1714 = vadd.f32 %v1713, %v1710
    %1715 = vmatpush.msra.mxu0 0.0
    %1716 = vmatpush.msra.mxu0 0.0
    %1717 = vmatpush.msra.mxu0 0.0
    %1718 = vmatpush.msra.mxu0 0.0
    %1719 = vmatpush.msra.mxu0 0.0
    %1720 = vmatpush.msra.mxu0 0.0
    %1721 = vmatpush.msra.mxu0 0.0
    %1722 = vmatpush.msra.mxu0 0.0
    %1723 = vmatpush.msra.mxu0 0.0
    %1724 = vmatpush.msra.mxu0 0.0
    %1725 = vmatpush.msra.mxu0 0.0
    %1726 = vmatpush.msra.mxu0 0.0
    %1727 = vmatpush.msra.mxu0 %v86
    %1728 = vmatpush.msra.mxu0 %v85
    %1729 = vmatpush.msra.mxu0 %v84
    %1730 = vmatpush.msra.mxu0 %v83
    %1731 = vmatmul.f32.gmra.mxu0 %v1457
    %v1732 = vpop.f32.mrf.mxu0
    %v1733 = vadd.f32 0.0, %v1732
    %1734 = vdwg.mxu0
    %s1735 = scalar_lea.vmem %s0, 36
    %v1736 = vld [vmem:[%s1735] sm:$0x3]
    %v1737 = vadd.f32 %v1736, %v1733
    %1738 = vmatpush.msra.mxu0 0.0
    %1739 = vmatpush.msra.mxu0 0.0
    %1740 = vmatpush.msra.mxu0 0.0
    %1741 = vmatpush.msra.mxu0 0.0
    %1742 = vmatpush.msra.mxu0 0.0
    %1743 = vmatpush.msra.mxu0 0.0
    %1744 = vmatpush.msra.mxu0 0.0
    %1745 = vmatpush.msra.mxu0 0.0
    %1746 = vmatpush.msra.mxu0 0.0
    %1747 = vmatpush.msra.mxu0 0.0
    %1748 = vmatpush.msra.mxu0 0.0
    %1749 = vmatpush.msra.mxu0 0.0
    %1750 = vmatpush.msra.mxu0 %v114
    %1751 = vmatpush.msra.mxu0 %v113
    %1752 = vmatpush.msra.mxu0 %v112
    %1753 = vmatpush.msra.mxu0 %v111
    %1754 = vmatmul.f32.gmra.mxu0 %v1457
    %v1755 = vpop.f32.mrf.mxu0
    %v1756 = vadd.f32 0.0, %v1755
    %1757 = vdwg.mxu0
    %s1758 = scalar_lea.vmem %s0, 38
    %v1759 = vld [vmem:[%s1758] sm:$0x3]
    %v1760 = vadd.f32 %v1759, %v1756
    %v1761 = vxor.u32 %v1691, 2147483648
    %v1762 = vmul.f32 %v1761, 1.442695
    %v1763 = vpow.pop %v1762
    %v1764 = vadd.f32 %v1763, 1.0
    %v1765 = vrcp.pop %v1764
    %v1766 = vmul.f32 %v1764, %v1765
    %v1767 = vsub.f32 1.0, %v1766
    %v1768 = vmul.f32 %v1765, %v1767
    %v1769 = vadd.f32 %v1765, %v1768
    %vm1770 = vweird.f32 %v1764
    %vm1771 = vweird.f32 %v1765
    %vm1772 = vmor %vm1770, %vm1771
    %v1773 = vsel %vm1772, %v1765, %v1769
    %v1774 = vand.u32 2147483647, %v1764
    %vm1775 = vcmp.eq.f32.partialorder %v1774, 8.507059e+37
    %v1776 = vand.u32 %v1764, 2147483648
    %v1777 = vor.u32 1.1754944e-38, %v1776
    %v1778 = vsel %vm1775, %v1777, %v1773
    %v1779 = vmul.f32 1.0, %v1778
    %v1780 = vxor.u32 %v1714, 2147483648
    %v1781 = vmul.f32 %v1780, 1.442695
    %v1782 = vpow.pop %v1781
    %v1783 = vadd.f32 %v1782, 1.0
    %v1784 = vrcp.pop %v1783
    %v1785 = vmul.f32 %v1783, %v1784
    %v1786 = vsub.f32 1.0, %v1785
    %v1787 = vmul.f32 %v1784, %v1786
    %v1788 = vadd.f32 %v1784, %v1787
    %vm1789 = vweird.f32 %v1783
    %vm1790 = vweird.f32 %v1784
    %vm1791 = vmor %vm1789, %vm1790
    %v1792 = vsel %vm1791, %v1784, %v1788
    %v1793 = vand.u32 2147483647, %v1783
    %vm1794 = vcmp.eq.f32.partialorder %v1793, 8.507059e+37
    %v1795 = vand.u32 %v1783, 2147483648
    %v1796 = vor.u32 1.1754944e-38, %v1795
    %v1797 = vsel %vm1794, %v1796, %v1792
    %v1798 = vmul.f32 1.0, %v1797
    %v1799 = vtanh.pop %v1737
    %v1800 = vxor.u32 %v1760, 2147483648
    %v1801 = vmul.f32 %v1800, 1.442695
    %v1802 = vpow.pop %v1801
    %v1803 = vadd.f32 %v1802, 1.0
    %v1804 = vrcp.pop %v1803
    %v1805 = vmul.f32 %v1803, %v1804
    %v1806 = vsub.f32 1.0, %v1805
    %v1807 = vmul.f32 %v1804, %v1806
    %v1808 = vadd.f32 %v1804, %v1807
    %vm1809 = vweird.f32 %v1803
    %vm1810 = vweird.f32 %v1804
    %vm1811 = vmor %vm1809, %vm1810
    %v1812 = vsel %vm1811, %v1804, %v1808
    %v1813 = vand.u32 2147483647, %v1803
    %vm1814 = vcmp.eq.f32.partialorder %v1813, 8.507059e+37
    %v1815 = vand.u32 %v1803, 2147483648
    %v1816 = vor.u32 1.1754944e-38, %v1815
    %v1817 = vsel %vm1814, %v1816, %v1812
    %v1818 = vmul.f32 1.0, %v1817
    %v1819 = vmul.f32 %v1798, %v1429
    %v1820 = vmul.f32 %v1779, %v1799
    %v1821 = vadd.f32 %v1819, %v1820
    %v1822 = vtanh.pop %v1821
    %v1823 = vmul.f32 %v1818, %v1822
    %v1825 = vsel %vm28, %v1668, 0
    %1827 = vmatpush.msra.mxu0 0.0
    %1828 = vmatpush.msra.mxu0 0.0
    %1829 = vmatpush.msra.mxu0 0.0
    %1830 = vmatpush.msra.mxu0 0.0
    %1831 = vmatpush.msra.mxu0 0.0
    %1832 = vmatpush.msra.mxu0 0.0
    %1833 = vmatpush.msra.mxu0 0.0
    %1834 = vmatpush.msra.mxu0 0.0
    %1835 = vmatpush.msra.mxu0 0.0
    %1836 = vmatpush.msra.mxu0 0.0
    %1837 = vmatpush.msra.mxu0 0.0
    %1838 = vmatpush.msra.mxu0 0.0
    %1839 = vmatpush.msra.mxu0 %v205
    %1840 = vmatpush.msra.mxu0 %v204
    %1841 = vmatpush.msra.mxu0 %v203
    %1842 = vmatpush.msra.mxu0 %v202
    %1843 = vmatmul.f32.gmra.mxu0 %v1825
    %v1844 = vpop.f32.mrf.mxu0
    %v1845 = vadd.f32 0.0, %v1844
    %1846 = vdwg.mxu0
    %v1847 = vadd.f32 %v228, %v1845
    %v1849 = vsel %vm28, %v1823, 0
    %1851 = vmatpush.msra.mxu0 0.0
    %1852 = vmatpush.msra.mxu0 0.0
    %1853 = vmatpush.msra.mxu0 0.0
    %1854 = vmatpush.msra.mxu0 0.0
    %1855 = vmatpush.msra.mxu0 0.0
    %1856 = vmatpush.msra.mxu0 0.0
    %1857 = vmatpush.msra.mxu0 0.0
    %1858 = vmatpush.msra.mxu0 0.0
    %1859 = vmatpush.msra.mxu0 0.0
    %1860 = vmatpush.msra.mxu0 0.0
    %1861 = vmatpush.msra.mxu0 0.0
    %1862 = vmatpush.msra.mxu0 0.0
    %1863 = vmatpush.msra.mxu0 %v234
    %1864 = vmatpush.msra.mxu0 %v233
    %1865 = vmatpush.msra.mxu0 %v232
    %1866 = vmatpush.msra.mxu0 %v231
    %1867 = vmatmul.f32.gmra.mxu0 %v1849
    %v1868 = vpop.f32.mrf.mxu0
    %v1869 = vadd.f32 0.0, %v1868
    %1870 = vdwg.mxu0
    %v1871 = vadd.f32 %v1847, %v1869
    %1872 = vmatpush.msra.mxu0 0.0
    %1873 = vmatpush.msra.mxu0 0.0
    %1874 = vmatpush.msra.mxu0 0.0
    %1875 = vmatpush.msra.mxu0 0.0
    %1876 = vmatpush.msra.mxu0 0.0
    %1877 = vmatpush.msra.mxu0 0.0
    %1878 = vmatpush.msra.mxu0 0.0
    %1879 = vmatpush.msra.mxu0 0.0
    %1880 = vmatpush.msra.mxu0 0.0
    %1881 = vmatpush.msra.mxu0 0.0
    %1882 = vmatpush.msra.mxu0 0.0
    %1883 = vmatpush.msra.mxu0 0.0
    %1884 = vmatpush.msra.mxu0 %v263
    %1885 = vmatpush.msra.mxu0 %v262
    %1886 = vmatpush.msra.mxu0 %v261
    %1887 = vmatpush.msra.mxu0 %v260
    %1888 = vmatmul.f32.gmra.mxu0 %v1825
    %v1889 = vpop.f32.mrf.mxu0
    %v1890 = vadd.f32 0.0, %v1889
    %1891 = vdwg.mxu0
    %v1892 = vadd.f32 %v287, %v1890
    %1893 = vmatpush.msra.mxu0 0.0
    %1894 = vmatpush.msra.mxu0 0.0
    %1895 = vmatpush.msra.mxu0 0.0
    %1896 = vmatpush.msra.mxu0 0.0
    %1897 = vmatpush.msra.mxu0 0.0
    %1898 = vmatpush.msra.mxu0 0.0
    %1899 = vmatpush.msra.mxu0 0.0
    %1900 = vmatpush.msra.mxu0 0.0
    %1901 = vmatpush.msra.mxu0 0.0
    %1902 = vmatpush.msra.mxu0 0.0
    %1903 = vmatpush.msra.mxu0 0.0
    %1904 = vmatpush.msra.mxu0 0.0
    %1905 = vmatpush.msra.mxu0 %v294
    %1906 = vmatpush.msra.mxu0 %v293
    %1907 = vmatpush.msra.mxu0 %v292
    %1908 = vmatpush.msra.mxu0 %v291
    %1909 = vmatmul.f32.gmra.mxu0 %v1849
    %v1910 = vpop.f32.mrf.mxu0
    %v1911 = vadd.f32 0.0, %v1910
    %1912 = vdwg.mxu0
    %v1913 = vadd.f32 %v1892, %v1911
    %1914 = vmatpush.msra.mxu0 0.0
    %1915 = vmatpush.msra.mxu0 0.0
    %1916 = vmatpush.msra.mxu0 0.0
    %1917 = vmatpush.msra.mxu0 0.0
    %1918 = vmatpush.msra.mxu0 0.0
    %1919 = vmatpush.msra.mxu0 0.0
    %1920 = vmatpush.msra.mxu0 0.0
    %1921 = vmatpush.msra.mxu0 0.0
    %1922 = vmatpush.msra.mxu0 0.0
    %1923 = vmatpush.msra.mxu0 0.0
    %1924 = vmatpush.msra.mxu0 0.0
    %1925 = vmatpush.msra.mxu0 0.0
    %1926 = vmatpush.msra.mxu0 %v320
    %1927 = vmatpush.msra.mxu0 %v319
    %1928 = vmatpush.msra.mxu0 %v318
    %1929 = vmatpush.msra.mxu0 %v317
    %1930 = vmatmul.f32.gmra.mxu0 %v1825
    %v1931 = vpop.f32.mrf.mxu0
    %v1932 = vadd.f32 0.0, %v1931
    %1933 = vdwg.mxu0
    %v1934 = vadd.f32 %v344, %v1932
    %1935 = vmatpush.msra.mxu0 0.0
    %1936 = vmatpush.msra.mxu0 0.0
    %1937 = vmatpush.msra.mxu0 0.0
    %1938 = vmatpush.msra.mxu0 0.0
    %1939 = vmatpush.msra.mxu0 0.0
    %1940 = vmatpush.msra.mxu0 0.0
    %1941 = vmatpush.msra.mxu0 0.0
    %1942 = vmatpush.msra.mxu0 0.0
    %1943 = vmatpush.msra.mxu0 0.0
    %1944 = vmatpush.msra.mxu0 0.0
    %1945 = vmatpush.msra.mxu0 0.0
    %1946 = vmatpush.msra.mxu0 0.0
    %1947 = vmatpush.msra.mxu0 %v351
    %1948 = vmatpush.msra.mxu0 %v350
    %1949 = vmatpush.msra.mxu0 %v349
    %1950 = vmatpush.msra.mxu0 %v348
    %1951 = vmatmul.f32.gmra.mxu0 %v1849
    %v1952 = vpop.f32.mrf.mxu0
    %v1953 = vadd.f32 0.0, %v1952
    %1954 = vdwg.mxu0
    %v1955 = vadd.f32 %v1934, %v1953
    %1956 = vmatpush.msra.mxu0 0.0
    %1957 = vmatpush.msra.mxu0 0.0
    %1958 = vmatpush.msra.mxu0 0.0
    %1959 = vmatpush.msra.mxu0 0.0
    %1960 = vmatpush.msra.mxu0 0.0
    %1961 = vmatpush.msra.mxu0 0.0
    %1962 = vmatpush.msra.mxu0 0.0
    %1963 = vmatpush.msra.mxu0 0.0
    %1964 = vmatpush.msra.mxu0 0.0
    %1965 = vmatpush.msra.mxu0 0.0
    %1966 = vmatpush.msra.mxu0 0.0
    %1967 = vmatpush.msra.mxu0 0.0
    %1968 = vmatpush.msra.mxu0 %v377
    %1969 = vmatpush.msra.mxu0 %v376
    %1970 = vmatpush.msra.mxu0 %v375
    %1971 = vmatpush.msra.mxu0 %v374
    %1972 = vmatmul.f32.gmra.mxu0 %v1825
    %v1973 = vpop.f32.mrf.mxu0
    %v1974 = vadd.f32 0.0, %v1973
    %1975 = vdwg.mxu0
    %v1976 = vadd.f32 %v401, %v1974
    %1977 = vmatpush.msra.mxu0 0.0
    %1978 = vmatpush.msra.mxu0 0.0
    %1979 = vmatpush.msra.mxu0 0.0
    %1980 = vmatpush.msra.mxu0 0.0
    %1981 = vmatpush.msra.mxu0 0.0
    %1982 = vmatpush.msra.mxu0 0.0
    %1983 = vmatpush.msra.mxu0 0.0
    %1984 = vmatpush.msra.mxu0 0.0
    %1985 = vmatpush.msra.mxu0 0.0
    %1986 = vmatpush.msra.mxu0 0.0
    %1987 = vmatpush.msra.mxu0 0.0
    %1988 = vmatpush.msra.mxu0 0.0
    %1989 = vmatpush.msra.mxu0 %v408
    %1990 = vmatpush.msra.mxu0 %v407
    %1991 = vmatpush.msra.mxu0 %v406
    %1992 = vmatpush.msra.mxu0 %v405
    %1993 = vmatmul.f32.gmra.mxu0 %v1849
    %v1994 = vpop.f32.mrf.mxu0
    %v1995 = vadd.f32 0.0, %v1994
    %1996 = vdwg.mxu0
    %v1997 = vadd.f32 %v1976, %v1995
    %v1998 = vxor.u32 %v1871, 2147483648
    %v1999 = vmul.f32 %v1998, 1.442695
    %v2000 = vpow.pop %v1999
    %v2001 = vadd.f32 %v2000, 1.0
    %v2002 = vrcp.pop %v2001
    %v2003 = vmul.f32 %v2001, %v2002
    %v2004 = vsub.f32 1.0, %v2003
    %v2005 = vmul.f32 %v2002, %v2004
    %v2006 = vadd.f32 %v2002, %v2005
    %vm2007 = vweird.f32 %v2001
    %vm2008 = vweird.f32 %v2002
    %vm2009 = vmor %vm2007, %vm2008
    %v2010 = vsel %vm2009, %v2002, %v2006
    %v2011 = vand.u32 2147483647, %v2001
    %vm2012 = vcmp.eq.f32.partialorder %v2011, 8.507059e+37
    %v2013 = vand.u32 %v2001, 2147483648
    %v2014 = vor.u32 1.1754944e-38, %v2013
    %v2015 = vsel %vm2012, %v2014, %v2010
    %v2016 = vmul.f32 1.0, %v2015
    %v2017 = vxor.u32 %v1913, 2147483648
    %v2018 = vmul.f32 %v2017, 1.442695
    %v2019 = vpow.pop %v2018
    %v2020 = vadd.f32 %v2019, 1.0
    %v2021 = vrcp.pop %v2020
    %v2022 = vmul.f32 %v2020, %v2021
    %v2023 = vsub.f32 1.0, %v2022
    %v2024 = vmul.f32 %v2021, %v2023
    %v2025 = vadd.f32 %v2021, %v2024
    %vm2026 = vweird.f32 %v2020
    %vm2027 = vweird.f32 %v2021
    %vm2028 = vmor %vm2026, %vm2027
    %v2029 = vsel %vm2028, %v2021, %v2025
    %v2030 = vand.u32 2147483647, %v2020
    %vm2031 = vcmp.eq.f32.partialorder %v2030, 8.507059e+37
    %v2032 = vand.u32 %v2020, 2147483648
    %v2033 = vor.u32 1.1754944e-38, %v2032
    %v2034 = vsel %vm2031, %v2033, %v2029
    %v2035 = vmul.f32 1.0, %v2034
    %v2036 = vtanh.pop %v1955
    %v2037 = vxor.u32 %v1997, 2147483648
    %v2038 = vmul.f32 %v2037, 1.442695
    %v2039 = vpow.pop %v2038
    %v2040 = vadd.f32 %v2039, 1.0
    %v2041 = vrcp.pop %v2040
    %v2042 = vmul.f32 %v2040, %v2041
    %v2043 = vsub.f32 1.0, %v2042
    %v2044 = vmul.f32 %v2041, %v2043
    %v2045 = vadd.f32 %v2041, %v2044
    %vm2046 = vweird.f32 %v2040
    %vm2047 = vweird.f32 %v2041
    %vm2048 = vmor %vm2046, %vm2047
    %v2049 = vsel %vm2048, %v2041, %v2045
    %v2050 = vand.u32 2147483647, %v2040
    %vm2051 = vcmp.eq.f32.partialorder %v2050, 8.507059e+37
    %v2052 = vand.u32 %v2040, 2147483648
    %v2053 = vor.u32 1.1754944e-38, %v2052
    %v2054 = vsel %vm2051, %v2053, %v2049
    %v2055 = vmul.f32 1.0, %v2054
    %v2056 = vmul.f32 %v2035, %v1666
    %v2057 = vmul.f32 %v2016, %v2036
    %v2058 = vadd.f32 %v2056, %v2057
    %v2059 = vtanh.pop %v2058
    %v2060 = vmul.f32 %v2055, %v2059
    %2061 = vmatpush.msra.mxu0 0.0
    %2062 = vmatpush.msra.mxu0 0.0
    %2063 = vmatpush.msra.mxu0 0.0
    %2064 = vmatpush.msra.mxu0 0.0
    %2065 = vmatpush.msra.mxu0 0.0
    %2066 = vmatpush.msra.mxu0 0.0
    %2067 = vmatpush.msra.mxu0 0.0
    %2068 = vmatpush.msra.mxu0 0.0
    %2069 = vmatpush.msra.mxu0 0.0
    %2070 = vmatpush.msra.mxu0 0.0
    %2071 = vmatpush.msra.mxu0 0.0
    %2072 = vmatpush.msra.mxu0 0.0
    %2073 = vmatpush.msra.mxu0 %v27
    %2074 = vmatpush.msra.mxu0 %v26
    %2075 = vmatpush.msra.mxu0 %v25
    %2076 = vmatpush.msra.mxu0 %v24
    %2077 = vmatmul.f32.gmra.mxu0 %v1849
    %v2078 = vpop.f32.mrf.mxu0
    %v2079 = vadd.f32 0.0, %v2078
    %2080 = vdwg.mxu0
    %s2081 = scalar_lea.vmem %s0, 40
    %v2082 = vld [vmem:[%s2081] sm:$0x3]
    %v2083 = vadd.f32 %v2082, %v2079
    %2084 = vmatpush.msra.mxu0 0.0
    %2085 = vmatpush.msra.mxu0 0.0
    %2086 = vmatpush.msra.mxu0 0.0
    %2087 = vmatpush.msra.mxu0 0.0
    %2088 = vmatpush.msra.mxu0 0.0
    %2089 = vmatpush.msra.mxu0 0.0
    %2090 = vmatpush.msra.mxu0 0.0
    %2091 = vmatpush.msra.mxu0 0.0
    %2092 = vmatpush.msra.mxu0 0.0
    %2093 = vmatpush.msra.mxu0 0.0
    %2094 = vmatpush.msra.mxu0 0.0
    %2095 = vmatpush.msra.mxu0 0.0
    %2096 = vmatpush.msra.mxu0 %v58
    %2097 = vmatpush.msra.mxu0 %v57
    %2098 = vmatpush.msra.mxu0 %v56
    %2099 = vmatpush.msra.mxu0 %v55
    %2100 = vmatmul.f32.gmra.mxu0 %v1849
    %v2101 = vpop.f32.mrf.mxu0
    %v2102 = vadd.f32 0.0, %v2101
    %2103 = vdwg.mxu0
    %s2104 = scalar_lea.vmem %s0, 42
    %v2105 = vld [vmem:[%s2104] sm:$0x3]
    %v2106 = vadd.f32 %v2105, %v2102
    %2107 = vmatpush.msra.mxu0 0.0
    %2108 = vmatpush.msra.mxu0 0.0
    %2109 = vmatpush.msra.mxu0 0.0
    %2110 = vmatpush.msra.mxu0 0.0
    %2111 = vmatpush.msra.mxu0 0.0
    %2112 = vmatpush.msra.mxu0 0.0
    %2113 = vmatpush.msra.mxu0 0.0
    %2114 = vmatpush.msra.mxu0 0.0
    %2115 = vmatpush.msra.mxu0 0.0
    %2116 = vmatpush.msra.mxu0 0.0
    %2117 = vmatpush.msra.mxu0 0.0
    %2118 = vmatpush.msra.mxu0 0.0
    %2119 = vmatpush.msra.mxu0 %v86
    %2120 = vmatpush.msra.mxu0 %v85
    %2121 = vmatpush.msra.mxu0 %v84
    %2122 = vmatpush.msra.mxu0 %v83
    %2123 = vmatmul.f32.gmra.mxu0 %v1849
    %v2124 = vpop.f32.mrf.mxu0
    %v2125 = vadd.f32 0.0, %v2124
    %2126 = vdwg.mxu0
    %s2127 = scalar_lea.vmem %s0, 44
    %v2128 = vld [vmem:[%s2127] sm:$0x3]
    %v2129 = vadd.f32 %v2128, %v2125
    %2130 = vmatpush.msra.mxu0 0.0
    %2131 = vmatpush.msra.mxu0 0.0
    %2132 = vmatpush.msra.mxu0 0.0
    %2133 = vmatpush.msra.mxu0 0.0
    %2134 = vmatpush.msra.mxu0 0.0
    %2135 = vmatpush.msra.mxu0 0.0
    %2136 = vmatpush.msra.mxu0 0.0
    %2137 = vmatpush.msra.mxu0 0.0
    %2138 = vmatpush.msra.mxu0 0.0
    %2139 = vmatpush.msra.mxu0 0.0
    %2140 = vmatpush.msra.mxu0 0.0
    %2141 = vmatpush.msra.mxu0 0.0
    %2142 = vmatpush.msra.mxu0 %v114
    %2143 = vmatpush.msra.mxu0 %v113
    %2144 = vmatpush.msra.mxu0 %v112
    %2145 = vmatpush.msra.mxu0 %v111
    %2146 = vmatmul.f32.gmra.mxu0 %v1849
    %v2147 = vpop.f32.mrf.mxu0
    %v2148 = vadd.f32 0.0, %v2147
    %2149 = vdwg.mxu0
    %s2150 = scalar_lea.vmem %s0, 46
    %v2151 = vld [vmem:[%s2150] sm:$0x3]
    %v2152 = vadd.f32 %v2151, %v2148
    %v2153 = vxor.u32 %v2083, 2147483648
    %v2154 = vmul.f32 %v2153, 1.442695
    %v2155 = vpow.pop %v2154
    %v2156 = vadd.f32 %v2155, 1.0
    %v2157 = vrcp.pop %v2156
    %v2158 = vmul.f32 %v2156, %v2157
    %v2159 = vsub.f32 1.0, %v2158
    %v2160 = vmul.f32 %v2157, %v2159
    %v2161 = vadd.f32 %v2157, %v2160
    %vm2162 = vweird.f32 %v2156
    %vm2163 = vweird.f32 %v2157
    %vm2164 = vmor %vm2162, %vm2163
    %v2165 = vsel %vm2164, %v2157, %v2161
    %v2166 = vand.u32 2147483647, %v2156
    %vm2167 = vcmp.eq.f32.partialorder %v2166, 8.507059e+37
    %v2168 = vand.u32 %v2156, 2147483648
    %v2169 = vor.u32 1.1754944e-38, %v2168
    %v2170 = vsel %vm2167, %v2169, %v2165
    %v2171 = vmul.f32 1.0, %v2170
    %v2172 = vxor.u32 %v2106, 2147483648
    %v2173 = vmul.f32 %v2172, 1.442695
    %v2174 = vpow.pop %v2173
    %v2175 = vadd.f32 %v2174, 1.0
    %v2176 = vrcp.pop %v2175
    %v2177 = vmul.f32 %v2175, %v2176
    %v2178 = vsub.f32 1.0, %v2177
    %v2179 = vmul.f32 %v2176, %v2178
    %v2180 = vadd.f32 %v2176, %v2179
    %vm2181 = vweird.f32 %v2175
    %vm2182 = vweird.f32 %v2176
    %vm2183 = vmor %vm2181, %vm2182
    %v2184 = vsel %vm2183, %v2176, %v2180
    %v2185 = vand.u32 2147483647, %v2175
    %vm2186 = vcmp.eq.f32.partialorder %v2185, 8.507059e+37
    %v2187 = vand.u32 %v2175, 2147483648
    %v2188 = vor.u32 1.1754944e-38, %v2187
    %v2189 = vsel %vm2186, %v2188, %v2184
    %v2190 = vmul.f32 1.0, %v2189
    %v2191 = vtanh.pop %v2129
    %v2192 = vxor.u32 %v2152, 2147483648
    %v2193 = vmul.f32 %v2192, 1.442695
    %v2194 = vpow.pop %v2193
    %v2195 = vadd.f32 %v2194, 1.0
    %v2196 = vrcp.pop %v2195
    %v2197 = vmul.f32 %v2195, %v2196
    %v2198 = vsub.f32 1.0, %v2197
    %v2199 = vmul.f32 %v2196, %v2198
    %v2200 = vadd.f32 %v2196, %v2199
    %vm2201 = vweird.f32 %v2195
    %vm2202 = vweird.f32 %v2196
    %vm2203 = vmor %vm2201, %vm2202
    %v2204 = vsel %vm2203, %v2196, %v2200
    %v2205 = vand.u32 2147483647, %v2195
    %vm2206 = vcmp.eq.f32.partialorder %v2205, 8.507059e+37
    %v2207 = vand.u32 %v2195, 2147483648
    %v2208 = vor.u32 1.1754944e-38, %v2207
    %v2209 = vsel %vm2206, %v2208, %v2204
    %v2210 = vmul.f32 1.0, %v2209
    %v2211 = vmul.f32 %v2190, %v1821
    %v2212 = vmul.f32 %v2171, %v2191
    %v2213 = vadd.f32 %v2211, %v2212
    %v2214 = vtanh.pop %v2213
    %v2215 = vmul.f32 %v2210, %v2214
    %v2217 = vsel %vm28, %v2060, 0
    %2219 = vmatpush.msra.mxu0 0.0
    %2220 = vmatpush.msra.mxu0 0.0
    %2221 = vmatpush.msra.mxu0 0.0
    %2222 = vmatpush.msra.mxu0 0.0
    %2223 = vmatpush.msra.mxu0 0.0
    %2224 = vmatpush.msra.mxu0 0.0
    %2225 = vmatpush.msra.mxu0 0.0
    %2226 = vmatpush.msra.mxu0 0.0
    %2227 = vmatpush.msra.mxu0 0.0
    %2228 = vmatpush.msra.mxu0 0.0
    %2229 = vmatpush.msra.mxu0 0.0
    %2230 = vmatpush.msra.mxu0 0.0
    %2231 = vmatpush.msra.mxu0 %v205
    %2232 = vmatpush.msra.mxu0 %v204
    %2233 = vmatpush.msra.mxu0 %v203
    %2234 = vmatpush.msra.mxu0 %v202
    %2235 = vmatmul.f32.gmra.mxu0 %v2217
    %v2236 = vpop.f32.mrf.mxu0
    %v2237 = vadd.f32 0.0, %v2236
    %2238 = vdwg.mxu0
    %v2239 = vadd.f32 %v228, %v2237
    %v2241 = vsel %vm28, %v2215, 0
    %2243 = vmatpush.msra.mxu0 0.0
    %2244 = vmatpush.msra.mxu0 0.0
    %2245 = vmatpush.msra.mxu0 0.0
    %2246 = vmatpush.msra.mxu0 0.0
    %2247 = vmatpush.msra.mxu0 0.0
    %2248 = vmatpush.msra.mxu0 0.0
    %2249 = vmatpush.msra.mxu0 0.0
    %2250 = vmatpush.msra.mxu0 0.0
    %2251 = vmatpush.msra.mxu0 0.0
    %2252 = vmatpush.msra.mxu0 0.0
    %2253 = vmatpush.msra.mxu0 0.0
    %2254 = vmatpush.msra.mxu0 0.0
    %2255 = vmatpush.msra.mxu0 %v234
    %2256 = vmatpush.msra.mxu0 %v233
    %2257 = vmatpush.msra.mxu0 %v232
    %2258 = vmatpush.msra.mxu0 %v231
    %2259 = vmatmul.f32.gmra.mxu0 %v2241
    %v2260 = vpop.f32.mrf.mxu0
    %v2261 = vadd.f32 0.0, %v2260
    %2262 = vdwg.mxu0
    %v2263 = vadd.f32 %v2239, %v2261
    %2264 = vmatpush.msra.mxu0 0.0
    %2265 = vmatpush.msra.mxu0 0.0
    %2266 = vmatpush.msra.mxu0 0.0
    %2267 = vmatpush.msra.mxu0 0.0
    %2268 = vmatpush.msra.mxu0 0.0
    %2269 = vmatpush.msra.mxu0 0.0
    %2270 = vmatpush.msra.mxu0 0.0
    %2271 = vmatpush.msra.mxu0 0.0
    %2272 = vmatpush.msra.mxu0 0.0
    %2273 = vmatpush.msra.mxu0 0.0
    %2274 = vmatpush.msra.mxu0 0.0
    %2275 = vmatpush.msra.mxu0 0.0
    %2276 = vmatpush.msra.mxu0 %v263
    %2277 = vmatpush.msra.mxu0 %v262
    %2278 = vmatpush.msra.mxu0 %v261
    %2279 = vmatpush.msra.mxu0 %v260
    %2280 = vmatmul.f32.gmra.mxu0 %v2217
    %v2281 = vpop.f32.mrf.mxu0
    %v2282 = vadd.f32 0.0, %v2281
    %2283 = vdwg.mxu0
    %v2284 = vadd.f32 %v287, %v2282
    %2285 = vmatpush.msra.mxu0 0.0
    %2286 = vmatpush.msra.mxu0 0.0
    %2287 = vmatpush.msra.mxu0 0.0
    %2288 = vmatpush.msra.mxu0 0.0
    %2289 = vmatpush.msra.mxu0 0.0
    %2290 = vmatpush.msra.mxu0 0.0
    %2291 = vmatpush.msra.mxu0 0.0
    %2292 = vmatpush.msra.mxu0 0.0
    %2293 = vmatpush.msra.mxu0 0.0
    %2294 = vmatpush.msra.mxu0 0.0
    %2295 = vmatpush.msra.mxu0 0.0
    %2296 = vmatpush.msra.mxu0 0.0
    %2297 = vmatpush.msra.mxu0 %v294
    %2298 = vmatpush.msra.mxu0 %v293
    %2299 = vmatpush.msra.mxu0 %v292
    %2300 = vmatpush.msra.mxu0 %v291
    %2301 = vmatmul.f32.gmra.mxu0 %v2241
    %v2302 = vpop.f32.mrf.mxu0
    %v2303 = vadd.f32 0.0, %v2302
    %2304 = vdwg.mxu0
    %v2305 = vadd.f32 %v2284, %v2303
    %2306 = vmatpush.msra.mxu0 0.0
    %2307 = vmatpush.msra.mxu0 0.0
    %2308 = vmatpush.msra.mxu0 0.0
    %2309 = vmatpush.msra.mxu0 0.0
    %2310 = vmatpush.msra.mxu0 0.0
    %2311 = vmatpush.msra.mxu0 0.0
    %2312 = vmatpush.msra.mxu0 0.0
    %2313 = vmatpush.msra.mxu0 0.0
    %2314 = vmatpush.msra.mxu0 0.0
    %2315 = vmatpush.msra.mxu0 0.0
    %2316 = vmatpush.msra.mxu0 0.0
    %2317 = vmatpush.msra.mxu0 0.0
    %2318 = vmatpush.msra.mxu0 %v320
    %2319 = vmatpush.msra.mxu0 %v319
    %2320 = vmatpush.msra.mxu0 %v318
    %2321 = vmatpush.msra.mxu0 %v317
    %2322 = vmatmul.f32.gmra.mxu0 %v2217
    %v2323 = vpop.f32.mrf.mxu0
    %v2324 = vadd.f32 0.0, %v2323
    %2325 = vdwg.mxu0
    %v2326 = vadd.f32 %v344, %v2324
    %2327 = vmatpush.msra.mxu0 0.0
    %2328 = vmatpush.msra.mxu0 0.0
    %2329 = vmatpush.msra.mxu0 0.0
    %2330 = vmatpush.msra.mxu0 0.0
    %2331 = vmatpush.msra.mxu0 0.0
    %2332 = vmatpush.msra.mxu0 0.0
    %2333 = vmatpush.msra.mxu0 0.0
    %2334 = vmatpush.msra.mxu0 0.0
    %2335 = vmatpush.msra.mxu0 0.0
    %2336 = vmatpush.msra.mxu0 0.0
    %2337 = vmatpush.msra.mxu0 0.0
    %2338 = vmatpush.msra.mxu0 0.0
    %2339 = vmatpush.msra.mxu0 %v351
    %2340 = vmatpush.msra.mxu0 %v350
    %2341 = vmatpush.msra.mxu0 %v349
    %2342 = vmatpush.msra.mxu0 %v348
    %2343 = vmatmul.f32.gmra.mxu0 %v2241
    %v2344 = vpop.f32.mrf.mxu0
    %v2345 = vadd.f32 0.0, %v2344
    %2346 = vdwg.mxu0
    %v2347 = vadd.f32 %v2326, %v2345
    %2348 = vmatpush.msra.mxu0 0.0
    %2349 = vmatpush.msra.mxu0 0.0
    %2350 = vmatpush.msra.mxu0 0.0
    %2351 = vmatpush.msra.mxu0 0.0
    %2352 = vmatpush.msra.mxu0 0.0
    %2353 = vmatpush.msra.mxu0 0.0
    %2354 = vmatpush.msra.mxu0 0.0
    %2355 = vmatpush.msra.mxu0 0.0
    %2356 = vmatpush.msra.mxu0 0.0
    %2357 = vmatpush.msra.mxu0 0.0
    %2358 = vmatpush.msra.mxu0 0.0
    %2359 = vmatpush.msra.mxu0 0.0
    %2360 = vmatpush.msra.mxu0 %v377
    %2361 = vmatpush.msra.mxu0 %v376
    %2362 = vmatpush.msra.mxu0 %v375
    %2363 = vmatpush.msra.mxu0 %v374
    %2364 = vmatmul.f32.gmra.mxu0 %v2217
    %v2365 = vpop.f32.mrf.mxu0
    %v2366 = vadd.f32 0.0, %v2365
    %2367 = vdwg.mxu0
    %v2368 = vadd.f32 %v401, %v2366
    %2369 = vmatpush.msra.mxu0 0.0
    %2370 = vmatpush.msra.mxu0 0.0
    %2371 = vmatpush.msra.mxu0 0.0
    %2372 = vmatpush.msra.mxu0 0.0
    %2373 = vmatpush.msra.mxu0 0.0
    %2374 = vmatpush.msra.mxu0 0.0
    %2375 = vmatpush.msra.mxu0 0.0
    %2376 = vmatpush.msra.mxu0 0.0
    %2377 = vmatpush.msra.mxu0 0.0
    %2378 = vmatpush.msra.mxu0 0.0
    %2379 = vmatpush.msra.mxu0 0.0
    %2380 = vmatpush.msra.mxu0 0.0
    %2381 = vmatpush.msra.mxu0 %v408
    %2382 = vmatpush.msra.mxu0 %v407
    %2383 = vmatpush.msra.mxu0 %v406
    %2384 = vmatpush.msra.mxu0 %v405
    %2385 = vmatmul.f32.gmra.mxu0 %v2241
    %v2386 = vpop.f32.mrf.mxu0
    %v2387 = vadd.f32 0.0, %v2386
    %2388 = vdwg.mxu0
    %v2389 = vadd.f32 %v2368, %v2387
    %v2390 = vxor.u32 %v2263, 2147483648
    %v2391 = vmul.f32 %v2390, 1.442695
    %v2392 = vpow.pop %v2391
    %v2393 = vadd.f32 %v2392, 1.0
    %v2394 = vrcp.pop %v2393
    %v2395 = vmul.f32 %v2393, %v2394
    %v2396 = vsub.f32 1.0, %v2395
    %v2397 = vmul.f32 %v2394, %v2396
    %v2398 = vadd.f32 %v2394, %v2397
    %vm2399 = vweird.f32 %v2393
    %vm2400 = vweird.f32 %v2394
    %vm2401 = vmor %vm2399, %vm2400
    %v2402 = vsel %vm2401, %v2394, %v2398
    %v2403 = vand.u32 2147483647, %v2393
    %vm2404 = vcmp.eq.f32.partialorder %v2403, 8.507059e+37
    %v2405 = vand.u32 %v2393, 2147483648
    %v2406 = vor.u32 1.1754944e-38, %v2405
    %v2407 = vsel %vm2404, %v2406, %v2402
    %v2408 = vmul.f32 1.0, %v2407
    %v2409 = vxor.u32 %v2305, 2147483648
    %v2410 = vmul.f32 %v2409, 1.442695
    %v2411 = vpow.pop %v2410
    %v2412 = vadd.f32 %v2411, 1.0
    %v2413 = vrcp.pop %v2412
    %v2414 = vmul.f32 %v2412, %v2413
    %v2415 = vsub.f32 1.0, %v2414
    %v2416 = vmul.f32 %v2413, %v2415
    %v2417 = vadd.f32 %v2413, %v2416
    %vm2418 = vweird.f32 %v2412
    %vm2419 = vweird.f32 %v2413
    %vm2420 = vmor %vm2418, %vm2419
    %v2421 = vsel %vm2420, %v2413, %v2417
    %v2422 = vand.u32 2147483647, %v2412
    %vm2423 = vcmp.eq.f32.partialorder %v2422, 8.507059e+37
    %v2424 = vand.u32 %v2412, 2147483648
    %v2425 = vor.u32 1.1754944e-38, %v2424
    %v2426 = vsel %vm2423, %v2425, %v2421
    %v2427 = vmul.f32 1.0, %v2426
    %v2428 = vtanh.pop %v2347
    %v2429 = vxor.u32 %v2389, 2147483648
    %v2430 = vmul.f32 %v2429, 1.442695
    %v2431 = vpow.pop %v2430
    %v2432 = vadd.f32 %v2431, 1.0
    %v2433 = vrcp.pop %v2432
    %v2434 = vmul.f32 %v2432, %v2433
    %v2435 = vsub.f32 1.0, %v2434
    %v2436 = vmul.f32 %v2433, %v2435
    %v2437 = vadd.f32 %v2433, %v2436
    %vm2438 = vweird.f32 %v2432
    %vm2439 = vweird.f32 %v2433
    %vm2440 = vmor %vm2438, %vm2439
    %v2441 = vsel %vm2440, %v2433, %v2437
    %v2442 = vand.u32 2147483647, %v2432
    %vm2443 = vcmp.eq.f32.partialorder %v2442, 8.507059e+37
    %v2444 = vand.u32 %v2432, 2147483648
    %v2445 = vor.u32 1.1754944e-38, %v2444
    %v2446 = vsel %vm2443, %v2445, %v2441
    %v2447 = vmul.f32 1.0, %v2446
    %v2448 = vmul.f32 %v2427, %v2058
    %v2449 = vmul.f32 %v2408, %v2428
    %v2450 = vadd.f32 %v2448, %v2449
    %v2451 = vtanh.pop %v2450
    %v2452 = vmul.f32 %v2447, %v2451
    %2453 = vmatpush.msra.mxu0 0.0
    %2454 = vmatpush.msra.mxu0 0.0
    %2455 = vmatpush.msra.mxu0 0.0
    %2456 = vmatpush.msra.mxu0 0.0
    %2457 = vmatpush.msra.mxu0 0.0
    %2458 = vmatpush.msra.mxu0 0.0
    %2459 = vmatpush.msra.mxu0 0.0
    %2460 = vmatpush.msra.mxu0 0.0
    %2461 = vmatpush.msra.mxu0 0.0
    %2462 = vmatpush.msra.mxu0 0.0
    %2463 = vmatpush.msra.mxu0 0.0
    %2464 = vmatpush.msra.mxu0 0.0
    %2465 = vmatpush.msra.mxu0 %v27
    %2466 = vmatpush.msra.mxu0 %v26
    %2467 = vmatpush.msra.mxu0 %v25
    %2468 = vmatpush.msra.mxu0 %v24
    %2469 = vmatmul.f32.gmra.mxu0 %v2241
    %v2470 = vpop.f32.mrf.mxu0
    %v2471 = vadd.f32 0.0, %v2470
    %2472 = vdwg.mxu0
    %s2473 = scalar_lea.vmem %s0, 48
    %v2474 = vld [vmem:[%s2473] sm:$0x3]
    %v2475 = vadd.f32 %v2474, %v2471
    %2476 = vmatpush.msra.mxu0 0.0
    %2477 = vmatpush.msra.mxu0 0.0
    %2478 = vmatpush.msra.mxu0 0.0
    %2479 = vmatpush.msra.mxu0 0.0
    %2480 = vmatpush.msra.mxu0 0.0
    %2481 = vmatpush.msra.mxu0 0.0
    %2482 = vmatpush.msra.mxu0 0.0
    %2483 = vmatpush.msra.mxu0 0.0
    %2484 = vmatpush.msra.mxu0 0.0
    %2485 = vmatpush.msra.mxu0 0.0
    %2486 = vmatpush.msra.mxu0 0.0
    %2487 = vmatpush.msra.mxu0 0.0
    %2488 = vmatpush.msra.mxu0 %v58
    %2489 = vmatpush.msra.mxu0 %v57
    %2490 = vmatpush.msra.mxu0 %v56
    %2491 = vmatpush.msra.mxu0 %v55
    %2492 = vmatmul.f32.gmra.mxu0 %v2241
    %v2493 = vpop.f32.mrf.mxu0
    %v2494 = vadd.f32 0.0, %v2493
    %2495 = vdwg.mxu0
    %s2496 = scalar_lea.vmem %s0, 50
    %v2497 = vld [vmem:[%s2496] sm:$0x3]
    %v2498 = vadd.f32 %v2497, %v2494
    %2499 = vmatpush.msra.mxu0 0.0
    %2500 = vmatpush.msra.mxu0 0.0
    %2501 = vmatpush.msra.mxu0 0.0
    %2502 = vmatpush.msra.mxu0 0.0
    %2503 = vmatpush.msra.mxu0 0.0
    %2504 = vmatpush.msra.mxu0 0.0
    %2505 = vmatpush.msra.mxu0 0.0
    %2506 = vmatpush.msra.mxu0 0.0
    %2507 = vmatpush.msra.mxu0 0.0
    %2508 = vmatpush.msra.mxu0 0.0
    %2509 = vmatpush.msra.mxu0 0.0
    %2510 = vmatpush.msra.mxu0 0.0
    %2511 = vmatpush.msra.mxu0 %v86
    %2512 = vmatpush.msra.mxu0 %v85
    %2513 = vmatpush.msra.mxu0 %v84
    %2514 = vmatpush.msra.mxu0 %v83
    %2515 = vmatmul.f32.gmra.mxu0 %v2241
    %v2516 = vpop.f32.mrf.mxu0
    %v2517 = vadd.f32 0.0, %v2516
    %2518 = vdwg.mxu0
    %s2519 = scalar_lea.vmem %s0, 52
    %v2520 = vld [vmem:[%s2519] sm:$0x3]
    %v2521 = vadd.f32 %v2520, %v2517
    %2522 = vmatpush.msra.mxu0 0.0
    %2523 = vmatpush.msra.mxu0 0.0
    %2524 = vmatpush.msra.mxu0 0.0
    %2525 = vmatpush.msra.mxu0 0.0
    %2526 = vmatpush.msra.mxu0 0.0
    %2527 = vmatpush.msra.mxu0 0.0
    %2528 = vmatpush.msra.mxu0 0.0
    %2529 = vmatpush.msra.mxu0 0.0
    %2530 = vmatpush.msra.mxu0 0.0
    %2531 = vmatpush.msra.mxu0 0.0
    %2532 = vmatpush.msra.mxu0 0.0
    %2533 = vmatpush.msra.mxu0 0.0
    %2534 = vmatpush.msra.mxu0 %v114
    %2535 = vmatpush.msra.mxu0 %v113
    %2536 = vmatpush.msra.mxu0 %v112
    %2537 = vmatpush.msra.mxu0 %v111
    %2538 = vmatmul.f32.gmra.mxu0 %v2241
    %v2539 = vpop.f32.mrf.mxu0
    %v2540 = vadd.f32 0.0, %v2539
    %2541 = vdwg.mxu0
    %s2542 = scalar_lea.vmem %s0, 54
    %v2543 = vld [vmem:[%s2542] sm:$0x3]
    %v2544 = vadd.f32 %v2543, %v2540
    %v2545 = vxor.u32 %v2475, 2147483648
    %v2546 = vmul.f32 %v2545, 1.442695
    %v2547 = vpow.pop %v2546
    %v2548 = vadd.f32 %v2547, 1.0
    %v2549 = vrcp.pop %v2548
    %v2550 = vmul.f32 %v2548, %v2549
    %v2551 = vsub.f32 1.0, %v2550
    %v2552 = vmul.f32 %v2549, %v2551
    %v2553 = vadd.f32 %v2549, %v2552
    %vm2554 = vweird.f32 %v2548
    %vm2555 = vweird.f32 %v2549
    %vm2556 = vmor %vm2554, %vm2555
    %v2557 = vsel %vm2556, %v2549, %v2553
    %v2558 = vand.u32 2147483647, %v2548
    %vm2559 = vcmp.eq.f32.partialorder %v2558, 8.507059e+37
    %v2560 = vand.u32 %v2548, 2147483648
    %v2561 = vor.u32 1.1754944e-38, %v2560
    %v2562 = vsel %vm2559, %v2561, %v2557
    %v2563 = vmul.f32 1.0, %v2562
    %v2564 = vxor.u32 %v2498, 2147483648
    %v2565 = vmul.f32 %v2564, 1.442695
    %v2566 = vpow.pop %v2565
    %v2567 = vadd.f32 %v2566, 1.0
    %v2568 = vrcp.pop %v2567
    %v2569 = vmul.f32 %v2567, %v2568
    %v2570 = vsub.f32 1.0, %v2569
    %v2571 = vmul.f32 %v2568, %v2570
    %v2572 = vadd.f32 %v2568, %v2571
    %vm2573 = vweird.f32 %v2567
    %vm2574 = vweird.f32 %v2568
    %vm2575 = vmor %vm2573, %vm2574
    %v2576 = vsel %vm2575, %v2568, %v2572
    %v2577 = vand.u32 2147483647, %v2567
    %vm2578 = vcmp.eq.f32.partialorder %v2577, 8.507059e+37
    %v2579 = vand.u32 %v2567, 2147483648
    %v2580 = vor.u32 1.1754944e-38, %v2579
    %v2581 = vsel %vm2578, %v2580, %v2576
    %v2582 = vmul.f32 1.0, %v2581
    %v2583 = vtanh.pop %v2521
    %v2584 = vxor.u32 %v2544, 2147483648
    %v2585 = vmul.f32 %v2584, 1.442695
    %v2586 = vpow.pop %v2585
    %v2587 = vadd.f32 %v2586, 1.0
    %v2588 = vrcp.pop %v2587
    %v2589 = vmul.f32 %v2587, %v2588
    %v2590 = vsub.f32 1.0, %v2589
    %v2591 = vmul.f32 %v2588, %v2590
    %v2592 = vadd.f32 %v2588, %v2591
    %vm2593 = vweird.f32 %v2587
    %vm2594 = vweird.f32 %v2588
    %vm2595 = vmor %vm2593, %vm2594
    %v2596 = vsel %vm2595, %v2588, %v2592
    %v2597 = vand.u32 2147483647, %v2587
    %vm2598 = vcmp.eq.f32.partialorder %v2597, 8.507059e+37
    %v2599 = vand.u32 %v2587, 2147483648
    %v2600 = vor.u32 1.1754944e-38, %v2599
    %v2601 = vsel %vm2598, %v2600, %v2596
    %v2602 = vmul.f32 1.0, %v2601
    %v2603 = vmul.f32 %v2582, %v2213
    %v2604 = vmul.f32 %v2563, %v2583
    %v2605 = vadd.f32 %v2603, %v2604
    %v2606 = vtanh.pop %v2605
    %v2607 = vmul.f32 %v2602, %v2606
    %v2609 = vsel %vm28, %v2452, 0
    %2611 = vmatpush.msra.mxu0 0.0
    %2612 = vmatpush.msra.mxu0 0.0
    %2613 = vmatpush.msra.mxu0 0.0
    %2614 = vmatpush.msra.mxu0 0.0
    %2615 = vmatpush.msra.mxu0 0.0
    %2616 = vmatpush.msra.mxu0 0.0
    %2617 = vmatpush.msra.mxu0 0.0
    %2618 = vmatpush.msra.mxu0 0.0
    %2619 = vmatpush.msra.mxu0 0.0
    %2620 = vmatpush.msra.mxu0 0.0
    %2621 = vmatpush.msra.mxu0 0.0
    %2622 = vmatpush.msra.mxu0 0.0
    %2623 = vmatpush.msra.mxu0 %v205
    %2624 = vmatpush.msra.mxu0 %v204
    %2625 = vmatpush.msra.mxu0 %v203
    %2626 = vmatpush.msra.mxu0 %v202
    %2627 = vmatmul.f32.gmra.mxu0 %v2609
    %v2628 = vpop.f32.mrf.mxu0
    %v2629 = vadd.f32 0.0, %v2628
    %2630 = vdwg.mxu0
    %v2631 = vadd.f32 %v228, %v2629
    %v2633 = vsel %vm28, %v2607, 0
    %2635 = vmatpush.msra.mxu0 0.0
    %2636 = vmatpush.msra.mxu0 0.0
    %2637 = vmatpush.msra.mxu0 0.0
    %2638 = vmatpush.msra.mxu0 0.0
    %2639 = vmatpush.msra.mxu0 0.0
    %2640 = vmatpush.msra.mxu0 0.0
    %2641 = vmatpush.msra.mxu0 0.0
    %2642 = vmatpush.msra.mxu0 0.0
    %2643 = vmatpush.msra.mxu0 0.0
    %2644 = vmatpush.msra.mxu0 0.0
    %2645 = vmatpush.msra.mxu0 0.0
    %2646 = vmatpush.msra.mxu0 0.0
    %2647 = vmatpush.msra.mxu0 %v234
    %2648 = vmatpush.msra.mxu0 %v233
    %2649 = vmatpush.msra.mxu0 %v232
    %2650 = vmatpush.msra.mxu0 %v231
    %2651 = vmatmul.f32.gmra.mxu0 %v2633
    %v2652 = vpop.f32.mrf.mxu0
    %v2653 = vadd.f32 0.0, %v2652
    %2654 = vdwg.mxu0
    %v2655 = vadd.f32 %v2631, %v2653
    %2656 = vmatpush.msra.mxu0 0.0
    %2657 = vmatpush.msra.mxu0 0.0
    %2658 = vmatpush.msra.mxu0 0.0
    %2659 = vmatpush.msra.mxu0 0.0
    %2660 = vmatpush.msra.mxu0 0.0
    %2661 = vmatpush.msra.mxu0 0.0
    %2662 = vmatpush.msra.mxu0 0.0
    %2663 = vmatpush.msra.mxu0 0.0
    %2664 = vmatpush.msra.mxu0 0.0
    %2665 = vmatpush.msra.mxu0 0.0
    %2666 = vmatpush.msra.mxu0 0.0
    %2667 = vmatpush.msra.mxu0 0.0
    %2668 = vmatpush.msra.mxu0 %v263
    %2669 = vmatpush.msra.mxu0 %v262
    %2670 = vmatpush.msra.mxu0 %v261
    %2671 = vmatpush.msra.mxu0 %v260
    %2672 = vmatmul.f32.gmra.mxu0 %v2609
    %v2673 = vpop.f32.mrf.mxu0
    %v2674 = vadd.f32 0.0, %v2673
    %2675 = vdwg.mxu0
    %v2676 = vadd.f32 %v287, %v2674
    %2677 = vmatpush.msra.mxu0 0.0
    %2678 = vmatpush.msra.mxu0 0.0
    %2679 = vmatpush.msra.mxu0 0.0
    %2680 = vmatpush.msra.mxu0 0.0
    %2681 = vmatpush.msra.mxu0 0.0
    %2682 = vmatpush.msra.mxu0 0.0
    %2683 = vmatpush.msra.mxu0 0.0
    %2684 = vmatpush.msra.mxu0 0.0
    %2685 = vmatpush.msra.mxu0 0.0
    %2686 = vmatpush.msra.mxu0 0.0
    %2687 = vmatpush.msra.mxu0 0.0
    %2688 = vmatpush.msra.mxu0 0.0
    %2689 = vmatpush.msra.mxu0 %v294
    %2690 = vmatpush.msra.mxu0 %v293
    %2691 = vmatpush.msra.mxu0 %v292
    %2692 = vmatpush.msra.mxu0 %v291
    %2693 = vmatmul.f32.gmra.mxu0 %v2633
    %v2694 = vpop.f32.mrf.mxu0
    %v2695 = vadd.f32 0.0, %v2694
    %2696 = vdwg.mxu0
    %v2697 = vadd.f32 %v2676, %v2695
    %2698 = vmatpush.msra.mxu0 0.0
    %2699 = vmatpush.msra.mxu0 0.0
    %2700 = vmatpush.msra.mxu0 0.0
    %2701 = vmatpush.msra.mxu0 0.0
    %2702 = vmatpush.msra.mxu0 0.0
    %2703 = vmatpush.msra.mxu0 0.0
    %2704 = vmatpush.msra.mxu0 0.0
    %2705 = vmatpush.msra.mxu0 0.0
    %2706 = vmatpush.msra.mxu0 0.0
    %2707 = vmatpush.msra.mxu0 0.0
    %2708 = vmatpush.msra.mxu0 0.0
    %2709 = vmatpush.msra.mxu0 0.0
    %2710 = vmatpush.msra.mxu0 %v320
    %2711 = vmatpush.msra.mxu0 %v319
    %2712 = vmatpush.msra.mxu0 %v318
    %2713 = vmatpush.msra.mxu0 %v317
    %2714 = vmatmul.f32.gmra.mxu0 %v2609
    %v2715 = vpop.f32.mrf.mxu0
    %v2716 = vadd.f32 0.0, %v2715
    %2717 = vdwg.mxu0
    %v2718 = vadd.f32 %v344, %v2716
    %2719 = vmatpush.msra.mxu0 0.0
    %2720 = vmatpush.msra.mxu0 0.0
    %2721 = vmatpush.msra.mxu0 0.0
    %2722 = vmatpush.msra.mxu0 0.0
    %2723 = vmatpush.msra.mxu0 0.0
    %2724 = vmatpush.msra.mxu0 0.0
    %2725 = vmatpush.msra.mxu0 0.0
    %2726 = vmatpush.msra.mxu0 0.0
    %2727 = vmatpush.msra.mxu0 0.0
    %2728 = vmatpush.msra.mxu0 0.0
    %2729 = vmatpush.msra.mxu0 0.0
    %2730 = vmatpush.msra.mxu0 0.0
    %2731 = vmatpush.msra.mxu0 %v351
    %2732 = vmatpush.msra.mxu0 %v350
    %2733 = vmatpush.msra.mxu0 %v349
    %2734 = vmatpush.msra.mxu0 %v348
    %2735 = vmatmul.f32.gmra.mxu0 %v2633
    %v2736 = vpop.f32.mrf.mxu0
    %v2737 = vadd.f32 0.0, %v2736
    %2738 = vdwg.mxu0
    %v2739 = vadd.f32 %v2718, %v2737
    %2740 = vmatpush.msra.mxu0 0.0
    %2741 = vmatpush.msra.mxu0 0.0
    %2742 = vmatpush.msra.mxu0 0.0
    %2743 = vmatpush.msra.mxu0 0.0
    %2744 = vmatpush.msra.mxu0 0.0
    %2745 = vmatpush.msra.mxu0 0.0
    %2746 = vmatpush.msra.mxu0 0.0
    %2747 = vmatpush.msra.mxu0 0.0
    %2748 = vmatpush.msra.mxu0 0.0
    %2749 = vmatpush.msra.mxu0 0.0
    %2750 = vmatpush.msra.mxu0 0.0
    %2751 = vmatpush.msra.mxu0 0.0
    %2752 = vmatpush.msra.mxu0 %v377
    %2753 = vmatpush.msra.mxu0 %v376
    %2754 = vmatpush.msra.mxu0 %v375
    %2755 = vmatpush.msra.mxu0 %v374
    %2756 = vmatmul.f32.gmra.mxu0 %v2609
    %v2757 = vpop.f32.mrf.mxu0
    %v2758 = vadd.f32 0.0, %v2757
    %2759 = vdwg.mxu0
    %v2760 = vadd.f32 %v401, %v2758
    %2761 = vmatpush.msra.mxu0 0.0
    %2762 = vmatpush.msra.mxu0 0.0
    %2763 = vmatpush.msra.mxu0 0.0
    %2764 = vmatpush.msra.mxu0 0.0
    %2765 = vmatpush.msra.mxu0 0.0
    %2766 = vmatpush.msra.mxu0 0.0
    %2767 = vmatpush.msra.mxu0 0.0
    %2768 = vmatpush.msra.mxu0 0.0
    %2769 = vmatpush.msra.mxu0 0.0
    %2770 = vmatpush.msra.mxu0 0.0
    %2771 = vmatpush.msra.mxu0 0.0
    %2772 = vmatpush.msra.mxu0 0.0
    %2773 = vmatpush.msra.mxu0 %v408
    %2774 = vmatpush.msra.mxu0 %v407
    %2775 = vmatpush.msra.mxu0 %v406
    %2776 = vmatpush.msra.mxu0 %v405
    %2777 = vmatmul.f32.gmra.mxu0 %v2633
    %v2778 = vpop.f32.mrf.mxu0
    %v2779 = vadd.f32 0.0, %v2778
    %2780 = vdwg.mxu0
    %v2781 = vadd.f32 %v2760, %v2779
    %v2782 = vxor.u32 %v2655, 2147483648
    %v2783 = vmul.f32 %v2782, 1.442695
    %v2784 = vpow.pop %v2783
    %v2785 = vadd.f32 %v2784, 1.0
    %v2786 = vrcp.pop %v2785
    %v2787 = vmul.f32 %v2785, %v2786
    %v2788 = vsub.f32 1.0, %v2787
    %v2789 = vmul.f32 %v2786, %v2788
    %v2790 = vadd.f32 %v2786, %v2789
    %vm2791 = vweird.f32 %v2785
    %vm2792 = vweird.f32 %v2786
    %vm2793 = vmor %vm2791, %vm2792
    %v2794 = vsel %vm2793, %v2786, %v2790
    %v2795 = vand.u32 2147483647, %v2785
    %vm2796 = vcmp.eq.f32.partialorder %v2795, 8.507059e+37
    %v2797 = vand.u32 %v2785, 2147483648
    %v2798 = vor.u32 1.1754944e-38, %v2797
    %v2799 = vsel %vm2796, %v2798, %v2794
    %v2800 = vmul.f32 1.0, %v2799
    %v2801 = vxor.u32 %v2697, 2147483648
    %v2802 = vmul.f32 %v2801, 1.442695
    %v2803 = vpow.pop %v2802
    %v2804 = vadd.f32 %v2803, 1.0
    %v2805 = vrcp.pop %v2804
    %v2806 = vmul.f32 %v2804, %v2805
    %v2807 = vsub.f32 1.0, %v2806
    %v2808 = vmul.f32 %v2805, %v2807
    %v2809 = vadd.f32 %v2805, %v2808
    %vm2810 = vweird.f32 %v2804
    %vm2811 = vweird.f32 %v2805
    %vm2812 = vmor %vm2810, %vm2811
    %v2813 = vsel %vm2812, %v2805, %v2809
    %v2814 = vand.u32 2147483647, %v2804
    %vm2815 = vcmp.eq.f32.partialorder %v2814, 8.507059e+37
    %v2816 = vand.u32 %v2804, 2147483648
    %v2817 = vor.u32 1.1754944e-38, %v2816
    %v2818 = vsel %vm2815, %v2817, %v2813
    %v2819 = vmul.f32 1.0, %v2818
    %v2820 = vtanh.pop %v2739
    %v2821 = vxor.u32 %v2781, 2147483648
    %v2822 = vmul.f32 %v2821, 1.442695
    %v2823 = vpow.pop %v2822
    %v2824 = vadd.f32 %v2823, 1.0
    %v2825 = vrcp.pop %v2824
    %v2826 = vmul.f32 %v2824, %v2825
    %v2827 = vsub.f32 1.0, %v2826
    %v2828 = vmul.f32 %v2825, %v2827
    %v2829 = vadd.f32 %v2825, %v2828
    %vm2830 = vweird.f32 %v2824
    %vm2831 = vweird.f32 %v2825
    %vm2832 = vmor %vm2830, %vm2831
    %v2833 = vsel %vm2832, %v2825, %v2829
    %v2834 = vand.u32 2147483647, %v2824
    %vm2835 = vcmp.eq.f32.partialorder %v2834, 8.507059e+37
    %v2836 = vand.u32 %v2824, 2147483648
    %v2837 = vor.u32 1.1754944e-38, %v2836
    %v2838 = vsel %vm2835, %v2837, %v2833
    %v2839 = vmul.f32 1.0, %v2838
    %v2840 = vmul.f32 %v2819, %v2450
    %v2841 = vmul.f32 %v2800, %v2820
    %v2842 = vadd.f32 %v2840, %v2841
    %v2843 = vtanh.pop %v2842
    %v2844 = vmul.f32 %v2839, %v2843
    %2845 = vmatpush.msra.mxu0 0.0
    %2846 = vmatpush.msra.mxu0 0.0
    %2847 = vmatpush.msra.mxu0 0.0
    %2848 = vmatpush.msra.mxu0 0.0
    %2849 = vmatpush.msra.mxu0 0.0
    %2850 = vmatpush.msra.mxu0 0.0
    %2851 = vmatpush.msra.mxu0 0.0
    %2852 = vmatpush.msra.mxu0 0.0
    %2853 = vmatpush.msra.mxu0 0.0
    %2854 = vmatpush.msra.mxu0 0.0
    %2855 = vmatpush.msra.mxu0 0.0
    %2856 = vmatpush.msra.mxu0 0.0
    %2857 = vmatpush.msra.mxu0 %v27
    %2858 = vmatpush.msra.mxu0 %v26
    %2859 = vmatpush.msra.mxu0 %v25
    %2860 = vmatpush.msra.mxu0 %v24
    %2861 = vmatmul.f32.gmra.mxu0 %v2633
    %v2862 = vpop.f32.mrf.mxu0
    %v2863 = vadd.f32 0.0, %v2862
    %2864 = vdwg.mxu0
    %s2865 = scalar_lea.vmem %s0, 56
    %v2866 = vld [vmem:[%s2865] sm:$0x3]
    %v2867 = vadd.f32 %v2866, %v2863
    %2868 = vmatpush.msra.mxu0 0.0
    %2869 = vmatpush.msra.mxu0 0.0
    %2870 = vmatpush.msra.mxu0 0.0
    %2871 = vmatpush.msra.mxu0 0.0
    %2872 = vmatpush.msra.mxu0 0.0
    %2873 = vmatpush.msra.mxu0 0.0
    %2874 = vmatpush.msra.mxu0 0.0
    %2875 = vmatpush.msra.mxu0 0.0
    %2876 = vmatpush.msra.mxu0 0.0
    %2877 = vmatpush.msra.mxu0 0.0
    %2878 = vmatpush.msra.mxu0 0.0
    %2879 = vmatpush.msra.mxu0 0.0
    %2880 = vmatpush.msra.mxu0 %v58
    %2881 = vmatpush.msra.mxu0 %v57
    %2882 = vmatpush.msra.mxu0 %v56
    %2883 = vmatpush.msra.mxu0 %v55
    %2884 = vmatmul.f32.gmra.mxu0 %v2633
    %v2885 = vpop.f32.mrf.mxu0
    %v2886 = vadd.f32 0.0, %v2885
    %2887 = vdwg.mxu0
    %s2888 = scalar_lea.vmem %s0, 58
    %v2889 = vld [vmem:[%s2888] sm:$0x3]
    %v2890 = vadd.f32 %v2889, %v2886
    %2891 = vmatpush.msra.mxu0 0.0
    %2892 = vmatpush.msra.mxu0 0.0
    %2893 = vmatpush.msra.mxu0 0.0
    %2894 = vmatpush.msra.mxu0 0.0
    %2895 = vmatpush.msra.mxu0 0.0
    %2896 = vmatpush.msra.mxu0 0.0
    %2897 = vmatpush.msra.mxu0 0.0
    %2898 = vmatpush.msra.mxu0 0.0
    %2899 = vmatpush.msra.mxu0 0.0
    %2900 = vmatpush.msra.mxu0 0.0
    %2901 = vmatpush.msra.mxu0 0.0
    %2902 = vmatpush.msra.mxu0 0.0
    %2903 = vmatpush.msra.mxu0 %v86
    %2904 = vmatpush.msra.mxu0 %v85
    %2905 = vmatpush.msra.mxu0 %v84
    %2906 = vmatpush.msra.mxu0 %v83
    %2907 = vmatmul.f32.gmra.mxu0 %v2633
    %v2908 = vpop.f32.mrf.mxu0
    %v2909 = vadd.f32 0.0, %v2908
    %2910 = vdwg.mxu0
    %s2911 = scalar_lea.vmem %s0, 60
    %v2912 = vld [vmem:[%s2911] sm:$0x3]
    %v2913 = vadd.f32 %v2912, %v2909
    %2914 = vmatpush.msra.mxu0 0.0
    %2915 = vmatpush.msra.mxu0 0.0
    %2916 = vmatpush.msra.mxu0 0.0
    %2917 = vmatpush.msra.mxu0 0.0
    %2918 = vmatpush.msra.mxu0 0.0
    %2919 = vmatpush.msra.mxu0 0.0
    %2920 = vmatpush.msra.mxu0 0.0
    %2921 = vmatpush.msra.mxu0 0.0
    %2922 = vmatpush.msra.mxu0 0.0
    %2923 = vmatpush.msra.mxu0 0.0
    %2924 = vmatpush.msra.mxu0 0.0
    %2925 = vmatpush.msra.mxu0 0.0
    %2926 = vmatpush.msra.mxu0 %v114
    %2927 = vmatpush.msra.mxu0 %v113
    %2928 = vmatpush.msra.mxu0 %v112
    %2929 = vmatpush.msra.mxu0 %v111
    %2930 = vmatmul.f32.gmra.mxu0 %v2633
    %v2931 = vpop.f32.mrf.mxu0
    %v2932 = vadd.f32 0.0, %v2931
    %2933 = vdwg.mxu0
    %s2934 = scalar_lea.vmem %s0, 62
    %v2935 = vld [vmem:[%s2934] sm:$0x3]
    %v2936 = vadd.f32 %v2935, %v2932
    %v2937 = vxor.u32 %v2867, 2147483648
    %v2938 = vmul.f32 %v2937, 1.442695
    %v2939 = vpow.pop %v2938
    %v2940 = vadd.f32 %v2939, 1.0
    %v2941 = vrcp.pop %v2940
    %v2942 = vmul.f32 %v2940, %v2941
    %v2943 = vsub.f32 1.0, %v2942
    %v2944 = vmul.f32 %v2941, %v2943
    %v2945 = vadd.f32 %v2941, %v2944
    %vm2946 = vweird.f32 %v2940
    %vm2947 = vweird.f32 %v2941
    %vm2948 = vmor %vm2946, %vm2947
    %v2949 = vsel %vm2948, %v2941, %v2945
    %v2950 = vand.u32 2147483647, %v2940
    %vm2951 = vcmp.eq.f32.partialorder %v2950, 8.507059e+37
    %v2952 = vand.u32 %v2940, 2147483648
    %v2953 = vor.u32 1.1754944e-38, %v2952
    %v2954 = vsel %vm2951, %v2953, %v2949
    %v2955 = vmul.f32 1.0, %v2954
    %v2956 = vxor.u32 %v2890, 2147483648
    %v2957 = vmul.f32 %v2956, 1.442695
    %v2958 = vpow.pop %v2957
    %v2959 = vadd.f32 %v2958, 1.0
    %v2960 = vrcp.pop %v2959
    %v2961 = vmul.f32 %v2959, %v2960
    %v2962 = vsub.f32 1.0, %v2961
    %v2963 = vmul.f32 %v2960, %v2962
    %v2964 = vadd.f32 %v2960, %v2963
    %vm2965 = vweird.f32 %v2959
    %vm2966 = vweird.f32 %v2960
    %vm2967 = vmor %vm2965, %vm2966
    %v2968 = vsel %vm2967, %v2960, %v2964
    %v2969 = vand.u32 2147483647, %v2959
    %vm2970 = vcmp.eq.f32.partialorder %v2969, 8.507059e+37
    %v2971 = vand.u32 %v2959, 2147483648
    %v2972 = vor.u32 1.1754944e-38, %v2971
    %v2973 = vsel %vm2970, %v2972, %v2968
    %v2974 = vmul.f32 1.0, %v2973
    %v2975 = vtanh.pop %v2913
    %v2976 = vxor.u32 %v2936, 2147483648
    %v2977 = vmul.f32 %v2976, 1.442695
    %v2978 = vpow.pop %v2977
    %v2979 = vadd.f32 %v2978, 1.0
    %v2980 = vrcp.pop %v2979
    %v2981 = vmul.f32 %v2979, %v2980
    %v2982 = vsub.f32 1.0, %v2981
    %v2983 = vmul.f32 %v2980, %v2982
    %v2984 = vadd.f32 %v2980, %v2983
    %vm2985 = vweird.f32 %v2979
    %vm2986 = vweird.f32 %v2980
    %vm2987 = vmor %vm2985, %vm2986
    %v2988 = vsel %vm2987, %v2980, %v2984
    %v2989 = vand.u32 2147483647, %v2979
    %vm2990 = vcmp.eq.f32.partialorder %v2989, 8.507059e+37
    %v2991 = vand.u32 %v2979, 2147483648
    %v2992 = vor.u32 1.1754944e-38, %v2991
    %v2993 = vsel %vm2990, %v2992, %v2988
    %v2994 = vmul.f32 1.0, %v2993
    %v2995 = vmul.f32 %v2974, %v2605
    %v2996 = vmul.f32 %v2955, %v2975
    %v2997 = vadd.f32 %v2995, %v2996
    %v2998 = vtanh.pop %v2997
    %v2999 = vmul.f32 %v2994, %v2998
    %v3001 = vsel %vm28, %v2844, 0
    %3003 = vmatpush.msra.mxu0 0.0
    %3004 = vmatpush.msra.mxu0 0.0
    %3005 = vmatpush.msra.mxu0 0.0
    %3006 = vmatpush.msra.mxu0 0.0
    %3007 = vmatpush.msra.mxu0 0.0
    %3008 = vmatpush.msra.mxu0 0.0
    %3009 = vmatpush.msra.mxu0 0.0
    %3010 = vmatpush.msra.mxu0 0.0
    %3011 = vmatpush.msra.mxu0 0.0
    %3012 = vmatpush.msra.mxu0 0.0
    %3013 = vmatpush.msra.mxu0 0.0
    %3014 = vmatpush.msra.mxu0 0.0
    %3015 = vmatpush.msra.mxu0 %v205
    %3016 = vmatpush.msra.mxu0 %v204
    %3017 = vmatpush.msra.mxu0 %v203
    %3018 = vmatpush.msra.mxu0 %v202
    %3019 = vmatmul.f32.gmra.mxu0 %v3001
    %v3020 = vpop.f32.mrf.mxu0
    %v3021 = vadd.f32 0.0, %v3020
    %3022 = vdwg.mxu0
    %v3023 = vadd.f32 %v228, %v3021
    %v3025 = vsel %vm28, %v2999, 0
    %3027 = vmatpush.msra.mxu0 0.0
    %3028 = vmatpush.msra.mxu0 0.0
    %3029 = vmatpush.msra.mxu0 0.0
    %3030 = vmatpush.msra.mxu0 0.0
    %3031 = vmatpush.msra.mxu0 0.0
    %3032 = vmatpush.msra.mxu0 0.0
    %3033 = vmatpush.msra.mxu0 0.0
    %3034 = vmatpush.msra.mxu0 0.0
    %3035 = vmatpush.msra.mxu0 0.0
    %3036 = vmatpush.msra.mxu0 0.0
    %3037 = vmatpush.msra.mxu0 0.0
    %3038 = vmatpush.msra.mxu0 0.0
    %3039 = vmatpush.msra.mxu0 %v234
    %3040 = vmatpush.msra.mxu0 %v233
    %3041 = vmatpush.msra.mxu0 %v232
    %3042 = vmatpush.msra.mxu0 %v231
    %3043 = vmatmul.f32.gmra.mxu0 %v3025
    %v3044 = vpop.f32.mrf.mxu0
    %v3045 = vadd.f32 0.0, %v3044
    %3046 = vdwg.mxu0
    %v3047 = vadd.f32 %v3023, %v3045
    %3048 = vmatpush.msra.mxu0 0.0
    %3049 = vmatpush.msra.mxu0 0.0
    %3050 = vmatpush.msra.mxu0 0.0
    %3051 = vmatpush.msra.mxu0 0.0
    %3052 = vmatpush.msra.mxu0 0.0
    %3053 = vmatpush.msra.mxu0 0.0
    %3054 = vmatpush.msra.mxu0 0.0
    %3055 = vmatpush.msra.mxu0 0.0
    %3056 = vmatpush.msra.mxu0 0.0
    %3057 = vmatpush.msra.mxu0 0.0
    %3058 = vmatpush.msra.mxu0 0.0
    %3059 = vmatpush.msra.mxu0 0.0
    %3060 = vmatpush.msra.mxu0 %v263
    %3061 = vmatpush.msra.mxu0 %v262
    %3062 = vmatpush.msra.mxu0 %v261
    %3063 = vmatpush.msra.mxu0 %v260
    %3064 = vmatmul.f32.gmra.mxu0 %v3001
    %v3065 = vpop.f32.mrf.mxu0
    %v3066 = vadd.f32 0.0, %v3065
    %3067 = vdwg.mxu0
    %v3068 = vadd.f32 %v287, %v3066
    %3069 = vmatpush.msra.mxu0 0.0
    %3070 = vmatpush.msra.mxu0 0.0
    %3071 = vmatpush.msra.mxu0 0.0
    %3072 = vmatpush.msra.mxu0 0.0
    %3073 = vmatpush.msra.mxu0 0.0
    %3074 = vmatpush.msra.mxu0 0.0
    %3075 = vmatpush.msra.mxu0 0.0
    %3076 = vmatpush.msra.mxu0 0.0
    %3077 = vmatpush.msra.mxu0 0.0
    %3078 = vmatpush.msra.mxu0 0.0
    %3079 = vmatpush.msra.mxu0 0.0
    %3080 = vmatpush.msra.mxu0 0.0
    %3081 = vmatpush.msra.mxu0 %v294
    %3082 = vmatpush.msra.mxu0 %v293
    %3083 = vmatpush.msra.mxu0 %v292
    %3084 = vmatpush.msra.mxu0 %v291
    %3085 = vmatmul.f32.gmra.mxu0 %v3025
    %v3086 = vpop.f32.mrf.mxu0
    %v3087 = vadd.f32 0.0, %v3086
    %3088 = vdwg.mxu0
    %v3089 = vadd.f32 %v3068, %v3087
    %3090 = vmatpush.msra.mxu0 0.0
    %3091 = vmatpush.msra.mxu0 0.0
    %3092 = vmatpush.msra.mxu0 0.0
    %3093 = vmatpush.msra.mxu0 0.0
    %3094 = vmatpush.msra.mxu0 0.0
    %3095 = vmatpush.msra.mxu0 0.0
    %3096 = vmatpush.msra.mxu0 0.0
    %3097 = vmatpush.msra.mxu0 0.0
    %3098 = vmatpush.msra.mxu0 0.0
    %3099 = vmatpush.msra.mxu0 0.0
    %3100 = vmatpush.msra.mxu0 0.0
    %3101 = vmatpush.msra.mxu0 0.0
    %3102 = vmatpush.msra.mxu0 %v320
    %3103 = vmatpush.msra.mxu0 %v319
    %3104 = vmatpush.msra.mxu0 %v318
    %3105 = vmatpush.msra.mxu0 %v317
    %3106 = vmatmul.f32.gmra.mxu0 %v3001
    %v3107 = vpop.f32.mrf.mxu0
    %v3108 = vadd.f32 0.0, %v3107
    %3109 = vdwg.mxu0
    %v3110 = vadd.f32 %v344, %v3108
    %3111 = vmatpush.msra.mxu0 0.0
    %3112 = vmatpush.msra.mxu0 0.0
    %3113 = vmatpush.msra.mxu0 0.0
    %3114 = vmatpush.msra.mxu0 0.0
    %3115 = vmatpush.msra.mxu0 0.0
    %3116 = vmatpush.msra.mxu0 0.0
    %3117 = vmatpush.msra.mxu0 0.0
    %3118 = vmatpush.msra.mxu0 0.0
    %3119 = vmatpush.msra.mxu0 0.0
    %3120 = vmatpush.msra.mxu0 0.0
    %3121 = vmatpush.msra.mxu0 0.0
    %3122 = vmatpush.msra.mxu0 0.0
    %3123 = vmatpush.msra.mxu0 %v351
    %3124 = vmatpush.msra.mxu0 %v350
    %3125 = vmatpush.msra.mxu0 %v349
    %3126 = vmatpush.msra.mxu0 %v348
    %3127 = vmatmul.f32.gmra.mxu0 %v3025
    %v3128 = vpop.f32.mrf.mxu0
    %v3129 = vadd.f32 0.0, %v3128
    %3130 = vdwg.mxu0
    %v3131 = vadd.f32 %v3110, %v3129
    %3132 = vmatpush.msra.mxu0 0.0
    %3133 = vmatpush.msra.mxu0 0.0
    %3134 = vmatpush.msra.mxu0 0.0
    %3135 = vmatpush.msra.mxu0 0.0
    %3136 = vmatpush.msra.mxu0 0.0
    %3137 = vmatpush.msra.mxu0 0.0
    %3138 = vmatpush.msra.mxu0 0.0
    %3139 = vmatpush.msra.mxu0 0.0
    %3140 = vmatpush.msra.mxu0 0.0
    %3141 = vmatpush.msra.mxu0 0.0
    %3142 = vmatpush.msra.mxu0 0.0
    %3143 = vmatpush.msra.mxu0 0.0
    %3144 = vmatpush.msra.mxu0 %v377
    %3145 = vmatpush.msra.mxu0 %v376
    %3146 = vmatpush.msra.mxu0 %v375
    %3147 = vmatpush.msra.mxu0 %v374
    %3148 = vmatmul.f32.gmra.mxu0 %v3001
    %v3149 = vpop.f32.mrf.mxu0
    %v3150 = vadd.f32 0.0, %v3149
    %3151 = vdwg.mxu0
    %v3152 = vadd.f32 %v401, %v3150
    %3153 = vmatpush.msra.mxu0 0.0
    %3154 = vmatpush.msra.mxu0 0.0
    %3155 = vmatpush.msra.mxu0 0.0
    %3156 = vmatpush.msra.mxu0 0.0
    %3157 = vmatpush.msra.mxu0 0.0
    %3158 = vmatpush.msra.mxu0 0.0
    %3159 = vmatpush.msra.mxu0 0.0
    %3160 = vmatpush.msra.mxu0 0.0
    %3161 = vmatpush.msra.mxu0 0.0
    %3162 = vmatpush.msra.mxu0 0.0
    %3163 = vmatpush.msra.mxu0 0.0
    %3164 = vmatpush.msra.mxu0 0.0
    %3165 = vmatpush.msra.mxu0 %v408
    %3166 = vmatpush.msra.mxu0 %v407
    %3167 = vmatpush.msra.mxu0 %v406
    %3168 = vmatpush.msra.mxu0 %v405
    %3169 = vmatmul.f32.gmra.mxu0 %v3025
    %v3170 = vpop.f32.mrf.mxu0
    %v3171 = vadd.f32 0.0, %v3170
    %3172 = vdwg.mxu0
    %v3173 = vadd.f32 %v3152, %v3171
    %v3174 = vxor.u32 %v3047, 2147483648
    %v3175 = vmul.f32 %v3174, 1.442695
    %v3176 = vpow.pop %v3175
    %v3177 = vadd.f32 %v3176, 1.0
    %v3178 = vrcp.pop %v3177
    %v3179 = vmul.f32 %v3177, %v3178
    %v3180 = vsub.f32 1.0, %v3179
    %v3181 = vmul.f32 %v3178, %v3180
    %v3182 = vadd.f32 %v3178, %v3181
    %vm3183 = vweird.f32 %v3177
    %vm3184 = vweird.f32 %v3178
    %vm3185 = vmor %vm3183, %vm3184
    %v3186 = vsel %vm3185, %v3178, %v3182
    %v3187 = vand.u32 2147483647, %v3177
    %vm3188 = vcmp.eq.f32.partialorder %v3187, 8.507059e+37
    %v3189 = vand.u32 %v3177, 2147483648
    %v3190 = vor.u32 1.1754944e-38, %v3189
    %v3191 = vsel %vm3188, %v3190, %v3186
    %v3192 = vmul.f32 1.0, %v3191
    %v3193 = vxor.u32 %v3089, 2147483648
    %v3194 = vmul.f32 %v3193, 1.442695
    %v3195 = vpow.pop %v3194
    %v3196 = vadd.f32 %v3195, 1.0
    %v3197 = vrcp.pop %v3196
    %v3198 = vmul.f32 %v3196, %v3197
    %v3199 = vsub.f32 1.0, %v3198
    %v3200 = vmul.f32 %v3197, %v3199
    %v3201 = vadd.f32 %v3197, %v3200
    %vm3202 = vweird.f32 %v3196
    %vm3203 = vweird.f32 %v3197
    %vm3204 = vmor %vm3202, %vm3203
    %v3205 = vsel %vm3204, %v3197, %v3201
    %v3206 = vand.u32 2147483647, %v3196
    %vm3207 = vcmp.eq.f32.partialorder %v3206, 8.507059e+37
    %v3208 = vand.u32 %v3196, 2147483648
    %v3209 = vor.u32 1.1754944e-38, %v3208
    %v3210 = vsel %vm3207, %v3209, %v3205
    %v3211 = vmul.f32 1.0, %v3210
    %v3212 = vtanh.pop %v3131
    %v3213 = vxor.u32 %v3173, 2147483648
    %v3214 = vmul.f32 %v3213, 1.442695
    %v3215 = vpow.pop %v3214
    %v3216 = vadd.f32 %v3215, 1.0
    %v3217 = vrcp.pop %v3216
    %v3218 = vmul.f32 %v3216, %v3217
    %v3219 = vsub.f32 1.0, %v3218
    %v3220 = vmul.f32 %v3217, %v3219
    %v3221 = vadd.f32 %v3217, %v3220
    %vm3222 = vweird.f32 %v3216
    %vm3223 = vweird.f32 %v3217
    %vm3224 = vmor %vm3222, %vm3223
    %v3225 = vsel %vm3224, %v3217, %v3221
    %v3226 = vand.u32 2147483647, %v3216
    %vm3227 = vcmp.eq.f32.partialorder %v3226, 8.507059e+37
    %v3228 = vand.u32 %v3216, 2147483648
    %v3229 = vor.u32 1.1754944e-38, %v3228
    %v3230 = vsel %vm3227, %v3229, %v3225
    %v3231 = vmul.f32 1.0, %v3230
    %v3232 = vmul.f32 %v3211, %v2842
    %v3233 = vmul.f32 %v3192, %v3212
    %v3234 = vadd.f32 %v3232, %v3233
    %v3235 = vtanh.pop %v3234
    %v3236 = vmul.f32 %v3231, %v3235
    %v3237 = vld [vmem:[%s4] sm:$0xff]
    %v3238 = vld [vmem:[%s4 + $0x8] sm:$0xff]
    %v3239 = vld [vmem:[%s4 + $0x10] sm:$0xff]
    %v3240 = vld [vmem:[%s4 + $0x18] sm:$0xff]
    %v3241 = vld [vmem:[%s5] sm:$0x1]
    %v3243 = vperm.slane %v3241, 0
    %v3246 = vsel %vm28, %v3236, 0
    %3248 = vmatpush.msra.mxu0 0.0
    %3249 = vmatpush.msra.mxu0 0.0
    %3250 = vmatpush.msra.mxu0 0.0
    %3251 = vmatpush.msra.mxu0 0.0
    %3252 = vmatpush.msra.mxu0 0.0
    %3253 = vmatpush.msra.mxu0 0.0
    %3254 = vmatpush.msra.mxu0 0.0
    %3255 = vmatpush.msra.mxu0 0.0
    %3256 = vmatpush.msra.mxu0 0.0
    %3257 = vmatpush.msra.mxu0 0.0
    %3258 = vmatpush.msra.mxu0 0.0
    %3259 = vmatpush.msra.mxu0 0.0
    %3260 = vmatpush.msra.mxu0 %v3240
    %3261 = vmatpush.msra.mxu0 %v3239
    %3262 = vmatpush.msra.mxu0 %v3238
    %3263 = vmatpush.msra.mxu0 %v3237
    %3264 = vmatmul.f32.gmra.mxu0 %v3246
    %v3265 = vpop.f32.mrf.mxu0
    %v3266 = vadd.f32 %v3243, %v3265
    %3267 = vdwg.mxu0
    %vm3268 = vcmask 25600
    %3269 = vst.msk [vmem:[#allocation2] sm:$0x3] %vm3268, %v3266
    // Predicated region
    $region26: #{lstm_model_forward.1} parent=1 // pred_check
      _
    $region27: #{lstm_model_forward.1} parent=1 // pred_check_branch
      %3271 = sbr.rel (0) target = $region29
    $region28: #{lstm_model_forward.1} parent=1 // pred_region
      %3273 = vsyncadd [#allocation3], 0
      %s3275 = sshll.u32 [#allocation2], 4
      %s3276 = int_to_ptr.vmem [resolvable:$true] %s3275
      %s3277 = sshll.u32 %s6, 4
      %s3278 = int_to_ptr.hbm [resolvable:$true] %s3277
      %3280 = dma.vmem_to_hbm [thread:$0]  %s3276, 32, %s3278, [#allocation3]
    $region29: #{lstm_model_forward.1} parent=1 // pred_fallthru
      _
    // Predicated region
    $region30: #{lstm_model_forward.1} parent=1 // pred_check
      _
    $region31: #{lstm_model_forward.1} parent=1 // pred_check_branch
      %3282 = sbr.rel (0) target = $region33
    $region32: #{lstm_model_forward.1} parent=1 // pred_region
      %3284 = dma.done [#allocation3], 32
    $region33: #{lstm_model_forward.1} parent=1 // pred_fallthru
      _
    %3285 = vsyncpa [#allocation3], 1

</llo_original>
